<compile_context>
chip_gen: v7x
topology: tpu7x:2x2x1
jax: 0.10.0
libtpu: 0.0.40
codegen_flags: <defaults>
</compile_context>

<pallas_src>
import functools

import jax
import jax.numpy as jnp
from jax.experimental import pallas as pl
from jax.experimental.pallas import tpu as pltpu

# ----------------------------- tiny "BERT" config -----------------------------
VOCAB = 64
MAX_POS = 16
HIDDEN = 32          # encoder.hidden_size
NUM_HEADS = 4
HEAD_DIM = HIDDEN // NUM_HEADS
INTERMEDIATE = 64
NUM_LAYERS = 2
NUM_CLASSES = 4
CLS_PAD = 128        # lane-dense logits store; wrapper slices back to NUM_CLASSES
BERT_LN_EPS = 1e-12
LN_EPS = 1e-5        # nn.LayerNorm default (encoder.layernorm)
BN_EPS = 1e-5
ATTN_SCALE = 1.0 / (HEAD_DIM ** 0.5)

# ----------------------- packed-slab layout constants --------------------------
VEC_W = 256                                  # lane width of the bias/LN vector slab
(R_EMB_LN_G, R_EMB_LN_B, R_POOL_B, R_ENC_LN_G, R_ENC_LN_B,
 R_CB1, R_CB2, R_CB3) = range(8)
VEC_GLOBALS = 8
(O_BQKV, O_BO, O_ALN_G, O_ALN_B, O_B1, O_B2, O_OLN_G, O_OLN_B) = range(8)
VEC_PER_LAYER = 8
NUM_VECS = VEC_GLOBALS + VEC_PER_LAYER * NUM_LAYERS

WPROJ_W = 224        # per-layer slab cols: wqkv 0:96 | pad | wo 128:160 | w1 160:224
HEADA_W = 384        # pool_w 0:32 | pad | cw1 128:384


def _vmem_spec():
    return pl.BlockSpec(memory_space=pltpu.MemorySpace.VMEM)


# ------------------------------ the fused kernel -------------------------------
def _fused_forward_kernel(ids_ref, bias_ref, emb_ref, wproj_ref, wffn2_ref,
                          vec_ref, heada_ref, headb_ref, out_ref,
                          qkvp_ref, ctx_ref, *, batch, seq):
    H, HD, NH, INT = HIDDEN, HEAD_DIM, NUM_HEADS, INTERMEDIATE
    BS = batch * seq

    def ln(x, g_row, eps):
        g = vec_ref[g_row:g_row + 1, 0:H]
        b = vec_ref[g_row + 1:g_row + 2, 0:H]
        mu = jnp.mean(x, axis=-1, keepdims=True)
        var = jnp.mean((x - mu) ** 2, axis=-1, keepdims=True)
        return (x - mu) * jax.lax.rsqrt(var + eps) * g + b

    def gelu(y):  # tanh-approximate gelu
        return 0.5 * y * (1.0 + jnp.tanh(0.7978845608028654 * (y + 0.044715 * y * y * y)))

    # --- embeddings: one-hot gather on the MXU + pos/type add + LayerNorm ---
    ids = ids_ref[...]                                                 # (BS, 1) int32
    onehot = (jax.lax.broadcasted_iota(jnp.int32, (BS, VOCAB), 1) == ids).astype(jnp.float32)
    emb = jnp.dot(onehot, emb_ref[0:VOCAB, :], preferred_element_type=jnp.float32)
    emb = emb + emb_ref[VOCAB:VOCAB + BS, :]                           # + pos + token-type-0
    x = ln(emb, R_EMB_LN_G, BERT_LN_EPS)                               # (BS, H)

    bias = bias_ref[...]                                               # (B*NH*S, B*NH*S)

    # --- transformer layers (statically unrolled; everything stays in VMEM) ---
    for l in range(NUM_LAYERS):
        vb = VEC_GLOBALS + l * VEC_PER_LAYER

        # fused QKV projection (head-interleaved columns, ATTN_SCALE pre-folded into Q)
        wqkv = wproj_ref[l, :, 0:3 * H]                                # (H, 3H)
        qkv = (jnp.dot(x, wqkv, preferred_element_type=jnp.float32)
               + vec_ref[vb + O_BQKV:vb + O_BQKV + 1, 0:3 * H])        # (BS, 3H)

        # stage per-(batch, head) [Q|K|V] blocks into (B*NH*S, 3*HD) scratch (static offsets)
        for b in range(batch):
            for h in range(NH):
                r0 = (b * NH + h) * seq
                qkvp_ref[r0:r0 + seq, :] = qkv[b * seq:(b + 1) * seq,
                                               h * 3 * HD:(h + 1) * 3 * HD]
        qp = qkvp_ref[:, 0:HD]                                         # (B*NH*S, HD)
        kp = qkvp_ref[:, HD:2 * HD]
        vp = qkvp_ref[:, 2 * HD:3 * HD]

        # one block-diagonal-masked attention per layer (mask carries padding bias too)
        s = jnp.dot(qp, kp.T, preferred_element_type=jnp.float32) + bias
        m = jnp.max(s, axis=-1, keepdims=True)
        p = jnp.exp(s - m)
        p = p * pl.reciprocal(jnp.sum(p, axis=-1, keepdims=True), approx=True)
        ctxp = jnp.dot(p, vp, preferred_element_type=jnp.float32)      # (B*NH*S, HD)

        # unstage heads back to (BS, H) via static scratch writes (no concats)
        for b in range(batch):
            for h in range(NH):
                r0 = (b * NH + h) * seq
                ctx_ref[b * seq:(b + 1) * seq, h * HD:(h + 1) * HD] = ctxp[r0:r0 + seq, :]
        ctx = ctx_ref[...]

        # output projection + fused residual + LayerNorm
        wo = wproj_ref[l, :, 128:128 + H]
        attn_out = (jnp.dot(ctx, wo, preferred_element_type=jnp.float32)
                    + vec_ref[vb + O_BO:vb + O_BO + 1, 0:H])
        x = ln(x + attn_out, vb + O_ALN_G, BERT_LN_EPS)

        # feed-forward + fused residual + LayerNorm
        w1 = wproj_ref[l, :, 160:160 + INT]
        w2 = wffn2_ref[l]
        ff = gelu(jnp.dot(x, w1, preferred_element_type=jnp.float32)
                  + vec_ref[vb + O_B1:vb + O_B1 + 1, 0:INT])
        ff = (jnp.dot(ff, w2, preferred_element_type=jnp.float32)
              + vec_ref[vb + O_B2:vb + O_B2 + 1, 0:H])
        x = ln(x + ff, vb + O_OLN_G, BERT_LN_EPS)

    # --- pooler on [CLS] + TextEncoder LayerNorm (Dropout = identity in eval) ---
    cls = jnp.concatenate([x[b * seq:b * seq + 1, :] for b in range(batch)], axis=0)  # (B, H)
    pooled = jnp.tanh(jnp.dot(cls, heada_ref[:, 0:H], preferred_element_type=jnp.float32)
                      + vec_ref[R_POOL_B:R_POOL_B + 1, 0:H])
    feat = ln(pooled, R_ENC_LN_G, LN_EPS)

    # --- classifier MLP: BatchNorm folded into linears, Dropout = identity ---
    h1 = jnp.maximum(
        jnp.dot(feat, heada_ref[:, 128:128 + 256], preferred_element_type=jnp.float32)
        + vec_ref[R_CB1:R_CB1 + 1, 0:256], 0.0)
    h2 = jnp.maximum(
        jnp.dot(h1, headb_ref[0:256, :], preferred_element_type=jnp.float32)
        + vec_ref[R_CB2:R_CB2 + 1, 0:CLS_PAD], 0.0)
    out_ref[...] = (jnp.dot(h2, headb_ref[256:256 + CLS_PAD, :],
                            preferred_element_type=jnp.float32)
                    + vec_ref[R_CB3:R_CB3 + 1, 0:CLS_PAD])


# ------------------------------ parameter setup --------------------------------
def init_params(key):
    def nrm(k, shape, std=0.02):
        return (std * jax.random.normal(k, shape)).astype(jnp.float32)

    keys = iter(jax.random.split(key, 256))
    p = {}
    p["word_emb"] = nrm(next(keys), (VOCAB, HIDDEN))
    p["pos_emb"] = nrm(next(keys), (MAX_POS, HIDDEN))
    p["type_emb"] = nrm(next(keys), (2, HIDDEN))
    p["emb_ln_g"] = jnp.ones((HIDDEN,), jnp.float32)
    p["emb_ln_b"] = jnp.zeros((HIDDEN,), jnp.float32)
    p["layers"] = []
    for _ in range(NUM_LAYERS):
        lp = {
            "wq": nrm(next(keys), (HIDDEN, HIDDEN)), "bq": jnp.zeros((HIDDEN,), jnp.float32),
            "wk": nrm(next(keys), (HIDDEN, HIDDEN)), "bk": jnp.zeros((HIDDEN,), jnp.float32),
            "wv": nrm(next(keys), (HIDDEN, HIDDEN)), "bv": jnp.zeros((HIDDEN,), jnp.float32),
            "wo": nrm(next(keys), (HIDDEN, HIDDEN)), "bo": jnp.zeros((HIDDEN,), jnp.float32),
            "attn_ln_g": jnp.ones((HIDDEN,), jnp.float32),
            "attn_ln_b": jnp.zeros((HIDDEN,), jnp.float32),
            "w1": nrm(next(keys), (HIDDEN, INTERMEDIATE)),
            "b1": jnp.zeros((INTERMEDIATE,), jnp.float32),
            "w2": nrm(next(keys), (INTERMEDIATE, HIDDEN)),
            "b2": jnp.zeros((HIDDEN,), jnp.float32),
            "out_ln_g": jnp.ones((HIDDEN,), jnp.float32),
            "out_ln_b": jnp.zeros((HIDDEN,), jnp.float32),
        }
        p["layers"].append(lp)
    p["pool_w"] = nrm(next(keys), (HIDDEN, HIDDEN))
    p["pool_b"] = jnp.zeros((HIDDEN,), jnp.float32)
    p["enc_ln_g"] = jnp.ones((HIDDEN,), jnp.float32) + nrm(next(keys), (HIDDEN,))
    p["enc_ln_b"] = nrm(next(keys), (HIDDEN,))

    def bn(k, n):
        k1, k2, k3, k4 = jax.random.split(k, 4)
        return {
            "gamma": 1.0 + 0.1 * jax.random.normal(k1, (n,)).astype(jnp.float32),
            "beta": 0.1 * jax.random.normal(k2, (n,)).astype(jnp.float32),
            "mean": 0.1 * jax.random.normal(k3, (n,)).astype(jnp.float32),
            "var": 0.5 + jnp.abs(jax.random.normal(k4, (n,))).astype(jnp.float32),
        }
    p["cls_w1"] = nrm(next(keys), (HIDDEN, 256)); p["cls_b1"] = nrm(next(keys), (256,))
    p["cls_bn1"] = bn(next(keys), 256)
    p["cls_w2"] = nrm(next(keys), (256, 128)); p["cls_b2"] = nrm(next(keys), (128,))
    p["cls_bn2"] = bn(next(keys), 128)
    p["cls_w3"] = nrm(next(keys), (128, NUM_CLASSES)); p["cls_b3"] = nrm(next(keys), (NUM_CLASSES,))
    return p


# --------------------------------- forward -------------------------------------
def text_only_classifier(params, input_ids, attention_mask):
    B, S = input_ids.shape
    H, HD, NH, INT = HIDDEN, HEAD_DIM, NUM_HEADS, INTERMEDIATE
    f32 = jnp.float32

    # ---- weight packing / fusion (constant-folded under jit; zero runtime cost) ----
    def pack_wqkv(lp):
        # head-interleaved [Q_h | K_h | V_h] columns; attention scale folded into Q
        wq, bq = lp["wq"] * ATTN_SCALE, lp["bq"] * ATTN_SCALE
        wcols, bcols = [], []
        for h in range(NH):
            sl = slice(h * HD, (h + 1) * HD)
            wcols += [wq[:, sl], lp["wk"][:, sl], lp["wv"][:, sl]]
            bcols += [bq[sl], lp["bk"][sl], lp["bv"][sl]]
        return jnp.concatenate(wcols, axis=1), jnp.concatenate(bcols)

    wproj_rows, wffn2_rows, layer_vec_rows = [], [], []
    for lp in params["layers"]:
        wqkv, bqkv = pack_wqkv(lp)
        blk = jnp.zeros((H, WPROJ_W), f32)
        blk = blk.at[:, 0:3 * H].set(wqkv)
        blk = blk.at[:, 128:128 + H].set(lp["wo"])
        blk = blk.at[:, 160:160 + INT].set(lp["w1"])
        wproj_rows.append(blk)
        wffn2_rows.append(lp["w2"])
        layer_vec_rows += [bqkv, lp["bo"], lp["attn_ln_g"], lp["attn_ln_b"],
                           lp["b1"], lp["b2"], lp["out_ln_g"], lp["out_ln_b"]]
    wproj = jnp.stack(wproj_rows)                                   # (L, H, 224)
    wffn2 = jnp.stack(wffn2_rows)                                   # (L, INT, H)

    def fold_bn(w, b, bn):
        # Linear -> BatchNorm1d(eval) is an exact affine fold into the Linear.
        s = bn["gamma"] * jax.lax.rsqrt(bn["var"] + BN_EPS)
        return w * s[None, :], b * s + bn["beta"] - bn["mean"] * s

    cw1, cb1 = fold_bn(params["cls_w1"], params["cls_b1"], params["cls_bn1"])
    cw2, cb2 = fold_bn(params["cls_w2"], params["cls_b2"], params["cls_bn2"])
    cw3 = jnp.zeros((128, CLS_PAD), f32).at[:, :NUM_CLASSES].set(params["cls_w3"])

    head_a = jnp.zeros((H, HEADA_W), f32)
    head_a = head_a.at[:, 0:H].set(params["pool_w"])
    head_a = head_a.at[:, 128:128 + 256].set(cw1)                   # (32, 384)
    head_b = jnp.concatenate([cw2, cw3], axis=0)                    # (384, 128)

    def vrow(v):
        v = v.reshape(-1).astype(f32)
        return jnp.zeros((VEC_W,), f32).at[:v.shape[0]].set(v)

    vec_rows = [params["emb_ln_g"], params["emb_ln_b"], params["pool_b"],
                params["enc_ln_g"], params["enc_ln_b"], cb1, cb2, params["cls_b3"]]
    vec_rows += layer_vec_rows
    vec_slab = jnp.stack([vrow(v) for v in vec_rows])               # (NUM_VECS, 256)

    pos_type = jnp.tile(params["pos_emb"][:S] + params["type_emb"][0][None, :], (B, 1))
    emb_slab = jnp.concatenate([params["word_emb"], pos_type], axis=0)  # (VOCAB+B*S, H)

    # ---- runtime inputs ----
    # TODO(synk): ids >= VOCAB silently produce a zero embedding (PyTorch would raise).
    ids = input_ids.reshape(B * S, 1).astype(jnp.int32)
    # block-diagonal (batch, head) mask + additive key-padding bias, built once per call
    G = B * NH
    blk_id = jnp.arange(G * S) // S
    same = blk_id[:, None] == blk_id[None, :]
    key_bias = jnp.repeat((1.0 - attention_mask.astype(f32)) * -10000.0, NH, axis=0).reshape(-1)
    attn_bias = jnp.where(same, key_bias[None, :], f32(-1e9))       # (G*S, G*S)

    inputs = (ids, attn_bias, emb_slab, wproj, wffn2, vec_slab, head_a, head_b)
    kern = functools.partial(_fused_forward_kernel, batch=B, seq=S)
    logits_pad = pl.pallas_call(
        kern,
        out_shape=jax.ShapeDtypeStruct((B, CLS_PAD), jnp.float32),
        in_specs=[_vmem_spec()] * len(inputs),
        out_specs=_vmem_spec(),
        scratch_shapes=[pltpu.VMEM((G * S, 3 * HD), jnp.float32),   # staged Q'|K'|V'
                        pltpu.VMEM((B * S, H), jnp.float32)],       # re-assembled context
    )(*inputs)
    return logits_pad[:, :NUM_CLASSES]                              # (B, NUM_CLASSES)


# ----------------------------------- main ---------------------------------------
if __name__ == "__main__":
    key = jax.random.PRNGKey(0)
    kp, ki = jax.random.split(key)
    params = init_params(kp)

    B, S = 2, 8
    input_ids = jax.random.randint(ki, (B, S), 0, VOCAB, dtype=jnp.int32)
    attention_mask = jnp.array(
        [[1, 1, 1, 1, 1, 1, 1, 1],
         [1, 1, 1, 1, 1, 1, 0, 0]], dtype=jnp.float32)

    fwd = jax.jit(functools.partial(text_only_classifier, params))
    logits = fwd(input_ids, attention_mask)
    jax.block_until_ready(logits)
    assert logits.shape == (B, NUM_CLASSES) and logits.dtype == jnp.float32
    print("KERNEL_OK")
</pallas_src>

<mosaic_0001>
module attributes {stable_mosaic.version = 11 : i64} {
  func.func @_fused_forward_kernel(%arg0: memref<16x1xi32, #tpu.memory_space<vmem>>, %arg1: memref<64x64xf32, #tpu.memory_space<vmem>>, %arg2: memref<80x32xf32, #tpu.memory_space<vmem>>, %arg3: memref<2x32x224xf32, #tpu.memory_space<vmem>>, %arg4: memref<2x64x32xf32, #tpu.memory_space<vmem>>, %arg5: memref<24x256xf32, #tpu.memory_space<vmem>>, %arg6: memref<32x384xf32, #tpu.memory_space<vmem>>, %arg7: memref<384x128xf32, #tpu.memory_space<vmem>>, %arg8: memref<2x128xf32, #tpu.memory_space<vmem>>, %arg9: memref<64x24xf32, #tpu.memory_space<vmem>>, %arg10: memref<16x32xf32, #tpu.memory_space<vmem>>) attributes {dimension_semantics = [], scalar_prefetch = 0 : i64, scratch_operands = 2 : i64, tpu.core_type = #tpu.core_type<tc>} {
    %c0 = arith.constant 0 : index
    %c0_0 = arith.constant 0 : index
    %0 = vector.load %arg0[%c0, %c0_0] : memref<16x1xi32, #tpu.memory_space<vmem>>, vector<16x1xi32>
    %1 = tpu.iota {dimensions = array<i32: 1>} : vector<16x64xi32>
    %2 = vector.broadcast %0 : vector<16x1xi32> to vector<16x64xi32>
    %3 = arith.cmpi eq, %1, %2 : vector<16x64xi32>
    %4 = arith.extui %3 : vector<16x64xi1> to vector<16x64xi32>
    %5 = arith.sitofp %4 : vector<16x64xi32> to vector<16x64xf32>
    %c0_1 = arith.constant 0 : index
    %c0_2 = arith.constant 0 : index
    %6 = vector.load %arg2[%c0_1, %c0_2] : memref<80x32xf32, #tpu.memory_space<vmem>>, vector<64x32xf32>
    %cst = arith.constant dense<0.000000e+00> : vector<16x32xf32>
    %7 = tpu.matmul %5, %6, %cst {dimension_numbers = #tpu.dot_dimension_numbers<[1], [0], [0], [1], [0, 0, 1, 1], [], []>} : vector<16x64xf32>, vector<64x32xf32>, vector<16x32xf32> -> vector<16x32xf32>
    %c64 = arith.constant 64 : index
    %c0_3 = arith.constant 0 : index
    %8 = vector.load %arg2[%c64, %c0_3] : memref<80x32xf32, #tpu.memory_space<vmem>>, vector<16x32xf32>
    %9 = arith.addf %7, %8 : vector<16x32xf32>
    %c0_4 = arith.constant 0 : index
    %c0_5 = arith.constant 0 : index
    %10 = vector.load %arg5[%c0_4, %c0_5] : memref<24x256xf32, #tpu.memory_space<vmem>>, vector<1x32xf32>
    %c1 = arith.constant 1 : index
    %c0_6 = arith.constant 0 : index
    %11 = vector.load %arg5[%c1, %c0_6] : memref<24x256xf32, #tpu.memory_space<vmem>>, vector<1x32xf32>
    %cst_7 = arith.constant dense<0.000000e+00> : vector<16xf32>
    %12 = vector.multi_reduction <add>, %9, %cst_7 [1] : vector<16x32xf32> to vector<16xf32>
    %13 = vector.shape_cast %12 : vector<16xf32> to vector<16x1xf32>
    %cst_8 = arith.constant 3.200000e+01 : f32
    %14 = vector.broadcast %cst_8 : f32 to vector<16x1xf32>
    %15 = arith.divf %13, %14 : vector<16x1xf32>
    %16 = vector.broadcast %15 : vector<16x1xf32> to vector<16x32xf32>
    %17 = arith.subf %9, %16 : vector<16x32xf32>
    %18 = arith.mulf %17, %17 : vector<16x32xf32>
    %cst_9 = arith.constant dense<0.000000e+00> : vector<16xf32>
    %19 = vector.multi_reduction <add>, %18, %cst_9 [1] : vector<16x32xf32> to vector<16xf32>
    %20 = vector.shape_cast %19 : vector<16xf32> to vector<16x1xf32>
    %cst_10 = arith.constant 3.200000e+01 : f32
    %21 = vector.broadcast %cst_10 : f32 to vector<16x1xf32>
    %22 = arith.divf %20, %21 : vector<16x1xf32>
    %23 = vector.broadcast %15 : vector<16x1xf32> to vector<16x32xf32>
    %24 = arith.subf %9, %23 : vector<16x32xf32>
    %cst_11 = arith.constant 9.99999996E-13 : f32
    %25 = vector.broadcast %cst_11 : f32 to vector<16x1xf32>
    %26 = arith.addf %22, %25 : vector<16x1xf32>
    %27 = math.rsqrt %26 : vector<16x1xf32>
    %28 = vector.broadcast %27 : vector<16x1xf32> to vector<16x32xf32>
    %29 = arith.mulf %24, %28 : vector<16x32xf32>
    %30 = vector.broadcast %10 : vector<1x32xf32> to vector<16x32xf32>
    %31 = arith.mulf %29, %30 : vector<16x32xf32>
    %32 = vector.broadcast %11 : vector<1x32xf32> to vector<16x32xf32>
    %33 = arith.addf %31, %32 : vector<16x32xf32>
    %c0_12 = arith.constant 0 : index
    %c0_13 = arith.constant 0 : index
    %34 = vector.load %arg1[%c0_12, %c0_13] : memref<64x64xf32, #tpu.memory_space<vmem>>, vector<64x64xf32>
    %c0_14 = arith.constant 0 : index
    %c0_15 = arith.constant 0 : index
    %c0_16 = arith.constant 0 : index
    %35 = vector.load %arg3[%c0_14, %c0_15, %c0_16] : memref<2x32x224xf32, #tpu.memory_space<vmem>>, vector<1x32x96xf32>
    %36 = vector.shape_cast %35 : vector<1x32x96xf32> to vector<32x96xf32>
    %cst_17 = arith.constant dense<0.000000e+00> : vector<16x96xf32>
    %37 = tpu.matmul %33, %36, %cst_17 {dimension_numbers = #tpu.dot_dimension_numbers<[1], [0], [0], [1], [0, 0, 1, 1], [], []>} : vector<16x32xf32>, vector<32x96xf32>, vector<16x96xf32> -> vector<16x96xf32>
    %c8 = arith.constant 8 : index
    %c0_18 = arith.constant 0 : index
    %38 = vector.load %arg5[%c8, %c0_18] : memref<24x256xf32, #tpu.memory_space<vmem>>, vector<1x96xf32>
    %39 = vector.broadcast %38 : vector<1x96xf32> to vector<16x96xf32>
    %40 = arith.addf %37, %39 : vector<16x96xf32>
    %41 = vector.extract_strided_slice %40 {offsets = [0, 0], sizes = [8, 24], strides = [1, 1]} : vector<16x96xf32> to vector<8x24xf32>
    %c0_19 = arith.constant 0 : index
    %c0_20 = arith.constant 0 : index
    %42 = vector.load %arg9[%c0_19, %c0_20] : memref<64x24xf32, #tpu.memory_space<vmem>>, vector<8x24xf32>
    tpu.vector_store %arg9[%c0_19, %c0_20], %41 {strides = array<i32>} : memref<64x24xf32, #tpu.memory_space<vmem>>, vector<8x24xf32>,
    %43 = vector.extract_strided_slice %40 {offsets = [0, 24], sizes = [8, 24], strides = [1, 1]} : vector<16x96xf32> to vector<8x24xf32>
    %c8_21 = arith.constant 8 : index
    %c0_22 = arith.constant 0 : index
    %44 = vector.load %arg9[%c8_21, %c0_22] : memref<64x24xf32, #tpu.memory_space<vmem>>, vector<8x24xf32>
    tpu.vector_store %arg9[%c8_21, %c0_22], %43 {strides = array<i32>} : memref<64x24xf32, #tpu.memory_space<vmem>>, vector<8x24xf32>,
    %45 = vector.extract_strided_slice %40 {offsets = [0, 48], sizes = [8, 24], strides = [1, 1]} : vector<16x96xf32> to vector<8x24xf32>
    %c16 = arith.constant 16 : index
    %c0_23 = arith.constant 0 : index
    %46 = vector.load %arg9[%c16, %c0_23] : memref<64x24xf32, #tpu.memory_space<vmem>>, vector<8x24xf32>
    tpu.vector_store %arg9[%c16, %c0_23], %45 {strides = array<i32>} : memref<64x24xf32, #tpu.memory_space<vmem>>, vector<8x24xf32>,
    %47 = vector.extract_strided_slice %40 {offsets = [0, 72], sizes = [8, 24], strides = [1, 1]} : vector<16x96xf32> to vector<8x24xf32>
    %c24 = arith.constant 24 : index
    %c0_24 = arith.constant 0 : index
    %48 = vector.load %arg9[%c24, %c0_24] : memref<64x24xf32, #tpu.memory_space<vmem>>, vector<8x24xf32>
    tpu.vector_store %arg9[%c24, %c0_24], %47 {strides = array<i32>} : memref<64x24xf32, #tpu.memory_space<vmem>>, vector<8x24xf32>,
    %49 = vector.extract_strided_slice %40 {offsets = [8, 0], sizes = [8, 24], strides = [1, 1]} : vector<16x96xf32> to vector<8x24xf32>
    %c32 = arith.constant 32 : index
    %c0_25 = arith.constant 0 : index
    %50 = vector.load %arg9[%c32, %c0_25] : memref<64x24xf32, #tpu.memory_space<vmem>>, vector<8x24xf32>
    tpu.vector_store %arg9[%c32, %c0_25], %49 {strides = array<i32>} : memref<64x24xf32, #tpu.memory_space<vmem>>, vector<8x24xf32>,
    %51 = vector.extract_strided_slice %40 {offsets = [8, 24], sizes = [8, 24], strides = [1, 1]} : vector<16x96xf32> to vector<8x24xf32>
    %c40 = arith.constant 40 : index
    %c0_26 = arith.constant 0 : index
    %52 = vector.load %arg9[%c40, %c0_26] : memref<64x24xf32, #tpu.memory_space<vmem>>, vector<8x24xf32>
    tpu.vector_store %arg9[%c40, %c0_26], %51 {strides = array<i32>} : memref<64x24xf32, #tpu.memory_space<vmem>>, vector<8x24xf32>,
    %53 = vector.extract_strided_slice %40 {offsets = [8, 48], sizes = [8, 24], strides = [1, 1]} : vector<16x96xf32> to vector<8x24xf32>
    %c48 = arith.constant 48 : index
    %c0_27 = arith.constant 0 : index
    %54 = vector.load %arg9[%c48, %c0_27] : memref<64x24xf32, #tpu.memory_space<vmem>>, vector<8x24xf32>
    tpu.vector_store %arg9[%c48, %c0_27], %53 {strides = array<i32>} : memref<64x24xf32, #tpu.memory_space<vmem>>, vector<8x24xf32>,
    %55 = vector.extract_strided_slice %40 {offsets = [8, 72], sizes = [8, 24], strides = [1, 1]} : vector<16x96xf32> to vector<8x24xf32>
    %c56 = arith.constant 56 : index
    %c0_28 = arith.constant 0 : index
    %56 = vector.load %arg9[%c56, %c0_28] : memref<64x24xf32, #tpu.memory_space<vmem>>, vector<8x24xf32>
    tpu.vector_store %arg9[%c56, %c0_28], %55 {strides = array<i32>} : memref<64x24xf32, #tpu.memory_space<vmem>>, vector<8x24xf32>,
    %c0_29 = arith.constant 0 : index
    %c0_30 = arith.constant 0 : index
    %57 = vector.load %arg9[%c0_29, %c0_30] : memref<64x24xf32, #tpu.memory_space<vmem>>, vector<64x8xf32>
    %c0_31 = arith.constant 0 : index
    %c8_32 = arith.constant 8 : index
    %58 = vector.load %arg9[%c0_31, %c8_32] : memref<64x24xf32, #tpu.memory_space<vmem>>, vector<64x8xf32>
    %c0_33 = arith.constant 0 : index
    %c16_34 = arith.constant 16 : index
    %59 = vector.load %arg9[%c0_33, %c16_34] : memref<64x24xf32, #tpu.memory_space<vmem>>, vector<64x8xf32>
    %60 = tpu.transpose %58, [1, 0] : vector<64x8xf32> -> vector<8x64xf32>
    %cst_35 = arith.constant dense<0.000000e+00> : vector<64x64xf32>
    %61 = tpu.matmul %57, %60, %cst_35 {dimension_numbers = #tpu.dot_dimension_numbers<[1], [0], [0], [1], [0, 0, 1, 1], [], []>} : vector<64x8xf32>, vector<8x64xf32>, vector<64x64xf32> -> vector<64x64xf32>
    %62 = arith.addf %61, %34 : vector<64x64xf32>
    %cst_36 = arith.constant dense<0xFF800000> : vector<64xf32>
    %63 = vector.multi_reduction <maximumf>, %62, %cst_36 [1] : vector<64x64xf32> to vector<64xf32>
    %64 = vector.shape_cast %63 : vector<64xf32> to vector<64x1xf32>
    %65 = vector.broadcast %64 : vector<64x1xf32> to vector<64x64xf32>
    %66 = arith.subf %62, %65 : vector<64x64xf32>
    %67 = math.exp %66 : vector<64x64xf32>
    %cst_37 = arith.constant dense<0.000000e+00> : vector<64xf32>
    %68 = vector.multi_reduction <add>, %67, %cst_37 [1] : vector<64x64xf32> to vector<64xf32>
    %69 = vector.shape_cast %68 : vector<64xf32> to vector<64x1xf32>
    %70 = tpu.reciprocal %69 {approx = true} : vector<64x1xf32> -> vector<64x1xf32>
    %71 = vector.broadcast %70 : vector<64x1xf32> to vector<64x64xf32>
    %72 = arith.mulf %67, %71 : vector<64x64xf32>
    %cst_38 = arith.constant dense<0.000000e+00> : vector<64x8xf32>
    %73 = tpu.matmul %72, %59, %cst_38 {dimension_numbers = #tpu.dot_dimension_numbers<[1], [0], [0], [1], [0, 0, 1, 1], [], []>} : vector<64x64xf32>, vector<64x8xf32>, vector<64x8xf32> -> vector<64x8xf32>
    %74 = vector.extract_strided_slice %73 {offsets = [0, 0], sizes = [8, 8], strides = [1, 1]} : vector<64x8xf32> to vector<8x8xf32>
    %c0_39 = arith.constant 0 : index
    %c0_40 = arith.constant 0 : index
    %75 = vector.load %arg10[%c0_39, %c0_40] : memref<16x32xf32, #tpu.memory_space<vmem>>, vector<8x8xf32>
    tpu.vector_store %arg10[%c0_39, %c0_40], %74 {strides = array<i32>} : memref<16x32xf32, #tpu.memory_space<vmem>>, vector<8x8xf32>,
    %76 = vector.extract_strided_slice %73 {offsets = [8, 0], sizes = [8, 8], strides = [1, 1]} : vector<64x8xf32> to vector<8x8xf32>
    %c0_41 = arith.constant 0 : index
    %c8_42 = arith.constant 8 : index
    %77 = vector.load %arg10[%c0_41, %c8_42] : memref<16x32xf32, #tpu.memory_space<vmem>>, vector<8x8xf32>
    tpu.vector_store %arg10[%c0_41, %c8_42], %76 {strides = array<i32>} : memref<16x32xf32, #tpu.memory_space<vmem>>, vector<8x8xf32>,
    %78 = vector.extract_strided_slice %73 {offsets = [16, 0], sizes = [8, 8], strides = [1, 1]} : vector<64x8xf32> to vector<8x8xf32>
    %c0_43 = arith.constant 0 : index
    %c16_44 = arith.constant 16 : index
    %79 = vector.load %arg10[%c0_43, %c16_44] : memref<16x32xf32, #tpu.memory_space<vmem>>, vector<8x8xf32>
    tpu.vector_store %arg10[%c0_43, %c16_44], %78 {strides = array<i32>} : memref<16x32xf32, #tpu.memory_space<vmem>>, vector<8x8xf32>,
    %80 = vector.extract_strided_slice %73 {offsets = [24, 0], sizes = [8, 8], strides = [1, 1]} : vector<64x8xf32> to vector<8x8xf32>
    %c0_45 = arith.constant 0 : index
    %c24_46 = arith.constant 24 : index
    %81 = vector.load %arg10[%c0_45, %c24_46] : memref<16x32xf32, #tpu.memory_space<vmem>>, vector<8x8xf32>
    tpu.vector_store %arg10[%c0_45, %c24_46], %80 {strides = array<i32>} : memref<16x32xf32, #tpu.memory_space<vmem>>, vector<8x8xf32>,
    %82 = vector.extract_strided_slice %73 {offsets = [32, 0], sizes = [8, 8], strides = [1, 1]} : vector<64x8xf32> to vector<8x8xf32>
    %c8_47 = arith.constant 8 : index
    %c0_48 = arith.constant 0 : index
    %83 = vector.load %arg10[%c8_47, %c0_48] : memref<16x32xf32, #tpu.memory_space<vmem>>, vector<8x8xf32>
    tpu.vector_store %arg10[%c8_47, %c0_48], %82 {strides = array<i32>} : memref<16x32xf32, #tpu.memory_space<vmem>>, vector<8x8xf32>,
    %84 = vector.extract_strided_slice %73 {offsets = [40, 0], sizes = [8, 8], strides = [1, 1]} : vector<64x8xf32> to vector<8x8xf32>
    %c8_49 = arith.constant 8 : index
    %c8_50 = arith.constant 8 : index
    %85 = vector.load %arg10[%c8_49, %c8_50] : memref<16x32xf32, #tpu.memory_space<vmem>>, vector<8x8xf32>
    tpu.vector_store %arg10[%c8_49, %c8_50], %84 {strides = array<i32>} : memref<16x32xf32, #tpu.memory_space<vmem>>, vector<8x8xf32>,
    %86 = vector.extract_strided_slice %73 {offsets = [48, 0], sizes = [8, 8], strides = [1, 1]} : vector<64x8xf32> to vector<8x8xf32>
    %c8_51 = arith.constant 8 : index
    %c16_52 = arith.constant 16 : index
    %87 = vector.load %arg10[%c8_51, %c16_52] : memref<16x32xf32, #tpu.memory_space<vmem>>, vector<8x8xf32>
    tpu.vector_store %arg10[%c8_51, %c16_52], %86 {strides = array<i32>} : memref<16x32xf32, #tpu.memory_space<vmem>>, vector<8x8xf32>,
    %88 = vector.extract_strided_slice %73 {offsets = [56, 0], sizes = [8, 8], strides = [1, 1]} : vector<64x8xf32> to vector<8x8xf32>
    %c8_53 = arith.constant 8 : index
    %c24_54 = arith.constant 24 : index
    %89 = vector.load %arg10[%c8_53, %c24_54] : memref<16x32xf32, #tpu.memory_space<vmem>>, vector<8x8xf32>
    tpu.vector_store %arg10[%c8_53, %c24_54], %88 {strides = array<i32>} : memref<16x32xf32, #tpu.memory_space<vmem>>, vector<8x8xf32>,
    %c0_55 = arith.constant 0 : index
    %c0_56 = arith.constant 0 : index
    %90 = vector.load %arg10[%c0_55, %c0_56] : memref<16x32xf32, #tpu.memory_space<vmem>>, vector<16x32xf32>
    %c0_57 = arith.constant 0 : index
    %c0_58 = arith.constant 0 : index
    %c128 = arith.constant 128 : index
    %91 = vector.load %arg3[%c0_57, %c0_58, %c128] : memref<2x32x224xf32, #tpu.memory_space<vmem>>, vector<1x32x32xf32>
    %92 = vector.shape_cast %91 : vector<1x32x32xf32> to vector<32x32xf32>
    %cst_59 = arith.constant dense<0.000000e+00> : vector<16x32xf32>
    %93 = tpu.matmul %90, %92, %cst_59 {dimension_numbers = #tpu.dot_dimension_numbers<[1], [0], [0], [1], [0, 0, 1, 1], [], []>} : vector<16x32xf32>, vector<32x32xf32>, vector<16x32xf32> -> vector<16x32xf32>
    %c9 = arith.constant 9 : index
    %c0_60 = arith.constant 0 : index
    %94 = vector.load %arg5[%c9, %c0_60] : memref<24x256xf32, #tpu.memory_space<vmem>>, vector<1x32xf32>
    %95 = vector.broadcast %94 : vector<1x32xf32> to vector<16x32xf32>
    %96 = arith.addf %93, %95 : vector<16x32xf32>
    %97 = arith.addf %33, %96 : vector<16x32xf32>
    %c10 = arith.constant 10 : index
    %c0_61 = arith.constant 0 : index
    %98 = vector.load %arg5[%c10, %c0_61] : memref<24x256xf32, #tpu.memory_space<vmem>>, vector<1x32xf32>
    %c11 = arith.constant 11 : index
    %c0_62 = arith.constant 0 : index
    %99 = vector.load %arg5[%c11, %c0_62] : memref<24x256xf32, #tpu.memory_space<vmem>>, vector<1x32xf32>
    %cst_63 = arith.constant dense<0.000000e+00> : vector<16xf32>
    %100 = vector.multi_reduction <add>, %97, %cst_63 [1] : vector<16x32xf32> to vector<16xf32>
    %101 = vector.shape_cast %100 : vector<16xf32> to vector<16x1xf32>
    %cst_64 = arith.constant 3.200000e+01 : f32
    %102 = vector.broadcast %cst_64 : f32 to vector<16x1xf32>
    %103 = arith.divf %101, %102 : vector<16x1xf32>
    %104 = vector.broadcast %103 : vector<16x1xf32> to vector<16x32xf32>
    %105 = arith.subf %97, %104 : vector<16x32xf32>
    %106 = arith.mulf %105, %105 : vector<16x32xf32>
    %cst_65 = arith.constant dense<0.000000e+00> : vector<16xf32>
    %107 = vector.multi_reduction <add>, %106, %cst_65 [1] : vector<16x32xf32> to vector<16xf32>
    %108 = vector.shape_cast %107 : vector<16xf32> to vector<16x1xf32>
    %cst_66 = arith.constant 3.200000e+01 : f32
    %109 = vector.broadcast %cst_66 : f32 to vector<16x1xf32>
    %110 = arith.divf %108, %109 : vector<16x1xf32>
    %111 = vector.broadcast %103 : vector<16x1xf32> to vector<16x32xf32>
    %112 = arith.subf %97, %111 : vector<16x32xf32>
    %cst_67 = arith.constant 9.99999996E-13 : f32
    %113 = vector.broadcast %cst_67 : f32 to vector<16x1xf32>
    %114 = arith.addf %110, %113 : vector<16x1xf32>
    %115 = math.rsqrt %114 : vector<16x1xf32>
    %116 = vector.broadcast %115 : vector<16x1xf32> to vector<16x32xf32>
    %117 = arith.mulf %112, %116 : vector<16x32xf32>
    %118 = vector.broadcast %98 : vector<1x32xf32> to vector<16x32xf32>
    %119 = arith.mulf %117, %118 : vector<16x32xf32>
    %120 = vector.broadcast %99 : vector<1x32xf32> to vector<16x32xf32>
    %121 = arith.addf %119, %120 : vector<16x32xf32>
    %c0_68 = arith.constant 0 : index
    %c0_69 = arith.constant 0 : index
    %c160 = arith.constant 160 : index
    %122 = vector.load %arg3[%c0_68, %c0_69, %c160] : memref<2x32x224xf32, #tpu.memory_space<vmem>>, vector<1x32x64xf32>
    %123 = vector.shape_cast %122 : vector<1x32x64xf32> to vector<32x64xf32>
    %c0_70 = arith.constant 0 : index
    %c0_71 = arith.constant 0 : index
    %c0_72 = arith.constant 0 : index
    %124 = vector.load %arg4[%c0_70, %c0_71, %c0_72] : memref<2x64x32xf32, #tpu.memory_space<vmem>>, vector<1x64x32xf32>
    %125 = vector.shape_cast %124 : vector<1x64x32xf32> to vector<64x32xf32>
    %cst_73 = arith.constant dense<0.000000e+00> : vector<16x64xf32>
    %126 = tpu.matmul %121, %123, %cst_73 {dimension_numbers = #tpu.dot_dimension_numbers<[1], [0], [0], [1], [0, 0, 1, 1], [], []>} : vector<16x32xf32>, vector<32x64xf32>, vector<16x64xf32> -> vector<16x64xf32>
    %c12 = arith.constant 12 : index
    %c0_74 = arith.constant 0 : index
    %127 = vector.load %arg5[%c12, %c0_74] : memref<24x256xf32, #tpu.memory_space<vmem>>, vector<1x64xf32>
    %128 = vector.broadcast %127 : vector<1x64xf32> to vector<16x64xf32>
    %129 = arith.addf %126, %128 : vector<16x64xf32>
    %cst_75 = arith.constant 5.000000e-01 : f32
    %130 = vector.broadcast %cst_75 : f32 to vector<16x64xf32>
    %131 = arith.mulf %130, %129 : vector<16x64xf32>
    %cst_76 = arith.constant 4.471500e-02 : f32
    %132 = vector.broadcast %cst_76 : f32 to vector<16x64xf32>
    %133 = arith.mulf %132, %129 : vector<16x64xf32>
    %134 = arith.mulf %133, %129 : vector<16x64xf32>
    %135 = arith.mulf %134, %129 : vector<16x64xf32>
    %136 = arith.addf %129, %135 : vector<16x64xf32>
    %cst_77 = arith.constant 0.797884583 : f32
    %137 = vector.broadcast %cst_77 : f32 to vector<16x64xf32>
    %138 = arith.mulf %137, %136 : vector<16x64xf32>
    %139 = math.tanh %138 : vector<16x64xf32>
    %cst_78 = arith.constant 1.000000e+00 : f32
    %140 = vector.broadcast %cst_78 : f32 to vector<16x64xf32>
    %141 = arith.addf %140, %139 : vector<16x64xf32>
    %142 = arith.mulf %131, %141 : vector<16x64xf32>
    %cst_79 = arith.constant dense<0.000000e+00> : vector<16x32xf32>
    %143 = tpu.matmul %142, %125, %cst_79 {dimension_numbers = #tpu.dot_dimension_numbers<[1], [0], [0], [1], [0, 0, 1, 1], [], []>} : vector<16x64xf32>, vector<64x32xf32>, vector<16x32xf32> -> vector<16x32xf32>
    %c13 = arith.constant 13 : index
    %c0_80 = arith.constant 0 : index
    %144 = vector.load %arg5[%c13, %c0_80] : memref<24x256xf32, #tpu.memory_space<vmem>>, vector<1x32xf32>
    %145 = vector.broadcast %144 : vector<1x32xf32> to vector<16x32xf32>
    %146 = arith.addf %143, %145 : vector<16x32xf32>
    %147 = arith.addf %121, %146 : vector<16x32xf32>
    %c14 = arith.constant 14 : index
    %c0_81 = arith.constant 0 : index
    %148 = vector.load %arg5[%c14, %c0_81] : memref<24x256xf32, #tpu.memory_space<vmem>>, vector<1x32xf32>
    %c15 = arith.constant 15 : index
    %c0_82 = arith.constant 0 : index
    %149 = vector.load %arg5[%c15, %c0_82] : memref<24x256xf32, #tpu.memory_space<vmem>>, vector<1x32xf32>
    %cst_83 = arith.constant dense<0.000000e+00> : vector<16xf32>
    %150 = vector.multi_reduction <add>, %147, %cst_83 [1] : vector<16x32xf32> to vector<16xf32>
    %151 = vector.shape_cast %150 : vector<16xf32> to vector<16x1xf32>
    %cst_84 = arith.constant 3.200000e+01 : f32
    %152 = vector.broadcast %cst_84 : f32 to vector<16x1xf32>
    %153 = arith.divf %151, %152 : vector<16x1xf32>
    %154 = vector.broadcast %153 : vector<16x1xf32> to vector<16x32xf32>
    %155 = arith.subf %147, %154 : vector<16x32xf32>
    %156 = arith.mulf %155, %155 : vector<16x32xf32>
    %cst_85 = arith.constant dense<0.000000e+00> : vector<16xf32>
    %157 = vector.multi_reduction <add>, %156, %cst_85 [1] : vector<16x32xf32> to vector<16xf32>
    %158 = vector.shape_cast %157 : vector<16xf32> to vector<16x1xf32>
    %cst_86 = arith.constant 3.200000e+01 : f32
    %159 = vector.broadcast %cst_86 : f32 to vector<16x1xf32>
    %160 = arith.divf %158, %159 : vector<16x1xf32>
    %161 = vector.broadcast %153 : vector<16x1xf32> to vector<16x32xf32>
    %162 = arith.subf %147, %161 : vector<16x32xf32>
    %cst_87 = arith.constant 9.99999996E-13 : f32
    %163 = vector.broadcast %cst_87 : f32 to vector<16x1xf32>
    %164 = arith.addf %160, %163 : vector<16x1xf32>
    %165 = math.rsqrt %164 : vector<16x1xf32>
    %166 = vector.broadcast %165 : vector<16x1xf32> to vector<16x32xf32>
    %167 = arith.mulf %162, %166 : vector<16x32xf32>
    %168 = vector.broadcast %148 : vector<1x32xf32> to vector<16x32xf32>
    %169 = arith.mulf %167, %168 : vector<16x32xf32>
    %170 = vector.broadcast %149 : vector<1x32xf32> to vector<16x32xf32>
    %171 = arith.addf %169, %170 : vector<16x32xf32>
    %c1_88 = arith.constant 1 : index
    %c0_89 = arith.constant 0 : index
    %c0_90 = arith.constant 0 : index
    %172 = vector.load %arg3[%c1_88, %c0_89, %c0_90] : memref<2x32x224xf32, #tpu.memory_space<vmem>>, vector<1x32x96xf32>
    %173 = vector.shape_cast %172 : vector<1x32x96xf32> to vector<32x96xf32>
    %cst_91 = arith.constant dense<0.000000e+00> : vector<16x96xf32>
    %174 = tpu.matmul %171, %173, %cst_91 {dimension_numbers = #tpu.dot_dimension_numbers<[1], [0], [0], [1], [0, 0, 1, 1], [], []>} : vector<16x32xf32>, vector<32x96xf32>, vector<16x96xf32> -> vector<16x96xf32>
    %c16_92 = arith.constant 16 : index
    %c0_93 = arith.constant 0 : index
    %175 = vector.load %arg5[%c16_92, %c0_93] : memref<24x256xf32, #tpu.memory_space<vmem>>, vector<1x96xf32>
    %176 = vector.broadcast %175 : vector<1x96xf32> to vector<16x96xf32>
    %177 = arith.addf %174, %176 : vector<16x96xf32>
    %178 = vector.extract_strided_slice %177 {offsets = [0, 0], sizes = [8, 24], strides = [1, 1]} : vector<16x96xf32> to vector<8x24xf32>
    %c0_94 = arith.constant 0 : index
    %c0_95 = arith.constant 0 : index
    %179 = vector.load %arg9[%c0_94, %c0_95] : memref<64x24xf32, #tpu.memory_space<vmem>>, vector<8x24xf32>
    tpu.vector_store %arg9[%c0_94, %c0_95], %178 {strides = array<i32>} : memref<64x24xf32, #tpu.memory_space<vmem>>, vector<8x24xf32>,
    %180 = vector.extract_strided_slice %177 {offsets = [0, 24], sizes = [8, 24], strides = [1, 1]} : vector<16x96xf32> to vector<8x24xf32>
    %c8_96 = arith.constant 8 : index
    %c0_97 = arith.constant 0 : index
    %181 = vector.load %arg9[%c8_96, %c0_97] : memref<64x24xf32, #tpu.memory_space<vmem>>, vector<8x24xf32>
    tpu.vector_store %arg9[%c8_96, %c0_97], %180 {strides = array<i32>} : memref<64x24xf32, #tpu.memory_space<vmem>>, vector<8x24xf32>,
    %182 = vector.extract_strided_slice %177 {offsets = [0, 48], sizes = [8, 24], strides = [1, 1]} : vector<16x96xf32> to vector<8x24xf32>
    %c16_98 = arith.constant 16 : index
    %c0_99 = arith.constant 0 : index
    %183 = vector.load %arg9[%c16_98, %c0_99] : memref<64x24xf32, #tpu.memory_space<vmem>>, vector<8x24xf32>
    tpu.vector_store %arg9[%c16_98, %c0_99], %182 {strides = array<i32>} : memref<64x24xf32, #tpu.memory_space<vmem>>, vector<8x24xf32>,
    %184 = vector.extract_strided_slice %177 {offsets = [0, 72], sizes = [8, 24], strides = [1, 1]} : vector<16x96xf32> to vector<8x24xf32>
    %c24_100 = arith.constant 24 : index
    %c0_101 = arith.constant 0 : index
    %185 = vector.load %arg9[%c24_100, %c0_101] : memref<64x24xf32, #tpu.memory_space<vmem>>, vector<8x24xf32>
    tpu.vector_store %arg9[%c24_100, %c0_101], %184 {strides = array<i32>} : memref<64x24xf32, #tpu.memory_space<vmem>>, vector<8x24xf32>,
    %186 = vector.extract_strided_slice %177 {offsets = [8, 0], sizes = [8, 24], strides = [1, 1]} : vector<16x96xf32> to vector<8x24xf32>
    %c32_102 = arith.constant 32 : index
    %c0_103 = arith.constant 0 : index
    %187 = vector.load %arg9[%c32_102, %c0_103] : memref<64x24xf32, #tpu.memory_space<vmem>>, vector<8x24xf32>
    tpu.vector_store %arg9[%c32_102, %c0_103], %186 {strides = array<i32>} : memref<64x24xf32, #tpu.memory_space<vmem>>, vector<8x24xf32>,
    %188 = vector.extract_strided_slice %177 {offsets = [8, 24], sizes = [8, 24], strides = [1, 1]} : vector<16x96xf32> to vector<8x24xf32>
    %c40_104 = arith.constant 40 : index
    %c0_105 = arith.constant 0 : index
    %189 = vector.load %arg9[%c40_104, %c0_105] : memref<64x24xf32, #tpu.memory_space<vmem>>, vector<8x24xf32>
    tpu.vector_store %arg9[%c40_104, %c0_105], %188 {strides = array<i32>} : memref<64x24xf32, #tpu.memory_space<vmem>>, vector<8x24xf32>,
    %190 = vector.extract_strided_slice %177 {offsets = [8, 48], sizes = [8, 24], strides = [1, 1]} : vector<16x96xf32> to vector<8x24xf32>
    %c48_106 = arith.constant 48 : index
    %c0_107 = arith.constant 0 : index
    %191 = vector.load %arg9[%c48_106, %c0_107] : memref<64x24xf32, #tpu.memory_space<vmem>>, vector<8x24xf32>
    tpu.vector_store %arg9[%c48_106, %c0_107], %190 {strides = array<i32>} : memref<64x24xf32, #tpu.memory_space<vmem>>, vector<8x24xf32>,
    %192 = vector.extract_strided_slice %177 {offsets = [8, 72], sizes = [8, 24], strides = [1, 1]} : vector<16x96xf32> to vector<8x24xf32>
    %c56_108 = arith.constant 56 : index
    %c0_109 = arith.constant 0 : index
    %193 = vector.load %arg9[%c56_108, %c0_109] : memref<64x24xf32, #tpu.memory_space<vmem>>, vector<8x24xf32>
    tpu.vector_store %arg9[%c56_108, %c0_109], %192 {strides = array<i32>} : memref<64x24xf32, #tpu.memory_space<vmem>>, vector<8x24xf32>,
    %c0_110 = arith.constant 0 : index
    %c0_111 = arith.constant 0 : index
    %194 = vector.load %arg9[%c0_110, %c0_111] : memref<64x24xf32, #tpu.memory_space<vmem>>, vector<64x8xf32>
    %c0_112 = arith.constant 0 : index
    %c8_113 = arith.constant 8 : index
    %195 = vector.load %arg9[%c0_112, %c8_113] : memref<64x24xf32, #tpu.memory_space<vmem>>, vector<64x8xf32>
    %c0_114 = arith.constant 0 : index
    %c16_115 = arith.constant 16 : index
    %196 = vector.load %arg9[%c0_114, %c16_115] : memref<64x24xf32, #tpu.memory_space<vmem>>, vector<64x8xf32>
    %197 = tpu.transpose %195, [1, 0] : vector<64x8xf32> -> vector<8x64xf32>
    %cst_116 = arith.constant dense<0.000000e+00> : vector<64x64xf32>
    %198 = tpu.matmul %194, %197, %cst_116 {dimension_numbers = #tpu.dot_dimension_numbers<[1], [0], [0], [1], [0, 0, 1, 1], [], []>} : vector<64x8xf32>, vector<8x64xf32>, vector<64x64xf32> -> vector<64x64xf32>
    %199 = arith.addf %198, %34 : vector<64x64xf32>
    %cst_117 = arith.constant dense<0xFF800000> : vector<64xf32>
    %200 = vector.multi_reduction <maximumf>, %199, %cst_117 [1] : vector<64x64xf32> to vector<64xf32>
    %201 = vector.shape_cast %200 : vector<64xf32> to vector<64x1xf32>
    %202 = vector.broadcast %201 : vector<64x1xf32> to vector<64x64xf32>
    %203 = arith.subf %199, %202 : vector<64x64xf32>
    %204 = math.exp %203 : vector<64x64xf32>
    %cst_118 = arith.constant dense<0.000000e+00> : vector<64xf32>
    %205 = vector.multi_reduction <add>, %204, %cst_118 [1] : vector<64x64xf32> to vector<64xf32>
    %206 = vector.shape_cast %205 : vector<64xf32> to vector<64x1xf32>
    %207 = tpu.reciprocal %206 {approx = true} : vector<64x1xf32> -> vector<64x1xf32>
    %208 = vector.broadcast %207 : vector<64x1xf32> to vector<64x64xf32>
    %209 = arith.mulf %204, %208 : vector<64x64xf32>
    %cst_119 = arith.constant dense<0.000000e+00> : vector<64x8xf32>
    %210 = tpu.matmul %209, %196, %cst_119 {dimension_numbers = #tpu.dot_dimension_numbers<[1], [0], [0], [1], [0, 0, 1, 1], [], []>} : vector<64x64xf32>, vector<64x8xf32>, vector<64x8xf32> -> vector<64x8xf32>
    %211 = vector.extract_strided_slice %210 {offsets = [0, 0], sizes = [8, 8], strides = [1, 1]} : vector<64x8xf32> to vector<8x8xf32>
    %c0_120 = arith.constant 0 : index
    %c0_121 = arith.constant 0 : index
    %212 = vector.load %arg10[%c0_120, %c0_121] : memref<16x32xf32, #tpu.memory_space<vmem>>, vector<8x8xf32>
    tpu.vector_store %arg10[%c0_120, %c0_121], %211 {strides = array<i32>} : memref<16x32xf32, #tpu.memory_space<vmem>>, vector<8x8xf32>,
    %213 = vector.extract_strided_slice %210 {offsets = [8, 0], sizes = [8, 8], strides = [1, 1]} : vector<64x8xf32> to vector<8x8xf32>
    %c0_122 = arith.constant 0 : index
    %c8_123 = arith.constant 8 : index
    %214 = vector.load %arg10[%c0_122, %c8_123] : memref<16x32xf32, #tpu.memory_space<vmem>>, vector<8x8xf32>
    tpu.vector_store %arg10[%c0_122, %c8_123], %213 {strides = array<i32>} : memref<16x32xf32, #tpu.memory_space<vmem>>, vector<8x8xf32>,
    %215 = vector.extract_strided_slice %210 {offsets = [16, 0], sizes = [8, 8], strides = [1, 1]} : vector<64x8xf32> to vector<8x8xf32>
    %c0_124 = arith.constant 0 : index
    %c16_125 = arith.constant 16 : index
    %216 = vector.load %arg10[%c0_124, %c16_125] : memref<16x32xf32, #tpu.memory_space<vmem>>, vector<8x8xf32>
    tpu.vector_store %arg10[%c0_124, %c16_125], %215 {strides = array<i32>} : memref<16x32xf32, #tpu.memory_space<vmem>>, vector<8x8xf32>,
    %217 = vector.extract_strided_slice %210 {offsets = [24, 0], sizes = [8, 8], strides = [1, 1]} : vector<64x8xf32> to vector<8x8xf32>
    %c0_126 = arith.constant 0 : index
    %c24_127 = arith.constant 24 : index
    %218 = vector.load %arg10[%c0_126, %c24_127] : memref<16x32xf32, #tpu.memory_space<vmem>>, vector<8x8xf32>
    tpu.vector_store %arg10[%c0_126, %c24_127], %217 {strides = array<i32>} : memref<16x32xf32, #tpu.memory_space<vmem>>, vector<8x8xf32>,
    %219 = vector.extract_strided_slice %210 {offsets = [32, 0], sizes = [8, 8], strides = [1, 1]} : vector<64x8xf32> to vector<8x8xf32>
    %c8_128 = arith.constant 8 : index
    %c0_129 = arith.constant 0 : index
    %220 = vector.load %arg10[%c8_128, %c0_129] : memref<16x32xf32, #tpu.memory_space<vmem>>, vector<8x8xf32>
    tpu.vector_store %arg10[%c8_128, %c0_129], %219 {strides = array<i32>} : memref<16x32xf32, #tpu.memory_space<vmem>>, vector<8x8xf32>,
    %221 = vector.extract_strided_slice %210 {offsets = [40, 0], sizes = [8, 8], strides = [1, 1]} : vector<64x8xf32> to vector<8x8xf32>
    %c8_130 = arith.constant 8 : index
    %c8_131 = arith.constant 8 : index
    %222 = vector.load %arg10[%c8_130, %c8_131] : memref<16x32xf32, #tpu.memory_space<vmem>>, vector<8x8xf32>
    tpu.vector_store %arg10[%c8_130, %c8_131], %221 {strides = array<i32>} : memref<16x32xf32, #tpu.memory_space<vmem>>, vector<8x8xf32>,
    %223 = vector.extract_strided_slice %210 {offsets = [48, 0], sizes = [8, 8], strides = [1, 1]} : vector<64x8xf32> to vector<8x8xf32>
    %c8_132 = arith.constant 8 : index
    %c16_133 = arith.constant 16 : index
    %224 = vector.load %arg10[%c8_132, %c16_133] : memref<16x32xf32, #tpu.memory_space<vmem>>, vector<8x8xf32>
    tpu.vector_store %arg10[%c8_132, %c16_133], %223 {strides = array<i32>} : memref<16x32xf32, #tpu.memory_space<vmem>>, vector<8x8xf32>,
    %225 = vector.extract_strided_slice %210 {offsets = [56, 0], sizes = [8, 8], strides = [1, 1]} : vector<64x8xf32> to vector<8x8xf32>
    %c8_134 = arith.constant 8 : index
    %c24_135 = arith.constant 24 : index
    %226 = vector.load %arg10[%c8_134, %c24_135] : memref<16x32xf32, #tpu.memory_space<vmem>>, vector<8x8xf32>
    tpu.vector_store %arg10[%c8_134, %c24_135], %225 {strides = array<i32>} : memref<16x32xf32, #tpu.memory_space<vmem>>, vector<8x8xf32>,
    %c0_136 = arith.constant 0 : index
    %c0_137 = arith.constant 0 : index
    %227 = vector.load %arg10[%c0_136, %c0_137] : memref<16x32xf32, #tpu.memory_space<vmem>>, vector<16x32xf32>
    %c1_138 = arith.constant 1 : index
    %c0_139 = arith.constant 0 : index
    %c128_140 = arith.constant 128 : index
    %228 = vector.load %arg3[%c1_138, %c0_139, %c128_140] : memref<2x32x224xf32, #tpu.memory_space<vmem>>, vector<1x32x32xf32>
    %229 = vector.shape_cast %228 : vector<1x32x32xf32> to vector<32x32xf32>
    %cst_141 = arith.constant dense<0.000000e+00> : vector<16x32xf32>
    %230 = tpu.matmul %227, %229, %cst_141 {dimension_numbers = #tpu.dot_dimension_numbers<[1], [0], [0], [1], [0, 0, 1, 1], [], []>} : vector<16x32xf32>, vector<32x32xf32>, vector<16x32xf32> -> vector<16x32xf32>
    %c17 = arith.constant 17 : index
    %c0_142 = arith.constant 0 : index
    %231 = vector.load %arg5[%c17, %c0_142] : memref<24x256xf32, #tpu.memory_space<vmem>>, vector<1x32xf32>
    %232 = vector.broadcast %231 : vector<1x32xf32> to vector<16x32xf32>
    %233 = arith.addf %230, %232 : vector<16x32xf32>
    %234 = arith.addf %171, %233 : vector<16x32xf32>
    %c18 = arith.constant 18 : index
    %c0_143 = arith.constant 0 : index
    %235 = vector.load %arg5[%c18, %c0_143] : memref<24x256xf32, #tpu.memory_space<vmem>>, vector<1x32xf32>
    %c19 = arith.constant 19 : index
    %c0_144 = arith.constant 0 : index
    %236 = vector.load %arg5[%c19, %c0_144] : memref<24x256xf32, #tpu.memory_space<vmem>>, vector<1x32xf32>
    %cst_145 = arith.constant dense<0.000000e+00> : vector<16xf32>
    %237 = vector.multi_reduction <add>, %234, %cst_145 [1] : vector<16x32xf32> to vector<16xf32>
    %238 = vector.shape_cast %237 : vector<16xf32> to vector<16x1xf32>
    %cst_146 = arith.constant 3.200000e+01 : f32
    %239 = vector.broadcast %cst_146 : f32 to vector<16x1xf32>
    %240 = arith.divf %238, %239 : vector<16x1xf32>
    %241 = vector.broadcast %240 : vector<16x1xf32> to vector<16x32xf32>
    %242 = arith.subf %234, %241 : vector<16x32xf32>
    %243 = arith.mulf %242, %242 : vector<16x32xf32>
    %cst_147 = arith.constant dense<0.000000e+00> : vector<16xf32>
    %244 = vector.multi_reduction <add>, %243, %cst_147 [1] : vector<16x32xf32> to vector<16xf32>
    %245 = vector.shape_cast %244 : vector<16xf32> to vector<16x1xf32>
    %cst_148 = arith.constant 3.200000e+01 : f32
    %246 = vector.broadcast %cst_148 : f32 to vector<16x1xf32>
    %247 = arith.divf %245, %246 : vector<16x1xf32>
    %248 = vector.broadcast %240 : vector<16x1xf32> to vector<16x32xf32>
    %249 = arith.subf %234, %248 : vector<16x32xf32>
    %cst_149 = arith.constant 9.99999996E-13 : f32
    %250 = vector.broadcast %cst_149 : f32 to vector<16x1xf32>
    %251 = arith.addf %247, %250 : vector<16x1xf32>
    %252 = math.rsqrt %251 : vector<16x1xf32>
    %253 = vector.broadcast %252 : vector<16x1xf32> to vector<16x32xf32>
    %254 = arith.mulf %249, %253 : vector<16x32xf32>
    %255 = vector.broadcast %235 : vector<1x32xf32> to vector<16x32xf32>
    %256 = arith.mulf %254, %255 : vector<16x32xf32>
    %257 = vector.broadcast %236 : vector<1x32xf32> to vector<16x32xf32>
    %258 = arith.addf %256, %257 : vector<16x32xf32>
    %c1_150 = arith.constant 1 : index
    %c0_151 = arith.constant 0 : index
    %c160_152 = arith.constant 160 : index
    %259 = vector.load %arg3[%c1_150, %c0_151, %c160_152] : memref<2x32x224xf32, #tpu.memory_space<vmem>>, vector<1x32x64xf32>
    %260 = vector.shape_cast %259 : vector<1x32x64xf32> to vector<32x64xf32>
    %c1_153 = arith.constant 1 : index
    %c0_154 = arith.constant 0 : index
    %c0_155 = arith.constant 0 : index
    %261 = vector.load %arg4[%c1_153, %c0_154, %c0_155] : memref<2x64x32xf32, #tpu.memory_space<vmem>>, vector<1x64x32xf32>
    %262 = vector.shape_cast %261 : vector<1x64x32xf32> to vector<64x32xf32>
    %cst_156 = arith.constant dense<0.000000e+00> : vector<16x64xf32>
    %263 = tpu.matmul %258, %260, %cst_156 {dimension_numbers = #tpu.dot_dimension_numbers<[1], [0], [0], [1], [0, 0, 1, 1], [], []>} : vector<16x32xf32>, vector<32x64xf32>, vector<16x64xf32> -> vector<16x64xf32>
    %c20 = arith.constant 20 : index
    %c0_157 = arith.constant 0 : index
    %264 = vector.load %arg5[%c20, %c0_157] : memref<24x256xf32, #tpu.memory_space<vmem>>, vector<1x64xf32>
    %265 = vector.broadcast %264 : vector<1x64xf32> to vector<16x64xf32>
    %266 = arith.addf %263, %265 : vector<16x64xf32>
    %cst_158 = arith.constant 5.000000e-01 : f32
    %267 = vector.broadcast %cst_158 : f32 to vector<16x64xf32>
    %268 = arith.mulf %267, %266 : vector<16x64xf32>
    %cst_159 = arith.constant 4.471500e-02 : f32
    %269 = vector.broadcast %cst_159 : f32 to vector<16x64xf32>
    %270 = arith.mulf %269, %266 : vector<16x64xf32>
    %271 = arith.mulf %270, %266 : vector<16x64xf32>
    %272 = arith.mulf %271, %266 : vector<16x64xf32>
    %273 = arith.addf %266, %272 : vector<16x64xf32>
    %cst_160 = arith.constant 0.797884583 : f32
    %274 = vector.broadcast %cst_160 : f32 to vector<16x64xf32>
    %275 = arith.mulf %274, %273 : vector<16x64xf32>
    %276 = math.tanh %275 : vector<16x64xf32>
    %cst_161 = arith.constant 1.000000e+00 : f32
    %277 = vector.broadcast %cst_161 : f32 to vector<16x64xf32>
    %278 = arith.addf %277, %276 : vector<16x64xf32>
    %279 = arith.mulf %268, %278 : vector<16x64xf32>
    %cst_162 = arith.constant dense<0.000000e+00> : vector<16x32xf32>
    %280 = tpu.matmul %279, %262, %cst_162 {dimension_numbers = #tpu.dot_dimension_numbers<[1], [0], [0], [1], [0, 0, 1, 1], [], []>} : vector<16x64xf32>, vector<64x32xf32>, vector<16x32xf32> -> vector<16x32xf32>
    %c21 = arith.constant 21 : index
    %c0_163 = arith.constant 0 : index
    %281 = vector.load %arg5[%c21, %c0_163] : memref<24x256xf32, #tpu.memory_space<vmem>>, vector<1x32xf32>
    %282 = vector.broadcast %281 : vector<1x32xf32> to vector<16x32xf32>
    %283 = arith.addf %280, %282 : vector<16x32xf32>
    %284 = arith.addf %258, %283 : vector<16x32xf32>
    %c22 = arith.constant 22 : index
    %c0_164 = arith.constant 0 : index
    %285 = vector.load %arg5[%c22, %c0_164] : memref<24x256xf32, #tpu.memory_space<vmem>>, vector<1x32xf32>
    %c23 = arith.constant 23 : index
    %c0_165 = arith.constant 0 : index
    %286 = vector.load %arg5[%c23, %c0_165] : memref<24x256xf32, #tpu.memory_space<vmem>>, vector<1x32xf32>
    %cst_166 = arith.constant dense<0.000000e+00> : vector<16xf32>
    %287 = vector.multi_reduction <add>, %284, %cst_166 [1] : vector<16x32xf32> to vector<16xf32>
    %288 = vector.shape_cast %287 : vector<16xf32> to vector<16x1xf32>
    %cst_167 = arith.constant 3.200000e+01 : f32
    %289 = vector.broadcast %cst_167 : f32 to vector<16x1xf32>
    %290 = arith.divf %288, %289 : vector<16x1xf32>
    %291 = vector.broadcast %290 : vector<16x1xf32> to vector<16x32xf32>
    %292 = arith.subf %284, %291 : vector<16x32xf32>
    %293 = arith.mulf %292, %292 : vector<16x32xf32>
    %cst_168 = arith.constant dense<0.000000e+00> : vector<16xf32>
    %294 = vector.multi_reduction <add>, %293, %cst_168 [1] : vector<16x32xf32> to vector<16xf32>
    %295 = vector.shape_cast %294 : vector<16xf32> to vector<16x1xf32>
    %cst_169 = arith.constant 3.200000e+01 : f32
    %296 = vector.broadcast %cst_169 : f32 to vector<16x1xf32>
    %297 = arith.divf %295, %296 : vector<16x1xf32>
    %298 = vector.broadcast %290 : vector<16x1xf32> to vector<16x32xf32>
    %299 = arith.subf %284, %298 : vector<16x32xf32>
    %cst_170 = arith.constant 9.99999996E-13 : f32
    %300 = vector.broadcast %cst_170 : f32 to vector<16x1xf32>
    %301 = arith.addf %297, %300 : vector<16x1xf32>
    %302 = math.rsqrt %301 : vector<16x1xf32>
    %303 = vector.broadcast %302 : vector<16x1xf32> to vector<16x32xf32>
    %304 = arith.mulf %299, %303 : vector<16x32xf32>
    %305 = vector.broadcast %285 : vector<1x32xf32> to vector<16x32xf32>
    %306 = arith.mulf %304, %305 : vector<16x32xf32>
    %307 = vector.broadcast %286 : vector<1x32xf32> to vector<16x32xf32>
    %308 = arith.addf %306, %307 : vector<16x32xf32>
    %309 = vector.extract_strided_slice %308 {offsets = [0, 0], sizes = [1, 32], strides = [1, 1]} : vector<16x32xf32> to vector<1x32xf32>
    %310 = vector.extract_strided_slice %308 {offsets = [8, 0], sizes = [1, 32], strides = [1, 1]} : vector<16x32xf32> to vector<1x32xf32>
    %311 = tpu.concatenate %309, %310 in 0 : vector<1x32xf32>, vector<1x32xf32> -> vector<2x32xf32>
    %c0_171 = arith.constant 0 : index
    %c0_172 = arith.constant 0 : index
    %312 = vector.load %arg6[%c0_171, %c0_172] : memref<32x384xf32, #tpu.memory_space<vmem>>, vector<32x32xf32>
    %cst_173 = arith.constant dense<0.000000e+00> : vector<2x32xf32>
    %313 = tpu.matmul %311, %312, %cst_173 {dimension_numbers = #tpu.dot_dimension_numbers<[1], [0], [0], [1], [0, 0, 1, 1], [], []>} : vector<2x32xf32>, vector<32x32xf32>, vector<2x32xf32> -> vector<2x32xf32>
    %c2 = arith.constant 2 : index
    %c0_174 = arith.constant 0 : index
    %314 = vector.load %arg5[%c2, %c0_174] : memref<24x256xf32, #tpu.memory_space<vmem>>, vector<1x32xf32>
    %315 = vector.broadcast %314 : vector<1x32xf32> to vector<2x32xf32>
    %316 = arith.addf %313, %315 : vector<2x32xf32>
    %317 = math.tanh %316 : vector<2x32xf32>
    %c3 = arith.constant 3 : index
    %c0_175 = arith.constant 0 : index
    %318 = vector.load %arg5[%c3, %c0_175] : memref<24x256xf32, #tpu.memory_space<vmem>>, vector<1x32xf32>
    %c4 = arith.constant 4 : index
    %c0_176 = arith.constant 0 : index
    %319 = vector.load %arg5[%c4, %c0_176] : memref<24x256xf32, #tpu.memory_space<vmem>>, vector<1x32xf32>
    %cst_177 = arith.constant dense<0.000000e+00> : vector<2xf32>
    %320 = vector.multi_reduction <add>, %317, %cst_177 [1] : vector<2x32xf32> to vector<2xf32>
    %321 = vector.shape_cast %320 : vector<2xf32> to vector<2x1xf32>
    %cst_178 = arith.constant 3.200000e+01 : f32
    %322 = vector.broadcast %cst_178 : f32 to vector<2x1xf32>
    %323 = arith.divf %321, %322 : vector<2x1xf32>
    %324 = vector.broadcast %323 : vector<2x1xf32> to vector<2x32xf32>
    %325 = arith.subf %317, %324 : vector<2x32xf32>
    %326 = arith.mulf %325, %325 : vector<2x32xf32>
    %cst_179 = arith.constant dense<0.000000e+00> : vector<2xf32>
    %327 = vector.multi_reduction <add>, %326, %cst_179 [1] : vector<2x32xf32> to vector<2xf32>
    %328 = vector.shape_cast %327 : vector<2xf32> to vector<2x1xf32>
    %cst_180 = arith.constant 3.200000e+01 : f32
    %329 = vector.broadcast %cst_180 : f32 to vector<2x1xf32>
    %330 = arith.divf %328, %329 : vector<2x1xf32>
    %331 = vector.broadcast %323 : vector<2x1xf32> to vector<2x32xf32>
    %332 = arith.subf %317, %331 : vector<2x32xf32>
    %cst_181 = arith.constant 9.99999974E-6 : f32
    %333 = vector.broadcast %cst_181 : f32 to vector<2x1xf32>
    %334 = arith.addf %330, %333 : vector<2x1xf32>
    %335 = math.rsqrt %334 : vector<2x1xf32>
    %336 = vector.broadcast %335 : vector<2x1xf32> to vector<2x32xf32>
    %337 = arith.mulf %332, %336 : vector<2x32xf32>
    %338 = vector.broadcast %318 : vector<1x32xf32> to vector<2x32xf32>
    %339 = arith.mulf %337, %338 : vector<2x32xf32>
    %340 = vector.broadcast %319 : vector<1x32xf32> to vector<2x32xf32>
    %341 = arith.addf %339, %340 : vector<2x32xf32>
    %c0_182 = arith.constant 0 : index
    %c128_183 = arith.constant 128 : index
    %342 = vector.load %arg6[%c0_182, %c128_183] : memref<32x384xf32, #tpu.memory_space<vmem>>, vector<32x256xf32>
    %cst_184 = arith.constant dense<0.000000e+00> : vector<2x256xf32>
    %343 = tpu.matmul %341, %342, %cst_184 {dimension_numbers = #tpu.dot_dimension_numbers<[1], [0], [0], [1], [0, 0, 1, 1], [], []>} : vector<2x32xf32>, vector<32x256xf32>, vector<2x256xf32> -> vector<2x256xf32>
    %c5 = arith.constant 5 : index
    %c0_185 = arith.constant 0 : index
    %344 = vector.load %arg5[%c5, %c0_185] : memref<24x256xf32, #tpu.memory_space<vmem>>, vector<1x256xf32>
    %345 = vector.broadcast %344 : vector<1x256xf32> to vector<2x256xf32>
    %346 = arith.addf %343, %345 : vector<2x256xf32>
    %cst_186 = arith.constant 0.000000e+00 : f32
    %347 = vector.broadcast %cst_186 : f32 to vector<2x256xf32>
    %348 = arith.maximumf %346, %347 : vector<2x256xf32>
    %c0_187 = arith.constant 0 : index
    %c0_188 = arith.constant 0 : index
    %349 = vector.load %arg7[%c0_187, %c0_188] : memref<384x128xf32, #tpu.memory_space<vmem>>, vector<256x128xf32>
    %cst_189 = arith.constant dense<0.000000e+00> : vector<2x128xf32>
    %350 = tpu.matmul %348, %349, %cst_189 {dimension_numbers = #tpu.dot_dimension_numbers<[1], [0], [0], [1], [0, 0, 1, 1], [], []>} : vector<2x256xf32>, vector<256x128xf32>, vector<2x128xf32> -> vector<2x128xf32>
    %c6 = arith.constant 6 : index
    %c0_190 = arith.constant 0 : index
    %351 = vector.load %arg5[%c6, %c0_190] : memref<24x256xf32, #tpu.memory_space<vmem>>, vector<1x128xf32>
    %352 = vector.broadcast %351 : vector<1x128xf32> to vector<2x128xf32>
    %353 = arith.addf %350, %352 : vector<2x128xf32>
    %cst_191 = arith.constant 0.000000e+00 : f32
    %354 = vector.broadcast %cst_191 : f32 to vector<2x128xf32>
    %355 = arith.maximumf %353, %354 : vector<2x128xf32>
    %c256 = arith.constant 256 : index
    %c0_192 = arith.constant 0 : index
    %356 = vector.load %arg7[%c256, %c0_192] : memref<384x128xf32, #tpu.memory_space<vmem>>, vector<128x128xf32>
    %cst_193 = arith.constant dense<0.000000e+00> : vector<2x128xf32>
    %357 = tpu.matmul %355, %356, %cst_193 {dimension_numbers = #tpu.dot_dimension_numbers<[1], [0], [0], [1], [0, 0, 1, 1], [], []>} : vector<2x128xf32>, vector<128x128xf32>, vector<2x128xf32> -> vector<2x128xf32>
    %c7 = arith.constant 7 : index
    %c0_194 = arith.constant 0 : index
    %358 = vector.load %arg5[%c7, %c0_194] : memref<24x256xf32, #tpu.memory_space<vmem>>, vector<1x128xf32>
    %359 = vector.broadcast %358 : vector<1x128xf32> to vector<2x128xf32>
    %360 = arith.addf %357, %359 : vector<2x128xf32>
    %c0_195 = arith.constant 0 : index
    %c0_196 = arith.constant 0 : index
    %361 = vector.load %arg8[%c0_195, %c0_196] : memref<2x128xf32, #tpu.memory_space<vmem>>, vector<2x128xf32>
    tpu.vector_store %arg8[%c0_195, %c0_196], %360 {strides = array<i32>} : memref<2x128xf32, #tpu.memory_space<vmem>>, vector<2x128xf32>,
    return
  }
}

</mosaic_0001>

<llo_original>
// kernel: text_only_classifier.1
$region0: #{text_only_classifier.1}
  #allocation0 [shape = 'u32[]', space=smem, size = 0x4, offset = 0x4, fixed_abs, tag = 'smem constant byte address 0x4 - core index']
  #allocation1 [shape = 'u32[144,128]{1,0:T(1,128)}', space=vmem, size = 0x12000, scoped, tag = 'internal scratch']
  #allocation2 [shape = 'f32[64,24]{1,0:T(8,128)}', space=vmem, size = 0x8000, scoped, tag = 'scratch operand']
  #allocation3 [shape = 'f32[16,32]{1,0:T(8,128)}', space=vmem, size = 0x2000, scoped, tag = 'scratch operand']
  %s0 = inlined_call_operand.vmem [shape: s32[16,1], index: 0, kind: input, shape index: {}]
  %s1 = inlined_call_operand.vmem [shape: f32[64,64], index: 1, kind: input, shape index: {}]
  %s2 = inlined_call_operand.vmem [shape: f32[80,32], index: 2, kind: input, shape index: {}]
  %s3 = inlined_call_operand.vmem [shape: f32[2,32,224], index: 3, kind: input, shape index: {}]
  %s4 = inlined_call_operand.vmem [shape: f32[2,64,32], index: 4, kind: input, shape index: {}]
  %s5 = inlined_call_operand.vmem [shape: f32[24,256], index: 5, kind: input, shape index: {}]
  %s6 = inlined_call_operand.vmem [shape: f32[32,384], index: 6, kind: input, shape index: {}]
  %s7 = inlined_call_operand.vmem [shape: f32[384,128], index: 7, kind: input, shape index: {}]
  %s8 = inlined_call_operand.hbm [shape: f32[2,128], index: 8, kind: output, shape index: {}]
  %s9 = sld [smem:[#allocation0]]
  $region42: #{text_only_classifier.1} parent=0
    _
  %s11 = ssub.s32 1, %s9
  %s12 = scalar_select 0, %s11, %s9
  $region1: #{text_only_classifier.1} parent=0
    #allocation4 [shape = 'u8[1024]{0}', space=vmem, size = 0x400, scoped, tag = 'output window, operand 0, single buffered']
    #allocation5 [shape = 's32[1]{0}', space=sflag, size = 0x4, scoped, tag = 'scoped memory for text_only_classifier.1']
    %13 = vsyncpa [#allocation5], 0
    // Predicated region
    $region2: #{text_only_classifier.1} parent=1 // pred_check
      _
    $region3: #{text_only_classifier.1} parent=1 // pred_check_branch
      %15 = sbr.rel (0) target = $region5
    $region4: #{text_only_classifier.1} parent=1 // pred_region
      _
    $region5: #{text_only_classifier.1} parent=1 // pred_fallthru
      _
    // Predicated region
    $region6: #{text_only_classifier.1} parent=1 // pred_check
      _
    $region7: #{text_only_classifier.1} parent=1 // pred_check_branch
      %17 = sbr.rel (0) target = $region9
    $region8: #{text_only_classifier.1} parent=1 // pred_region
      _
    $region9: #{text_only_classifier.1} parent=1 // pred_fallthru
      _
    // Predicated region
    $region10: #{text_only_classifier.1} parent=1 // pred_check
      _
    $region11: #{text_only_classifier.1} parent=1 // pred_check_branch
      %19 = sbr.rel (0) target = $region13
    $region12: #{text_only_classifier.1} parent=1 // pred_region
      _
    $region13: #{text_only_classifier.1} parent=1 // pred_fallthru
      _
    // Predicated region
    $region14: #{text_only_classifier.1} parent=1 // pred_check
      _
    $region15: #{text_only_classifier.1} parent=1 // pred_check_branch
      %21 = sbr.rel (0) target = $region17
    $region16: #{text_only_classifier.1} parent=1 // pred_region
      _
    $region17: #{text_only_classifier.1} parent=1 // pred_fallthru
      _
    // Predicated region
    $region18: #{text_only_classifier.1} parent=1 // pred_check
      _
    $region19: #{text_only_classifier.1} parent=1 // pred_check_branch
      %23 = sbr.rel (0) target = $region21
    $region20: #{text_only_classifier.1} parent=1 // pred_region
      _
    $region21: #{text_only_classifier.1} parent=1 // pred_fallthru
      _
    // Predicated region
    $region22: #{text_only_classifier.1} parent=1 // pred_check
      _
    $region23: #{text_only_classifier.1} parent=1 // pred_check_branch
      %25 = sbr.rel (0) target = $region25
    $region24: #{text_only_classifier.1} parent=1 // pred_region
      _
    $region25: #{text_only_classifier.1} parent=1 // pred_fallthru
      _
    // Predicated region
    $region26: #{text_only_classifier.1} parent=1 // pred_check
      _
    $region27: #{text_only_classifier.1} parent=1 // pred_check_branch
      %27 = sbr.rel (0) target = $region29
    $region28: #{text_only_classifier.1} parent=1 // pred_region
      _
    $region29: #{text_only_classifier.1} parent=1 // pred_fallthru
      _
    // Predicated region
    $region30: #{text_only_classifier.1} parent=1 // pred_check
      _
    $region31: #{text_only_classifier.1} parent=1 // pred_check_branch
      %29 = sbr.rel (0) target = $region33
    $region32: #{text_only_classifier.1} parent=1 // pred_region
      _
    $region33: #{text_only_classifier.1} parent=1 // pred_fallthru
      _
    %v30 = vld [vmem:[%s0] sm:$0xff]
    %v31 = vld [vmem:[%s0 + $0x8] sm:$0xff]
    %v32 = vlaneseq
    %v33 = vand.u32 %v32, 127
    %34 = vset.pattern.permute.xlu0 0
    %35 = vperm.xlu0 %34, %v30
    %v36 = vpop.permute.xlu0 %35
    %37 = vset.pattern.permute.xlu0 0
    %38 = vperm.xlu0 %37, %v31
    %v39 = vpop.permute.xlu0 %38
    %vm40 = vcmp.eq.s32.totalorder %v33, %v36
    %vm41 = vcmp.eq.s32.totalorder %v33, %v39
    %v42 = vsel %vm40, 1, 0
    %v43 = vsel %vm41, 1, 0
    %v44 = vcvt.s32.f32 %v42
    %v45 = vcvt.s32.f32 %v43
    %v46 = vld [vmem:[%s2] sm:$0xff]
    %v47 = vld [vmem:[%s2 + $0x8] sm:$0xff]
    %v48 = vld [vmem:[%s2 + $0x10] sm:$0xff]
    %v49 = vld [vmem:[%s2 + $0x18] sm:$0xff]
    %v50 = vld [vmem:[%s2 + $0x20] sm:$0xff]
    %v51 = vld [vmem:[%s2 + $0x28] sm:$0xff]
    %v52 = vld [vmem:[%s2 + $0x30] sm:$0xff]
    %v53 = vld [vmem:[%s2 + $0x38] sm:$0xff]
    %v54 = vld [vmem:[%s2 + $0x40] sm:$0xff]
    %v55 = vld [vmem:[%s2 + $0x48] sm:$0xff]
    %vm56 = vcmask 523264
    %v58 = vsel %vm56, %v44, 0
    %v61 = vsel %vm56, %v45, 0
    %63 = vmatprep.subr.mxu0 0.0
    %64 = vmatpush1.msra.mxu0 %v46
    %65 = vmatprep.subr.mxu0 0.0
    %66 = vmatpush1.msra.mxu0 %v47
    %67 = vmatprep.subr.mxu0 0.0
    %68 = vmatpush1.msra.mxu0 %v48
    %69 = vmatprep.subr.mxu0 0.0
    %70 = vmatpush1.msra.mxu0 %v49
    %71 = vmatprep.subr.mxu0 0.0
    %72 = vmatpush1.msra.mxu0 %v50
    %73 = vmatprep.subr.mxu0 0.0
    %74 = vmatpush1.msra.mxu0 %v51
    %75 = vmatprep.subr.mxu0 0.0
    %76 = vmatpush1.msra.mxu0 %v52
    %77 = vmatprep.subr.mxu0 0.0
    %78 = vmatpush1.msra.mxu0 %v53
    %79 = vmatprep.subr.mxu0 0.0
    %80 = vmatpush1.msra.mxu0 0.0
    %81 = vmatprep.subr.mxu0 0.0
    %82 = vmatpush1.msra.mxu0 0.0
    %83 = vmatprep.subr.mxu0 0.0
    %84 = vmatpush1.msra.mxu0 0.0
    %85 = vmatprep.subr.mxu0 0.0
    %86 = vmatpush1.msra.mxu0 0.0
    %87 = vmatprep.subr.mxu0 0.0
    %88 = vmatpush1.msra.mxu0 0.0
    %89 = vmatprep.subr.mxu0 0.0
    %90 = vmatpush1.msra.mxu0 0.0
    %91 = vmatprep.subr.mxu0 0.0
    %92 = vmatpush1.msra.mxu0 0.0
    %93 = vmatprep.subr.mxu0 0.0
    %94 = vmatpush1.msra.mxu0 0.0
    %95 = vmatprep.subr.mxu0 0.0
    %96 = vmatpush1.msra.mxu0 0.0
    %97 = vmatprep.subr.mxu0 0.0
    %98 = vmatpush1.msra.mxu0 0.0
    %99 = vmatprep.subr.mxu0 0.0
    %100 = vmatpush1.msra.mxu0 0.0
    %101 = vmatprep.subr.mxu0 0.0
    %102 = vmatpush1.msra.mxu0 0.0
    %103 = vmatprep.subr.mxu0 0.0
    %104 = vmatpush1.msra.mxu0 0.0
    %105 = vmatprep.subr.mxu0 0.0
    %106 = vmatpush1.msra.mxu0 0.0
    %107 = vmatprep.subr.mxu0 0.0
    %108 = vmatpush1.msra.mxu0 0.0
    %109 = vmatprep.subr.mxu0 0.0
    %110 = vmatpush1.msra.mxu0 0.0
    %111 = vmatprep.subr.mxu0 0.0
    %112 = vmatpush1.msra.mxu0 0.0
    %113 = vmatprep.subr.mxu0 0.0
    %114 = vmatpush1.msra.mxu0 0.0
    %115 = vmatprep.subr.mxu0 0.0
    %116 = vmatpush1.msra.mxu0 0.0
    %117 = vmatprep.subr.mxu0 0.0
    %118 = vmatpush1.msra.mxu0 0.0
    %119 = vmatprep.subr.mxu0 0.0
    %120 = vmatpush1.msra.mxu0 0.0
    %121 = vmatprep.subr.mxu0 0.0
    %122 = vmatpush1.msra.mxu0 0.0
    %123 = vmatprep.subr.mxu0 0.0
    %124 = vmatpush1.msra.mxu0 0.0
    %125 = vmatprep.subr.mxu0 0.0
    %126 = vmatpush1.msra.mxu0 0.0
    %127 = vmatprep.mubr.f32.mxu0 0.0
    %128 = vmatmul.mubr.f32.gmra.mrb[0].mxu0 %v58
    %v129 = vpop.f32.mrb[0].mxu0
    %v130 = vadd.f32 %v54, %v129
    %v131 = vpop.f32.mrb[0].mxu0
    %132 = vmatprep.mubr.f32.mxu0 0.0
    %133 = vmatmul.mubr.f32.gmra.mrb[0].mxu0 %v61
    %v134 = vpop.f32.mrb[0].mxu0
    %v135 = vadd.f32 %v55, %v134
    %v136 = vpop.f32.mrb[0].mxu0
    %137 = vdwg.mxu0
    %v138 = vld [vmem:[%s5] ss:$0 sm:$0xff]
    %v139 = vld [vmem:[%s5 + $0x1] ss:$0 sm:$0xff]
    %vm140 = vcmask 261120
    %v141 = vsel %vm140, %v130, 0.0
    %142 = vadd.xlane.f32.xlu0 %v141
    %v143 = vpop.xlane.xlu0 %142
    %v144 = vsel %vm140, %v135, 0.0
    %145 = vadd.xlane.f32.xlu0 %v144
    %v146 = vpop.xlane.xlu0 %145
    %v147 = vrcp.pop 32.0
    %v148 = vmul.f32 %v143, %v147
    %v149 = vmul.f32 %v146, %v147
    %v150 = vsub.f32 %v130, %v148
    %v151 = vsub.f32 %v135, %v149
    %v152 = vmul.f32 %v150, %v150
    %v153 = vmul.f32 %v151, %v151
    %v154 = vsel %vm140, %v152, 0.0
    %155 = vadd.xlane.f32.xlu0 %v154
    %v156 = vpop.xlane.xlu0 %155
    %v157 = vsel %vm140, %v153, 0.0
    %158 = vadd.xlane.f32.xlu0 %v157
    %v159 = vpop.xlane.xlu0 %158
    %v160 = vmul.f32 %v156, %v147
    %v161 = vmul.f32 %v159, %v147
    %v162 = vadd.f32 %v160, 1e-12
    %v163 = vadd.f32 %v161, 1e-12
    %v164 = vrsqrt.pop %v162
    %v165 = vrsqrt.pop %v163
    %v166 = vmul.f32 %v150, %v164
    %v167 = vmul.f32 %v151, %v165
    %v168 = vmul.f32 %v166, %v138
    %v169 = vmul.f32 %v167, %v138
    %v170 = vadd.f32 %v168, %v139
    %v171 = vadd.f32 %v169, %v139
    %v172 = vld [vmem:[%s1] sm:$0xff]
    %v173 = vld [vmem:[%s1 + $0x8] sm:$0xff]
    %v174 = vld [vmem:[%s1 + $0x10] sm:$0xff]
    %v175 = vld [vmem:[%s1 + $0x18] sm:$0xff]
    %v176 = vld [vmem:[%s1 + $0x20] sm:$0xff]
    %v177 = vld [vmem:[%s1 + $0x28] sm:$0xff]
    %v178 = vld [vmem:[%s1 + $0x30] sm:$0xff]
    %v179 = vld [vmem:[%s1 + $0x38] sm:$0xff]
    %v180 = vld [vmem:[%s3] sm:$0xff]
    %v181 = vld [vmem:[%s3 + $0x10] sm:$0xff]
    %v182 = vld [vmem:[%s3 + $0x20] sm:$0xff]
    %v183 = vld [vmem:[%s3 + $0x30] sm:$0xff]
    %v184 = vld [vmem:[%s5 + $0x10] ss:$0 sm:$0xff]
    %v186 = vsel %vm140, %v170, 0
    %v189 = vsel %vm140, %v171, 0
    %191 = vmatprep.subr.mxu0 0.0
    %192 = vmatpush1.msra.mxu0 %v180
    %193 = vmatprep.subr.mxu0 0.0
    %194 = vmatpush1.msra.mxu0 %v181
    %195 = vmatprep.subr.mxu0 0.0
    %196 = vmatpush1.msra.mxu0 %v182
    %197 = vmatprep.subr.mxu0 0.0
    %198 = vmatpush1.msra.mxu0 %v183
    %199 = vmatprep.subr.mxu0 0.0
    %200 = vmatpush1.msra.mxu0 0.0
    %201 = vmatprep.subr.mxu0 0.0
    %202 = vmatpush1.msra.mxu0 0.0
    %203 = vmatprep.subr.mxu0 0.0
    %204 = vmatpush1.msra.mxu0 0.0
    %205 = vmatprep.subr.mxu0 0.0
    %206 = vmatpush1.msra.mxu0 0.0
    %207 = vmatprep.subr.mxu0 0.0
    %208 = vmatpush1.msra.mxu0 0.0
    %209 = vmatprep.subr.mxu0 0.0
    %210 = vmatpush1.msra.mxu0 0.0
    %211 = vmatprep.subr.mxu0 0.0
    %212 = vmatpush1.msra.mxu0 0.0
    %213 = vmatprep.subr.mxu0 0.0
    %214 = vmatpush1.msra.mxu0 0.0
    %215 = vmatprep.subr.mxu0 0.0
    %216 = vmatpush1.msra.mxu0 0.0
    %217 = vmatprep.subr.mxu0 0.0
    %218 = vmatpush1.msra.mxu0 0.0
    %219 = vmatprep.subr.mxu0 0.0
    %220 = vmatpush1.msra.mxu0 0.0
    %221 = vmatprep.subr.mxu0 0.0
    %222 = vmatpush1.msra.mxu0 0.0
    %223 = vmatprep.subr.mxu0 0.0
    %224 = vmatpush1.msra.mxu0 0.0
    %225 = vmatprep.subr.mxu0 0.0
    %226 = vmatpush1.msra.mxu0 0.0
    %227 = vmatprep.subr.mxu0 0.0
    %228 = vmatpush1.msra.mxu0 0.0
    %229 = vmatprep.subr.mxu0 0.0
    %230 = vmatpush1.msra.mxu0 0.0
    %231 = vmatprep.subr.mxu0 0.0
    %232 = vmatpush1.msra.mxu0 0.0
    %233 = vmatprep.subr.mxu0 0.0
    %234 = vmatpush1.msra.mxu0 0.0
    %235 = vmatprep.subr.mxu0 0.0
    %236 = vmatpush1.msra.mxu0 0.0
    %237 = vmatprep.subr.mxu0 0.0
    %238 = vmatpush1.msra.mxu0 0.0
    %239 = vmatprep.subr.mxu0 0.0
    %240 = vmatpush1.msra.mxu0 0.0
    %241 = vmatprep.subr.mxu0 0.0
    %242 = vmatpush1.msra.mxu0 0.0
    %243 = vmatprep.subr.mxu0 0.0
    %244 = vmatpush1.msra.mxu0 0.0
    %245 = vmatprep.subr.mxu0 0.0
    %246 = vmatpush1.msra.mxu0 0.0
    %247 = vmatprep.subr.mxu0 0.0
    %248 = vmatpush1.msra.mxu0 0.0
    %249 = vmatprep.subr.mxu0 0.0
    %250 = vmatpush1.msra.mxu0 0.0
    %251 = vmatprep.subr.mxu0 0.0
    %252 = vmatpush1.msra.mxu0 0.0
    %253 = vmatprep.subr.mxu0 0.0
    %254 = vmatpush1.msra.mxu0 0.0
    %255 = vmatprep.mubr.f32.mxu0 0.0
    %256 = vmatmul.mubr.f32.gmra.mrb[0].mxu0 %v186
    %v257 = vpop.f32.mrb[0].mxu0
    %v258 = vadd.f32 %v184, %v257
    %v259 = vpop.f32.mrb[0].mxu0
    %260 = vmatprep.mubr.f32.mxu0 0.0
    %261 = vmatmul.mubr.f32.gmra.mrb[0].mxu0 %v189
    %v262 = vpop.f32.mrb[0].mxu0
    %v263 = vadd.f32 %v184, %v262
    %v264 = vpop.f32.mrb[0].mxu0
    %265 = vdwg.mxu0
    %vm266 = vcmask 195584
    %267 = vst.msk [vmem:[#allocation2] sm:$0xff] %vm266, %v258
    %269 = vrot.lane.b32.xlu0 %v258, 104
    %v270 = vpop.permute.xlu0 %269
    %272 = vst.msk [vmem:[#allocation2 + $0x8] sm:$0xff] %vm266, %v270
    %273 = vrot.lane.b32.xlu0 %v258, 80
    %v274 = vpop.permute.xlu0 %273
    %276 = vst.msk [vmem:[#allocation2 + $0x10] sm:$0xff] %vm266, %v274
    %277 = vrot.lane.b32.xlu0 %v258, 56
    %v278 = vpop.permute.xlu0 %277
    %280 = vst.msk [vmem:[#allocation2 + $0x18] sm:$0xff] %vm266, %v278
    %281 = vst.msk [vmem:[#allocation2 + $0x20] sm:$0xff] %vm266, %v263
    %283 = vrot.lane.b32.xlu0 %v263, 104
    %v284 = vpop.permute.xlu0 %283
    %286 = vst.msk [vmem:[#allocation2 + $0x28] sm:$0xff] %vm266, %v284
    %287 = vrot.lane.b32.xlu0 %v263, 80
    %v288 = vpop.permute.xlu0 %287
    %290 = vst.msk [vmem:[#allocation2 + $0x30] sm:$0xff] %vm266, %v288
    %291 = vrot.lane.b32.xlu0 %v263, 56
    %v292 = vpop.permute.xlu0 %291
    %294 = vst.msk [vmem:[#allocation2 + $0x38] sm:$0xff] %vm266, %v292
    %v295 = vld [vmem:[#allocation2] sm:$0xff]
    %v296 = vld [vmem:[#allocation2 + $0x8] sm:$0xff]
    %v297 = vld [vmem:[#allocation2 + $0x10] sm:$0xff]
    %v298 = vld [vmem:[#allocation2 + $0x18] sm:$0xff]
    %v299 = vld [vmem:[#allocation2 + $0x20] sm:$0xff]
    %v300 = vld [vmem:[#allocation2 + $0x28] sm:$0xff]
    %v301 = vld [vmem:[#allocation2 + $0x30] sm:$0xff]
    %v302 = vld [vmem:[#allocation2 + $0x38] sm:$0xff]
    %311 = vrot.lane.b32.xlu0 %v295, 120
    %v312 = vpop.permute.xlu0 %311
    %313 = vrot.lane.b32.xlu0 %v296, 120
    %v314 = vpop.permute.xlu0 %313
    %315 = vrot.lane.b32.xlu0 %v297, 120
    %v316 = vpop.permute.xlu0 %315
    %317 = vrot.lane.b32.xlu0 %v298, 120
    %v318 = vpop.permute.xlu0 %317
    %319 = vrot.lane.b32.xlu0 %v299, 120
    %v320 = vpop.permute.xlu0 %319
    %321 = vrot.lane.b32.xlu0 %v300, 120
    %v322 = vpop.permute.xlu0 %321
    %323 = vrot.lane.b32.xlu0 %v301, 120
    %v324 = vpop.permute.xlu0 %323
    %325 = vrot.lane.b32.xlu0 %v302, 120
    %v326 = vpop.permute.xlu0 %325
    %vm327 = vcmask 64512
    %v328 = vsel %vm327, %v295, 0
    %v330 = vsel %vm327, %v296, 0
    %v332 = vsel %vm327, %v297, 0
    %v334 = vsel %vm327, %v298, 0
    %v336 = vsel %vm327, %v299, 0
    %v338 = vsel %vm327, %v300, 0
    %v340 = vsel %vm327, %v301, 0
    %v342 = vsel %vm327, %v302, 0
    %v344 = vsel %vm327, %v312, 0
    %v346 = vsel %vm327, %v314, 0
    %v348 = vsel %vm327, %v316, 0
    %v350 = vsel %vm327, %v318, 0
    %v352 = vsel %vm327, %v320, 0
    %v354 = vsel %vm327, %v322, 0
    %v356 = vsel %vm327, %v324, 0
    %v358 = vsel %vm327, %v326, 0
    %360 = vmatprep.subr.mxu0 0.0
    %361 = vmatpush1.xpose.msra.mxu0 %v344
    %362 = vmatprep.subr.mxu0 0.0
    %363 = vmatpush1.xpose.msra.mxu0 %v346
    %364 = vmatprep.subr.mxu0 0.0
    %365 = vmatpush1.xpose.msra.mxu0 %v348
    %366 = vmatprep.subr.mxu0 0.0
    %367 = vmatpush1.xpose.msra.mxu0 %v350
    %368 = vmatprep.subr.mxu0 0.0
    %369 = vmatpush1.xpose.msra.mxu0 %v352
    %370 = vmatprep.subr.mxu0 0.0
    %371 = vmatpush1.xpose.msra.mxu0 %v354
    %372 = vmatprep.subr.mxu0 0.0
    %373 = vmatpush1.xpose.msra.mxu0 %v356
    %374 = vmatprep.subr.mxu0 0.0
    %375 = vmatpush1.xpose.msra.mxu0 %v358
    %376 = vmatprep.subr.mxu0 0.0
    %377 = vmatpush1.xpose.msra.mxu0 0.0
    %378 = vmatprep.subr.mxu0 0.0
    %379 = vmatpush1.xpose.msra.mxu0 0.0
    %380 = vmatprep.subr.mxu0 0.0
    %381 = vmatpush1.xpose.msra.mxu0 0.0
    %382 = vmatprep.subr.mxu0 0.0
    %383 = vmatpush1.xpose.msra.mxu0 0.0
    %384 = vmatprep.subr.mxu0 0.0
    %385 = vmatpush1.xpose.msra.mxu0 0.0
    %386 = vmatprep.subr.mxu0 0.0
    %387 = vmatpush1.xpose.msra.mxu0 0.0
    %388 = vmatprep.subr.mxu0 0.0
    %389 = vmatpush1.xpose.msra.mxu0 0.0
    %390 = vmatprep.subr.mxu0 0.0
    %391 = vmatpush1.xpose.msra.mxu0 0.0
    %392 = vmatprep.subr.mxu0 0.0
    %393 = vmatpush1.xpose.msra.mxu0 0.0
    %394 = vmatprep.subr.mxu0 0.0
    %395 = vmatpush1.xpose.msra.mxu0 0.0
    %396 = vmatprep.subr.mxu0 0.0
    %397 = vmatpush1.xpose.msra.mxu0 0.0
    %398 = vmatprep.subr.mxu0 0.0
    %399 = vmatpush1.xpose.msra.mxu0 0.0
    %400 = vmatprep.subr.mxu0 0.0
    %401 = vmatpush1.xpose.msra.mxu0 0.0
    %402 = vmatprep.subr.mxu0 0.0
    %403 = vmatpush1.xpose.msra.mxu0 0.0
    %404 = vmatprep.subr.mxu0 0.0
    %405 = vmatpush1.xpose.msra.mxu0 0.0
    %406 = vmatprep.subr.mxu0 0.0
    %407 = vmatpush1.xpose.msra.mxu0 0.0
    %408 = vmatprep.subr.mxu0 0.0
    %409 = vmatpush1.xpose.msra.mxu0 0.0
    %410 = vmatprep.subr.mxu0 0.0
    %411 = vmatpush1.xpose.msra.mxu0 0.0
    %412 = vmatprep.subr.mxu0 0.0
    %413 = vmatpush1.xpose.msra.mxu0 0.0
    %414 = vmatprep.subr.mxu0 0.0
    %415 = vmatpush1.xpose.msra.mxu0 0.0
    %416 = vmatprep.subr.mxu0 0.0
    %417 = vmatpush1.xpose.msra.mxu0 0.0
    %418 = vmatprep.subr.mxu0 0.0
    %419 = vmatpush1.xpose.msra.mxu0 0.0
    %420 = vmatprep.subr.mxu0 0.0
    %421 = vmatpush1.xpose.msra.mxu0 0.0
    %422 = vmatprep.subr.mxu0 0.0
    %423 = vmatpush1.xpose.msra.mxu0 0.0
    %424 = vmatprep.mubr.f32.mxu0 0.0
    %425 = vmatmul.mubr.f32.gmra.mrb[0].mxu0 %v328
    %v426 = vpop.f32.mrb[0].mxu0
    %v427 = vadd.f32 %v172, %v426
    %v428 = vpop.f32.mrb[0].mxu0
    %429 = vmatprep.mubr.f32.mxu0 0.0
    %430 = vmatmul.mubr.f32.gmra.mrb[0].mxu0 %v330
    %v431 = vpop.f32.mrb[0].mxu0
    %v432 = vadd.f32 %v173, %v431
    %v433 = vpop.f32.mrb[0].mxu0
    %434 = vmatprep.mubr.f32.mxu0 0.0
    %435 = vmatmul.mubr.f32.gmra.mrb[0].mxu0 %v332
    %v436 = vpop.f32.mrb[0].mxu0
    %v437 = vadd.f32 %v174, %v436
    %v438 = vpop.f32.mrb[0].mxu0
    %439 = vmatprep.mubr.f32.mxu0 0.0
    %440 = vmatmul.mubr.f32.gmra.mrb[0].mxu0 %v334
    %v441 = vpop.f32.mrb[0].mxu0
    %v442 = vadd.f32 %v175, %v441
    %v443 = vpop.f32.mrb[0].mxu0
    %444 = vmatprep.mubr.f32.mxu0 0.0
    %445 = vmatmul.mubr.f32.gmra.mrb[0].mxu0 %v336
    %v446 = vpop.f32.mrb[0].mxu0
    %v447 = vadd.f32 %v176, %v446
    %v448 = vpop.f32.mrb[0].mxu0
    %449 = vmatprep.mubr.f32.mxu0 0.0
    %450 = vmatmul.mubr.f32.gmra.mrb[0].mxu0 %v338
    %v451 = vpop.f32.mrb[0].mxu0
    %v452 = vadd.f32 %v177, %v451
    %v453 = vpop.f32.mrb[0].mxu0
    %454 = vmatprep.mubr.f32.mxu0 0.0
    %455 = vmatmul.mubr.f32.gmra.mrb[0].mxu0 %v340
    %v456 = vpop.f32.mrb[0].mxu0
    %v457 = vadd.f32 %v178, %v456
    %v458 = vpop.f32.mrb[0].mxu0
    %459 = vmatprep.mubr.f32.mxu0 0.0
    %460 = vmatmul.mubr.f32.gmra.mrb[0].mxu0 %v342
    %v461 = vpop.f32.mrb[0].mxu0
    %v462 = vadd.f32 %v179, %v461
    %v463 = vpop.f32.mrb[0].mxu0
    %464 = vdwg.mxu0
    %v465 = vsel %vm56, %v427, -inf
    %466 = vmax.xlane.f32.xlu0 %v465
    %v467 = vpop.xlane.xlu0 %466
    %v468 = vsel %vm56, %v432, -inf
    %469 = vmax.xlane.f32.xlu0 %v468
    %v470 = vpop.xlane.xlu0 %469
    %v471 = vsel %vm56, %v437, -inf
    %472 = vmax.xlane.f32.xlu0 %v471
    %v473 = vpop.xlane.xlu0 %472
    %v474 = vsel %vm56, %v442, -inf
    %475 = vmax.xlane.f32.xlu0 %v474
    %v476 = vpop.xlane.xlu0 %475
    %v477 = vsel %vm56, %v447, -inf
    %478 = vmax.xlane.f32.xlu0 %v477
    %v479 = vpop.xlane.xlu0 %478
    %v480 = vsel %vm56, %v452, -inf
    %481 = vmax.xlane.f32.xlu0 %v480
    %v482 = vpop.xlane.xlu0 %481
    %v483 = vsel %vm56, %v457, -inf
    %484 = vmax.xlane.f32.xlu0 %v483
    %v485 = vpop.xlane.xlu0 %484
    %v486 = vsel %vm56, %v462, -inf
    %487 = vmax.xlane.f32.xlu0 %v486
    %v488 = vpop.xlane.xlu0 %487
    %v489 = vsub.f32 %v427, %v467
    %v490 = vsub.f32 %v432, %v470
    %v491 = vsub.f32 %v437, %v473
    %v492 = vsub.f32 %v442, %v476
    %v493 = vsub.f32 %v447, %v479
    %v494 = vsub.f32 %v452, %v482
    %v495 = vsub.f32 %v457, %v485
    %v496 = vsub.f32 %v462, %v488
    %v497 = vmul.f32 %v489, 1.442695
    %v498 = vpow.pop %v497
    %v499 = vmul.f32 %v490, 1.442695
    %v500 = vpow.pop %v499
    %v501 = vmul.f32 %v491, 1.442695
    %v502 = vpow.pop %v501
    %v503 = vmul.f32 %v492, 1.442695
    %v504 = vpow.pop %v503
    %v505 = vmul.f32 %v493, 1.442695
    %v506 = vpow.pop %v505
    %v507 = vmul.f32 %v494, 1.442695
    %v508 = vpow.pop %v507
    %v509 = vmul.f32 %v495, 1.442695
    %v510 = vpow.pop %v509
    %v511 = vmul.f32 %v496, 1.442695
    %v512 = vpow.pop %v511
    %v513 = vsel %vm56, %v498, 0.0
    %514 = vadd.xlane.f32.xlu0 %v513
    %v515 = vpop.xlane.xlu0 %514
    %v516 = vsel %vm56, %v500, 0.0
    %517 = vadd.xlane.f32.xlu0 %v516
    %v518 = vpop.xlane.xlu0 %517
    %v519 = vsel %vm56, %v502, 0.0
    %520 = vadd.xlane.f32.xlu0 %v519
    %v521 = vpop.xlane.xlu0 %520
    %v522 = vsel %vm56, %v504, 0.0
    %523 = vadd.xlane.f32.xlu0 %v522
    %v524 = vpop.xlane.xlu0 %523
    %v525 = vsel %vm56, %v506, 0.0
    %526 = vadd.xlane.f32.xlu0 %v525
    %v527 = vpop.xlane.xlu0 %526
    %v528 = vsel %vm56, %v508, 0.0
    %529 = vadd.xlane.f32.xlu0 %v528
    %v530 = vpop.xlane.xlu0 %529
    %v531 = vsel %vm56, %v510, 0.0
    %532 = vadd.xlane.f32.xlu0 %v531
    %v533 = vpop.xlane.xlu0 %532
    %v534 = vsel %vm56, %v512, 0.0
    %535 = vadd.xlane.f32.xlu0 %v534
    %v536 = vpop.xlane.xlu0 %535
    %v537 = vrcp.pop %v515
    %v538 = vrcp.pop %v518
    %v539 = vrcp.pop %v521
    %v540 = vrcp.pop %v524
    %v541 = vrcp.pop %v527
    %v542 = vrcp.pop %v530
    %v543 = vrcp.pop %v533
    %v544 = vrcp.pop %v536
    %v545 = vmul.f32 %v498, %v537
    %v546 = vmul.f32 %v500, %v538
    %v547 = vmul.f32 %v502, %v539
    %v548 = vmul.f32 %v504, %v540
    %v549 = vmul.f32 %v506, %v541
    %v550 = vmul.f32 %v508, %v542
    %v551 = vmul.f32 %v510, %v543
    %v552 = vmul.f32 %v512, %v544
    %553 = vrot.lane.b32.xlu0 %v295, 112
    %v554 = vpop.permute.xlu0 %553
    %555 = vrot.lane.b32.xlu0 %v296, 112
    %v556 = vpop.permute.xlu0 %555
    %557 = vrot.lane.b32.xlu0 %v297, 112
    %v558 = vpop.permute.xlu0 %557
    %559 = vrot.lane.b32.xlu0 %v298, 112
    %v560 = vpop.permute.xlu0 %559
    %561 = vrot.lane.b32.xlu0 %v299, 112
    %v562 = vpop.permute.xlu0 %561
    %563 = vrot.lane.b32.xlu0 %v300, 112
    %v564 = vpop.permute.xlu0 %563
    %565 = vrot.lane.b32.xlu0 %v301, 112
    %v566 = vpop.permute.xlu0 %565
    %567 = vrot.lane.b32.xlu0 %v302, 112
    %v568 = vpop.permute.xlu0 %567
    %v578 = vsel %vm56, %v545, 0
    %v581 = vsel %vm56, %v546, 0
    %v584 = vsel %vm56, %v547, 0
    %v587 = vsel %vm56, %v548, 0
    %v590 = vsel %vm56, %v549, 0
    %v593 = vsel %vm56, %v550, 0
    %v596 = vsel %vm56, %v551, 0
    %v599 = vsel %vm56, %v552, 0
    %601 = vmatprep.subr.mxu0 0.0
    %602 = vmatpush1.msra.mxu0 %v554
    %603 = vmatprep.subr.mxu0 0.0
    %604 = vmatpush1.msra.mxu0 %v556
    %605 = vmatprep.subr.mxu0 0.0
    %606 = vmatpush1.msra.mxu0 %v558
    %607 = vmatprep.subr.mxu0 0.0
    %608 = vmatpush1.msra.mxu0 %v560
    %609 = vmatprep.subr.mxu0 0.0
    %610 = vmatpush1.msra.mxu0 %v562
    %611 = vmatprep.subr.mxu0 0.0
    %612 = vmatpush1.msra.mxu0 %v564
    %613 = vmatprep.subr.mxu0 0.0
    %614 = vmatpush1.msra.mxu0 %v566
    %615 = vmatprep.subr.mxu0 0.0
    %616 = vmatpush1.msra.mxu0 %v568
    %617 = vmatprep.subr.mxu0 0.0
    %618 = vmatpush1.msra.mxu0 0.0
    %619 = vmatprep.subr.mxu0 0.0
    %620 = vmatpush1.msra.mxu0 0.0
    %621 = vmatprep.subr.mxu0 0.0
    %622 = vmatpush1.msra.mxu0 0.0
    %623 = vmatprep.subr.mxu0 0.0
    %624 = vmatpush1.msra.mxu0 0.0
    %625 = vmatprep.subr.mxu0 0.0
    %626 = vmatpush1.msra.mxu0 0.0
    %627 = vmatprep.subr.mxu0 0.0
    %628 = vmatpush1.msra.mxu0 0.0
    %629 = vmatprep.subr.mxu0 0.0
    %630 = vmatpush1.msra.mxu0 0.0
    %631 = vmatprep.subr.mxu0 0.0
    %632 = vmatpush1.msra.mxu0 0.0
    %633 = vmatprep.subr.mxu0 0.0
    %634 = vmatpush1.msra.mxu0 0.0
    %635 = vmatprep.subr.mxu0 0.0
    %636 = vmatpush1.msra.mxu0 0.0
    %637 = vmatprep.subr.mxu0 0.0
    %638 = vmatpush1.msra.mxu0 0.0
    %639 = vmatprep.subr.mxu0 0.0
    %640 = vmatpush1.msra.mxu0 0.0
    %641 = vmatprep.subr.mxu0 0.0
    %642 = vmatpush1.msra.mxu0 0.0
    %643 = vmatprep.subr.mxu0 0.0
    %644 = vmatpush1.msra.mxu0 0.0
    %645 = vmatprep.subr.mxu0 0.0
    %646 = vmatpush1.msra.mxu0 0.0
    %647 = vmatprep.subr.mxu0 0.0
    %648 = vmatpush1.msra.mxu0 0.0
    %649 = vmatprep.subr.mxu0 0.0
    %650 = vmatpush1.msra.mxu0 0.0
    %651 = vmatprep.subr.mxu0 0.0
    %652 = vmatpush1.msra.mxu0 0.0
    %653 = vmatprep.subr.mxu0 0.0
    %654 = vmatpush1.msra.mxu0 0.0
    %655 = vmatprep.subr.mxu0 0.0
    %656 = vmatpush1.msra.mxu0 0.0
    %657 = vmatprep.subr.mxu0 0.0
    %658 = vmatpush1.msra.mxu0 0.0
    %659 = vmatprep.subr.mxu0 0.0
    %660 = vmatpush1.msra.mxu0 0.0
    %661 = vmatprep.subr.mxu0 0.0
    %662 = vmatpush1.msra.mxu0 0.0
    %663 = vmatprep.subr.mxu0 0.0
    %664 = vmatpush1.msra.mxu0 0.0
    %665 = vmatprep.mubr.f32.mxu0 0.0
    %666 = vmatmul.mubr.f32.gmra.mrb[0].mxu0 %v578
    %v667 = vpop.f32.mrb[0].mxu0
    %v668 = vadd.f32 0.0, %v667
    %v669 = vpop.f32.mrb[0].mxu0
    %670 = vmatprep.mubr.f32.mxu0 0.0
    %671 = vmatmul.mubr.f32.gmra.mrb[0].mxu0 %v581
    %v672 = vpop.f32.mrb[0].mxu0
    %v673 = vadd.f32 0.0, %v672
    %v674 = vpop.f32.mrb[0].mxu0
    %675 = vmatprep.mubr.f32.mxu0 0.0
    %676 = vmatmul.mubr.f32.gmra.mrb[0].mxu0 %v584
    %v677 = vpop.f32.mrb[0].mxu0
    %v678 = vadd.f32 0.0, %v677
    %v679 = vpop.f32.mrb[0].mxu0
    %680 = vmatprep.mubr.f32.mxu0 0.0
    %681 = vmatmul.mubr.f32.gmra.mrb[0].mxu0 %v587
    %v682 = vpop.f32.mrb[0].mxu0
    %v683 = vadd.f32 0.0, %v682
    %v684 = vpop.f32.mrb[0].mxu0
    %685 = vmatprep.mubr.f32.mxu0 0.0
    %686 = vmatmul.mubr.f32.gmra.mrb[0].mxu0 %v590
    %v687 = vpop.f32.mrb[0].mxu0
    %v688 = vadd.f32 0.0, %v687
    %v689 = vpop.f32.mrb[0].mxu0
    %690 = vmatprep.mubr.f32.mxu0 0.0
    %691 = vmatmul.mubr.f32.gmra.mrb[0].mxu0 %v593
    %v692 = vpop.f32.mrb[0].mxu0
    %v693 = vadd.f32 0.0, %v692
    %v694 = vpop.f32.mrb[0].mxu0
    %695 = vmatprep.mubr.f32.mxu0 0.0
    %696 = vmatmul.mubr.f32.gmra.mrb[0].mxu0 %v596
    %v697 = vpop.f32.mrb[0].mxu0
    %v698 = vadd.f32 0.0, %v697
    %v699 = vpop.f32.mrb[0].mxu0
    %700 = vmatprep.mubr.f32.mxu0 0.0
    %701 = vmatmul.mubr.f32.gmra.mrb[0].mxu0 %v599
    %v702 = vpop.f32.mrb[0].mxu0
    %v703 = vadd.f32 0.0, %v702
    %v704 = vpop.f32.mrb[0].mxu0
    %705 = vdwg.mxu0
    %706 = vst.msk [vmem:[#allocation3] sm:$0xff] %vm327, %v668
    %708 = vrot.lane.b32.xlu0 %v673, 8
    %v709 = vpop.permute.xlu0 %708
    %vm711 = vcmask 130112
    %712 = vst.msk [vmem:[#allocation3] sm:$0xff] %vm711, %v709
    %714 = vrot.lane.b32.xlu0 %v678, 16
    %v715 = vpop.permute.xlu0 %714
    %vm717 = vcmask 195712
    %718 = vst.msk [vmem:[#allocation3] sm:$0xff] %vm717, %v715
    %720 = vrot.lane.b32.xlu0 %v683, 24
    %v721 = vpop.permute.xlu0 %720
    %vm723 = vcmask 261312
    %724 = vst.msk [vmem:[#allocation3] sm:$0xff] %vm723, %v721
    %725 = vst.msk [vmem:[#allocation3 + $0x8] sm:$0xff] %vm327, %v688
    %727 = vrot.lane.b32.xlu0 %v693, 8
    %v728 = vpop.permute.xlu0 %727
    %730 = vst.msk [vmem:[#allocation3 + $0x8] sm:$0xff] %vm711, %v728
    %732 = vrot.lane.b32.xlu0 %v698, 16
    %v733 = vpop.permute.xlu0 %732
    %735 = vst.msk [vmem:[#allocation3 + $0x8] sm:$0xff] %vm717, %v733
    %737 = vrot.lane.b32.xlu0 %v703, 24
    %v738 = vpop.permute.xlu0 %737
    %740 = vst.msk [vmem:[#allocation3 + $0x8] sm:$0xff] %vm723, %v738
    %v741 = vld [vmem:[#allocation3] sm:$0xff]
    %v742 = vld [vmem:[#allocation3 + $0x8] sm:$0xff]
    %v743 = vld [vmem:[%s3 + $0x8] sm:$0xff]
    %v744 = vld [vmem:[%s3 + $0x18] sm:$0xff]
    %v745 = vld [vmem:[%s3 + $0x28] sm:$0xff]
    %v746 = vld [vmem:[%s3 + $0x38] sm:$0xff]
    %v747 = vld [vmem:[%s5 + $0x11] ss:$0 sm:$0xff]
    %v749 = vsel %vm140, %v741, 0
    %v752 = vsel %vm140, %v742, 0
    %754 = vmatprep.subr.mxu0 0.0
    %755 = vmatpush1.msra.mxu0 %v743
    %756 = vmatprep.subr.mxu0 0.0
    %757 = vmatpush1.msra.mxu0 %v744
    %758 = vmatprep.subr.mxu0 0.0
    %759 = vmatpush1.msra.mxu0 %v745
    %760 = vmatprep.subr.mxu0 0.0
    %761 = vmatpush1.msra.mxu0 %v746
    %762 = vmatprep.subr.mxu0 0.0
    %763 = vmatpush1.msra.mxu0 0.0
    %764 = vmatprep.subr.mxu0 0.0
    %765 = vmatpush1.msra.mxu0 0.0
    %766 = vmatprep.subr.mxu0 0.0
    %767 = vmatpush1.msra.mxu0 0.0
    %768 = vmatprep.subr.mxu0 0.0
    %769 = vmatpush1.msra.mxu0 0.0
    %770 = vmatprep.subr.mxu0 0.0
    %771 = vmatpush1.msra.mxu0 0.0
    %772 = vmatprep.subr.mxu0 0.0
    %773 = vmatpush1.msra.mxu0 0.0
    %774 = vmatprep.subr.mxu0 0.0
    %775 = vmatpush1.msra.mxu0 0.0
    %776 = vmatprep.subr.mxu0 0.0
    %777 = vmatpush1.msra.mxu0 0.0
    %778 = vmatprep.subr.mxu0 0.0
    %779 = vmatpush1.msra.mxu0 0.0
    %780 = vmatprep.subr.mxu0 0.0
    %781 = vmatpush1.msra.mxu0 0.0
    %782 = vmatprep.subr.mxu0 0.0
    %783 = vmatpush1.msra.mxu0 0.0
    %784 = vmatprep.subr.mxu0 0.0
    %785 = vmatpush1.msra.mxu0 0.0
    %786 = vmatprep.subr.mxu0 0.0
    %787 = vmatpush1.msra.mxu0 0.0
    %788 = vmatprep.subr.mxu0 0.0
    %789 = vmatpush1.msra.mxu0 0.0
    %790 = vmatprep.subr.mxu0 0.0
    %791 = vmatpush1.msra.mxu0 0.0
    %792 = vmatprep.subr.mxu0 0.0
    %793 = vmatpush1.msra.mxu0 0.0
    %794 = vmatprep.subr.mxu0 0.0
    %795 = vmatpush1.msra.mxu0 0.0
    %796 = vmatprep.subr.mxu0 0.0
    %797 = vmatpush1.msra.mxu0 0.0
    %798 = vmatprep.subr.mxu0 0.0
    %799 = vmatpush1.msra.mxu0 0.0
    %800 = vmatprep.subr.mxu0 0.0
    %801 = vmatpush1.msra.mxu0 0.0
    %802 = vmatprep.subr.mxu0 0.0
    %803 = vmatpush1.msra.mxu0 0.0
    %804 = vmatprep.subr.mxu0 0.0
    %805 = vmatpush1.msra.mxu0 0.0
    %806 = vmatprep.subr.mxu0 0.0
    %807 = vmatpush1.msra.mxu0 0.0
    %808 = vmatprep.subr.mxu0 0.0
    %809 = vmatpush1.msra.mxu0 0.0
    %810 = vmatprep.subr.mxu0 0.0
    %811 = vmatpush1.msra.mxu0 0.0
    %812 = vmatprep.subr.mxu0 0.0
    %813 = vmatpush1.msra.mxu0 0.0
    %814 = vmatprep.subr.mxu0 0.0
    %815 = vmatpush1.msra.mxu0 0.0
    %816 = vmatprep.subr.mxu0 0.0
    %817 = vmatpush1.msra.mxu0 0.0
    %818 = vmatprep.mubr.f32.mxu0 0.0
    %819 = vmatmul.mubr.f32.gmra.mrb[0].mxu0 %v749
    %v820 = vpop.f32.mrb[0].mxu0
    %v821 = vadd.f32 %v747, %v820
    %v822 = vpop.f32.mrb[0].mxu0
    %823 = vmatprep.mubr.f32.mxu0 0.0
    %824 = vmatmul.mubr.f32.gmra.mrb[0].mxu0 %v752
    %v825 = vpop.f32.mrb[0].mxu0
    %v826 = vadd.f32 %v747, %v825
    %v827 = vpop.f32.mrb[0].mxu0
    %828 = vdwg.mxu0
    %v829 = vadd.f32 %v170, %v821
    %v830 = vadd.f32 %v171, %v826
    %v831 = vld [vmem:[%s5 + $0x12] ss:$0 sm:$0xff]
    %v832 = vld [vmem:[%s5 + $0x13] ss:$0 sm:$0xff]
    %v833 = vsel %vm140, %v829, 0.0
    %834 = vadd.xlane.f32.xlu0 %v833
    %v835 = vpop.xlane.xlu0 %834
    %v836 = vsel %vm140, %v830, 0.0
    %837 = vadd.xlane.f32.xlu0 %v836
    %v838 = vpop.xlane.xlu0 %837
    %v839 = vmul.f32 %v835, %v147
    %v840 = vmul.f32 %v838, %v147
    %v841 = vsub.f32 %v829, %v839
    %v842 = vsub.f32 %v830, %v840
    %v843 = vmul.f32 %v841, %v841
    %v844 = vmul.f32 %v842, %v842
    %v845 = vsel %vm140, %v843, 0.0
    %846 = vadd.xlane.f32.xlu0 %v845
    %v847 = vpop.xlane.xlu0 %846
    %v848 = vsel %vm140, %v844, 0.0
    %849 = vadd.xlane.f32.xlu0 %v848
    %v850 = vpop.xlane.xlu0 %849
    %v851 = vmul.f32 %v847, %v147
    %v852 = vmul.f32 %v850, %v147
    %v853 = vadd.f32 %v851, 1e-12
    %v854 = vadd.f32 %v852, 1e-12
    %v855 = vrsqrt.pop %v853
    %v856 = vrsqrt.pop %v854
    %v857 = vmul.f32 %v841, %v855
    %v858 = vmul.f32 %v842, %v856
    %v859 = vmul.f32 %v857, %v831
    %v860 = vmul.f32 %v858, %v831
    %v861 = vadd.f32 %v859, %v832
    %v862 = vadd.f32 %v860, %v832
    %v863 = vld [vmem:[%s4] sm:$0xff]
    %v864 = vld [vmem:[%s4 + $0x8] sm:$0xff]
    %v865 = vld [vmem:[%s4 + $0x10] sm:$0xff]
    %v866 = vld [vmem:[%s4 + $0x18] sm:$0xff]
    %v867 = vld [vmem:[%s4 + $0x20] sm:$0xff]
    %v868 = vld [vmem:[%s4 + $0x28] sm:$0xff]
    %v869 = vld [vmem:[%s4 + $0x30] sm:$0xff]
    %v870 = vld [vmem:[%s4 + $0x38] sm:$0xff]
    %v871 = vld [vmem:[%s5 + $0x14] ss:$0 sm:$0xff]
    %876 = vrot.lane.b32.xlu0 %v743, 96
    %v877 = vpop.permute.xlu0 %876
    %878 = vrot.lane.b32.xlu0 %v744, 96
    %v879 = vpop.permute.xlu0 %878
    %880 = vrot.lane.b32.xlu0 %v745, 96
    %v881 = vpop.permute.xlu0 %880
    %882 = vrot.lane.b32.xlu0 %v746, 96
    %v883 = vpop.permute.xlu0 %882
    %v889 = vsel %vm140, %v861, 0
    %v892 = vsel %vm140, %v862, 0
    %894 = vmatprep.subr.mxu0 0.0
    %895 = vmatpush1.msra.mxu0 %v877
    %896 = vmatprep.subr.mxu0 0.0
    %897 = vmatpush1.msra.mxu0 %v879
    %898 = vmatprep.subr.mxu0 0.0
    %899 = vmatpush1.msra.mxu0 %v881
    %900 = vmatprep.subr.mxu0 0.0
    %901 = vmatpush1.msra.mxu0 %v883
    %902 = vmatprep.subr.mxu0 0.0
    %903 = vmatpush1.msra.mxu0 0.0
    %904 = vmatprep.subr.mxu0 0.0
    %905 = vmatpush1.msra.mxu0 0.0
    %906 = vmatprep.subr.mxu0 0.0
    %907 = vmatpush1.msra.mxu0 0.0
    %908 = vmatprep.subr.mxu0 0.0
    %909 = vmatpush1.msra.mxu0 0.0
    %910 = vmatprep.subr.mxu0 0.0
    %911 = vmatpush1.msra.mxu0 0.0
    %912 = vmatprep.subr.mxu0 0.0
    %913 = vmatpush1.msra.mxu0 0.0
    %914 = vmatprep.subr.mxu0 0.0
    %915 = vmatpush1.msra.mxu0 0.0
    %916 = vmatprep.subr.mxu0 0.0
    %917 = vmatpush1.msra.mxu0 0.0
    %918 = vmatprep.subr.mxu0 0.0
    %919 = vmatpush1.msra.mxu0 0.0
    %920 = vmatprep.subr.mxu0 0.0
    %921 = vmatpush1.msra.mxu0 0.0
    %922 = vmatprep.subr.mxu0 0.0
    %923 = vmatpush1.msra.mxu0 0.0
    %924 = vmatprep.subr.mxu0 0.0
    %925 = vmatpush1.msra.mxu0 0.0
    %926 = vmatprep.subr.mxu0 0.0
    %927 = vmatpush1.msra.mxu0 0.0
    %928 = vmatprep.subr.mxu0 0.0
    %929 = vmatpush1.msra.mxu0 0.0
    %930 = vmatprep.subr.mxu0 0.0
    %931 = vmatpush1.msra.mxu0 0.0
    %932 = vmatprep.subr.mxu0 0.0
    %933 = vmatpush1.msra.mxu0 0.0
    %934 = vmatprep.subr.mxu0 0.0
    %935 = vmatpush1.msra.mxu0 0.0
    %936 = vmatprep.subr.mxu0 0.0
    %937 = vmatpush1.msra.mxu0 0.0
    %938 = vmatprep.subr.mxu0 0.0
    %939 = vmatpush1.msra.mxu0 0.0
    %940 = vmatprep.subr.mxu0 0.0
    %941 = vmatpush1.msra.mxu0 0.0
    %942 = vmatprep.subr.mxu0 0.0
    %943 = vmatpush1.msra.mxu0 0.0
    %944 = vmatprep.subr.mxu0 0.0
    %945 = vmatpush1.msra.mxu0 0.0
    %946 = vmatprep.subr.mxu0 0.0
    %947 = vmatpush1.msra.mxu0 0.0
    %948 = vmatprep.subr.mxu0 0.0
    %949 = vmatpush1.msra.mxu0 0.0
    %950 = vmatprep.subr.mxu0 0.0
    %951 = vmatpush1.msra.mxu0 0.0
    %952 = vmatprep.subr.mxu0 0.0
    %953 = vmatpush1.msra.mxu0 0.0
    %954 = vmatprep.subr.mxu0 0.0
    %955 = vmatpush1.msra.mxu0 0.0
    %956 = vmatprep.subr.mxu0 0.0
    %957 = vmatpush1.msra.mxu0 0.0
    %958 = vmatprep.mubr.f32.mxu0 0.0
    %959 = vmatmul.mubr.f32.gmra.mrb[0].mxu0 %v889
    %v960 = vpop.f32.mrb[0].mxu0
    %v961 = vadd.f32 %v871, %v960
    %v962 = vpop.f32.mrb[0].mxu0
    %963 = vmatprep.mubr.f32.mxu0 0.0
    %964 = vmatmul.mubr.f32.gmra.mrb[0].mxu0 %v892
    %v965 = vpop.f32.mrb[0].mxu0
    %v966 = vadd.f32 %v871, %v965
    %v967 = vpop.f32.mrb[0].mxu0
    %968 = vdwg.mxu0
    %v969 = vmul.f32 %v961, 0.5
    %v970 = vmul.f32 %v966, 0.5
    %v971 = vmul.f32 %v961, 0.044715
    %v972 = vmul.f32 %v966, 0.044715
    %v973 = vmul.f32 %v971, %v961
    %v974 = vmul.f32 %v972, %v966
    %v975 = vmul.f32 %v973, %v961
    %v976 = vmul.f32 %v974, %v966
    %v977 = vadd.f32 %v961, %v975
    %v978 = vadd.f32 %v966, %v976
    %v979 = vmul.f32 %v977, 0.7978846
    %v980 = vmul.f32 %v978, 0.7978846
    %v981 = vtanh.pop %v979
    %v982 = vtanh.pop %v980
    %v983 = vadd.f32 %v981, 1.0
    %v984 = vadd.f32 %v982, 1.0
    %v985 = vmul.f32 %v969, %v983
    %v986 = vmul.f32 %v970, %v984
    %v987 = vld [vmem:[%s5 + $0x15] ss:$0 sm:$0xff]
    %v989 = vsel %vm56, %v985, 0
    %v992 = vsel %vm56, %v986, 0
    %994 = vmatprep.subr.mxu0 0.0
    %995 = vmatpush1.msra.mxu0 %v863
    %996 = vmatprep.subr.mxu0 0.0
    %997 = vmatpush1.msra.mxu0 %v864
    %998 = vmatprep.subr.mxu0 0.0
    %999 = vmatpush1.msra.mxu0 %v865
    %1000 = vmatprep.subr.mxu0 0.0
    %1001 = vmatpush1.msra.mxu0 %v866
    %1002 = vmatprep.subr.mxu0 0.0
    %1003 = vmatpush1.msra.mxu0 %v867
    %1004 = vmatprep.subr.mxu0 0.0
    %1005 = vmatpush1.msra.mxu0 %v868
    %1006 = vmatprep.subr.mxu0 0.0
    %1007 = vmatpush1.msra.mxu0 %v869
    %1008 = vmatprep.subr.mxu0 0.0
    %1009 = vmatpush1.msra.mxu0 %v870
    %1010 = vmatprep.subr.mxu0 0.0
    %1011 = vmatpush1.msra.mxu0 0.0
    %1012 = vmatprep.subr.mxu0 0.0
    %1013 = vmatpush1.msra.mxu0 0.0
    %1014 = vmatprep.subr.mxu0 0.0
    %1015 = vmatpush1.msra.mxu0 0.0
    %1016 = vmatprep.subr.mxu0 0.0
    %1017 = vmatpush1.msra.mxu0 0.0
    %1018 = vmatprep.subr.mxu0 0.0
    %1019 = vmatpush1.msra.mxu0 0.0
    %1020 = vmatprep.subr.mxu0 0.0
    %1021 = vmatpush1.msra.mxu0 0.0
    %1022 = vmatprep.subr.mxu0 0.0
    %1023 = vmatpush1.msra.mxu0 0.0
    %1024 = vmatprep.subr.mxu0 0.0
    %1025 = vmatpush1.msra.mxu0 0.0
    %1026 = vmatprep.subr.mxu0 0.0
    %1027 = vmatpush1.msra.mxu0 0.0
    %1028 = vmatprep.subr.mxu0 0.0
    %1029 = vmatpush1.msra.mxu0 0.0
    %1030 = vmatprep.subr.mxu0 0.0
    %1031 = vmatpush1.msra.mxu0 0.0
    %1032 = vmatprep.subr.mxu0 0.0
    %1033 = vmatpush1.msra.mxu0 0.0
    %1034 = vmatprep.subr.mxu0 0.0
    %1035 = vmatpush1.msra.mxu0 0.0
    %1036 = vmatprep.subr.mxu0 0.0
    %1037 = vmatpush1.msra.mxu0 0.0
    %1038 = vmatprep.subr.mxu0 0.0
    %1039 = vmatpush1.msra.mxu0 0.0
    %1040 = vmatprep.subr.mxu0 0.0
    %1041 = vmatpush1.msra.mxu0 0.0
    %1042 = vmatprep.subr.mxu0 0.0
    %1043 = vmatpush1.msra.mxu0 0.0
    %1044 = vmatprep.subr.mxu0 0.0
    %1045 = vmatpush1.msra.mxu0 0.0
    %1046 = vmatprep.subr.mxu0 0.0
    %1047 = vmatpush1.msra.mxu0 0.0
    %1048 = vmatprep.subr.mxu0 0.0
    %1049 = vmatpush1.msra.mxu0 0.0
    %1050 = vmatprep.subr.mxu0 0.0
    %1051 = vmatpush1.msra.mxu0 0.0
    %1052 = vmatprep.subr.mxu0 0.0
    %1053 = vmatpush1.msra.mxu0 0.0
    %1054 = vmatprep.subr.mxu0 0.0
    %1055 = vmatpush1.msra.mxu0 0.0
    %1056 = vmatprep.subr.mxu0 0.0
    %1057 = vmatpush1.msra.mxu0 0.0
    %1058 = vmatprep.mubr.f32.mxu0 0.0
    %1059 = vmatmul.mubr.f32.gmra.mrb[0].mxu0 %v989
    %v1060 = vpop.f32.mrb[0].mxu0
    %v1061 = vadd.f32 %v987, %v1060
    %v1062 = vpop.f32.mrb[0].mxu0
    %1063 = vmatprep.mubr.f32.mxu0 0.0
    %1064 = vmatmul.mubr.f32.gmra.mrb[0].mxu0 %v992
    %v1065 = vpop.f32.mrb[0].mxu0
    %v1066 = vadd.f32 %v987, %v1065
    %v1067 = vpop.f32.mrb[0].mxu0
    %1068 = vdwg.mxu0
    %v1069 = vadd.f32 %v861, %v1061
    %v1070 = vadd.f32 %v862, %v1066
    %v1071 = vld [vmem:[%s5 + $0x16] ss:$0 sm:$0xff]
    %v1072 = vld [vmem:[%s5 + $0x17] ss:$0 sm:$0xff]
    %v1073 = vsel %vm140, %v1069, 0.0
    %1074 = vadd.xlane.f32.xlu0 %v1073
    %v1075 = vpop.xlane.xlu0 %1074
    %v1076 = vsel %vm140, %v1070, 0.0
    %1077 = vadd.xlane.f32.xlu0 %v1076
    %v1078 = vpop.xlane.xlu0 %1077
    %v1079 = vmul.f32 %v1075, %v147
    %v1080 = vmul.f32 %v1078, %v147
    %v1081 = vsub.f32 %v1069, %v1079
    %v1082 = vsub.f32 %v1070, %v1080
    %v1083 = vmul.f32 %v1081, %v1081
    %v1084 = vmul.f32 %v1082, %v1082
    %v1085 = vsel %vm140, %v1083, 0.0
    %1086 = vadd.xlane.f32.xlu0 %v1085
    %v1087 = vpop.xlane.xlu0 %1086
    %v1088 = vsel %vm140, %v1084, 0.0
    %1089 = vadd.xlane.f32.xlu0 %v1088
    %v1090 = vpop.xlane.xlu0 %1089
    %v1091 = vmul.f32 %v1087, %v147
    %v1092 = vmul.f32 %v1090, %v147
    %v1093 = vadd.f32 %v1091, 1e-12
    %v1094 = vadd.f32 %v1092, 1e-12
    %v1095 = vrsqrt.pop %v1093
    %v1096 = vrsqrt.pop %v1094
    %v1097 = vmul.f32 %v1081, %v1095
    %v1098 = vmul.f32 %v1082, %v1096
    %v1099 = vmul.f32 %v1097, %v1071
    %v1100 = vmul.f32 %v1098, %v1071
    %v1101 = vadd.f32 %v1099, %v1072
    %v1102 = vadd.f32 %v1100, %v1072
    %s1103 = scalar_lea.vmem %s3, 64
    %v1104 = vld [vmem:[%s1103] sm:$0xff]
    %v1105 = vld [vmem:[%s1103 + $0x10] sm:$0xff]
    %v1106 = vld [vmem:[%s1103 + $0x20] sm:$0xff]
    %v1107 = vld [vmem:[%s1103 + $0x30] sm:$0xff]
    %v1108 = vld [vmem:[%s5 + $0x20] ss:$0 sm:$0xff]
    %v1110 = vsel %vm140, %v1101, 0
    %v1113 = vsel %vm140, %v1102, 0
    %1115 = vmatprep.subr.mxu0 0.0
    %1116 = vmatpush1.msra.mxu0 %v1104
    %1117 = vmatprep.subr.mxu0 0.0
    %1118 = vmatpush1.msra.mxu0 %v1105
    %1119 = vmatprep.subr.mxu0 0.0
    %1120 = vmatpush1.msra.mxu0 %v1106
    %1121 = vmatprep.subr.mxu0 0.0
    %1122 = vmatpush1.msra.mxu0 %v1107
    %1123 = vmatprep.subr.mxu0 0.0
    %1124 = vmatpush1.msra.mxu0 0.0
    %1125 = vmatprep.subr.mxu0 0.0
    %1126 = vmatpush1.msra.mxu0 0.0
    %1127 = vmatprep.subr.mxu0 0.0
    %1128 = vmatpush1.msra.mxu0 0.0
    %1129 = vmatprep.subr.mxu0 0.0
    %1130 = vmatpush1.msra.mxu0 0.0
    %1131 = vmatprep.subr.mxu0 0.0
    %1132 = vmatpush1.msra.mxu0 0.0
    %1133 = vmatprep.subr.mxu0 0.0
    %1134 = vmatpush1.msra.mxu0 0.0
    %1135 = vmatprep.subr.mxu0 0.0
    %1136 = vmatpush1.msra.mxu0 0.0
    %1137 = vmatprep.subr.mxu0 0.0
    %1138 = vmatpush1.msra.mxu0 0.0
    %1139 = vmatprep.subr.mxu0 0.0
    %1140 = vmatpush1.msra.mxu0 0.0
    %1141 = vmatprep.subr.mxu0 0.0
    %1142 = vmatpush1.msra.mxu0 0.0
    %1143 = vmatprep.subr.mxu0 0.0
    %1144 = vmatpush1.msra.mxu0 0.0
    %1145 = vmatprep.subr.mxu0 0.0
    %1146 = vmatpush1.msra.mxu0 0.0
    %1147 = vmatprep.subr.mxu0 0.0
    %1148 = vmatpush1.msra.mxu0 0.0
    %1149 = vmatprep.subr.mxu0 0.0
    %1150 = vmatpush1.msra.mxu0 0.0
    %1151 = vmatprep.subr.mxu0 0.0
    %1152 = vmatpush1.msra.mxu0 0.0
    %1153 = vmatprep.subr.mxu0 0.0
    %1154 = vmatpush1.msra.mxu0 0.0
    %1155 = vmatprep.subr.mxu0 0.0
    %1156 = vmatpush1.msra.mxu0 0.0
    %1157 = vmatprep.subr.mxu0 0.0
    %1158 = vmatpush1.msra.mxu0 0.0
    %1159 = vmatprep.subr.mxu0 0.0
    %1160 = vmatpush1.msra.mxu0 0.0
    %1161 = vmatprep.subr.mxu0 0.0
    %1162 = vmatpush1.msra.mxu0 0.0
    %1163 = vmatprep.subr.mxu0 0.0
    %1164 = vmatpush1.msra.mxu0 0.0
    %1165 = vmatprep.subr.mxu0 0.0
    %1166 = vmatpush1.msra.mxu0 0.0
    %1167 = vmatprep.subr.mxu0 0.0
    %1168 = vmatpush1.msra.mxu0 0.0
    %1169 = vmatprep.subr.mxu0 0.0
    %1170 = vmatpush1.msra.mxu0 0.0
    %1171 = vmatprep.subr.mxu0 0.0
    %1172 = vmatpush1.msra.mxu0 0.0
    %1173 = vmatprep.subr.mxu0 0.0
    %1174 = vmatpush1.msra.mxu0 0.0
    %1175 = vmatprep.subr.mxu0 0.0
    %1176 = vmatpush1.msra.mxu0 0.0
    %1177 = vmatprep.subr.mxu0 0.0
    %1178 = vmatpush1.msra.mxu0 0.0
    %1179 = vmatprep.mubr.f32.mxu0 0.0
    %1180 = vmatmul.mubr.f32.gmra.mrb[0].mxu0 %v1110
    %v1181 = vpop.f32.mrb[0].mxu0
    %v1182 = vadd.f32 %v1108, %v1181
    %v1183 = vpop.f32.mrb[0].mxu0
    %1184 = vmatprep.mubr.f32.mxu0 0.0
    %1185 = vmatmul.mubr.f32.gmra.mrb[0].mxu0 %v1113
    %v1186 = vpop.f32.mrb[0].mxu0
    %v1187 = vadd.f32 %v1108, %v1186
    %v1188 = vpop.f32.mrb[0].mxu0
    %1189 = vdwg.mxu0
    %1190 = vst.msk [vmem:[#allocation2] sm:$0xff] %vm266, %v1182
    %1192 = vrot.lane.b32.xlu0 %v1182, 104
    %v1193 = vpop.permute.xlu0 %1192
    %1195 = vst.msk [vmem:[#allocation2 + $0x8] sm:$0xff] %vm266, %v1193
    %1196 = vrot.lane.b32.xlu0 %v1182, 80
    %v1197 = vpop.permute.xlu0 %1196
    %1199 = vst.msk [vmem:[#allocation2 + $0x10] sm:$0xff] %vm266, %v1197
    %1200 = vrot.lane.b32.xlu0 %v1182, 56
    %v1201 = vpop.permute.xlu0 %1200
    %1203 = vst.msk [vmem:[#allocation2 + $0x18] sm:$0xff] %vm266, %v1201
    %1204 = vst.msk [vmem:[#allocation2 + $0x20] sm:$0xff] %vm266, %v1187
    %1206 = vrot.lane.b32.xlu0 %v1187, 104
    %v1207 = vpop.permute.xlu0 %1206
    %1209 = vst.msk [vmem:[#allocation2 + $0x28] sm:$0xff] %vm266, %v1207
    %1210 = vrot.lane.b32.xlu0 %v1187, 80
    %v1211 = vpop.permute.xlu0 %1210
    %1213 = vst.msk [vmem:[#allocation2 + $0x30] sm:$0xff] %vm266, %v1211
    %1214 = vrot.lane.b32.xlu0 %v1187, 56
    %v1215 = vpop.permute.xlu0 %1214
    %1217 = vst.msk [vmem:[#allocation2 + $0x38] sm:$0xff] %vm266, %v1215
    %v1218 = vld [vmem:[#allocation2] sm:$0xff]
    %v1219 = vld [vmem:[#allocation2 + $0x8] sm:$0xff]
    %v1220 = vld [vmem:[#allocation2 + $0x10] sm:$0xff]
    %v1221 = vld [vmem:[#allocation2 + $0x18] sm:$0xff]
    %v1222 = vld [vmem:[#allocation2 + $0x20] sm:$0xff]
    %v1223 = vld [vmem:[#allocation2 + $0x28] sm:$0xff]
    %v1224 = vld [vmem:[#allocation2 + $0x30] sm:$0xff]
    %v1225 = vld [vmem:[#allocation2 + $0x38] sm:$0xff]
    %1234 = vrot.lane.b32.xlu0 %v1218, 120
    %v1235 = vpop.permute.xlu0 %1234
    %1236 = vrot.lane.b32.xlu0 %v1219, 120
    %v1237 = vpop.permute.xlu0 %1236
    %1238 = vrot.lane.b32.xlu0 %v1220, 120
    %v1239 = vpop.permute.xlu0 %1238
    %1240 = vrot.lane.b32.xlu0 %v1221, 120
    %v1241 = vpop.permute.xlu0 %1240
    %1242 = vrot.lane.b32.xlu0 %v1222, 120
    %v1243 = vpop.permute.xlu0 %1242
    %1244 = vrot.lane.b32.xlu0 %v1223, 120
    %v1245 = vpop.permute.xlu0 %1244
    %1246 = vrot.lane.b32.xlu0 %v1224, 120
    %v1247 = vpop.permute.xlu0 %1246
    %1248 = vrot.lane.b32.xlu0 %v1225, 120
    %v1249 = vpop.permute.xlu0 %1248
    %v1250 = vsel %vm327, %v1218, 0
    %v1252 = vsel %vm327, %v1219, 0
    %v1254 = vsel %vm327, %v1220, 0
    %v1256 = vsel %vm327, %v1221, 0
    %v1258 = vsel %vm327, %v1222, 0
    %v1260 = vsel %vm327, %v1223, 0
    %v1262 = vsel %vm327, %v1224, 0
    %v1264 = vsel %vm327, %v1225, 0
    %v1266 = vsel %vm327, %v1235, 0
    %v1268 = vsel %vm327, %v1237, 0
    %v1270 = vsel %vm327, %v1239, 0
    %v1272 = vsel %vm327, %v1241, 0
    %v1274 = vsel %vm327, %v1243, 0
    %v1276 = vsel %vm327, %v1245, 0
    %v1278 = vsel %vm327, %v1247, 0
    %v1280 = vsel %vm327, %v1249, 0
    %1282 = vmatprep.subr.mxu0 0.0
    %1283 = vmatpush1.xpose.msra.mxu0 %v1266
    %1284 = vmatprep.subr.mxu0 0.0
    %1285 = vmatpush1.xpose.msra.mxu0 %v1268
    %1286 = vmatprep.subr.mxu0 0.0
    %1287 = vmatpush1.xpose.msra.mxu0 %v1270
    %1288 = vmatprep.subr.mxu0 0.0
    %1289 = vmatpush1.xpose.msra.mxu0 %v1272
    %1290 = vmatprep.subr.mxu0 0.0
    %1291 = vmatpush1.xpose.msra.mxu0 %v1274
    %1292 = vmatprep.subr.mxu0 0.0
    %1293 = vmatpush1.xpose.msra.mxu0 %v1276
    %1294 = vmatprep.subr.mxu0 0.0
    %1295 = vmatpush1.xpose.msra.mxu0 %v1278
    %1296 = vmatprep.subr.mxu0 0.0
    %1297 = vmatpush1.xpose.msra.mxu0 %v1280
    %1298 = vmatprep.subr.mxu0 0.0
    %1299 = vmatpush1.xpose.msra.mxu0 0.0
    %1300 = vmatprep.subr.mxu0 0.0
    %1301 = vmatpush1.xpose.msra.mxu0 0.0
    %1302 = vmatprep.subr.mxu0 0.0
    %1303 = vmatpush1.xpose.msra.mxu0 0.0
    %1304 = vmatprep.subr.mxu0 0.0
    %1305 = vmatpush1.xpose.msra.mxu0 0.0
    %1306 = vmatprep.subr.mxu0 0.0
    %1307 = vmatpush1.xpose.msra.mxu0 0.0
    %1308 = vmatprep.subr.mxu0 0.0
    %1309 = vmatpush1.xpose.msra.mxu0 0.0
    %1310 = vmatprep.subr.mxu0 0.0
    %1311 = vmatpush1.xpose.msra.mxu0 0.0
    %1312 = vmatprep.subr.mxu0 0.0
    %1313 = vmatpush1.xpose.msra.mxu0 0.0
    %1314 = vmatprep.subr.mxu0 0.0
    %1315 = vmatpush1.xpose.msra.mxu0 0.0
    %1316 = vmatprep.subr.mxu0 0.0
    %1317 = vmatpush1.xpose.msra.mxu0 0.0
    %1318 = vmatprep.subr.mxu0 0.0
    %1319 = vmatpush1.xpose.msra.mxu0 0.0
    %1320 = vmatprep.subr.mxu0 0.0
    %1321 = vmatpush1.xpose.msra.mxu0 0.0
    %1322 = vmatprep.subr.mxu0 0.0
    %1323 = vmatpush1.xpose.msra.mxu0 0.0
    %1324 = vmatprep.subr.mxu0 0.0
    %1325 = vmatpush1.xpose.msra.mxu0 0.0
    %1326 = vmatprep.subr.mxu0 0.0
    %1327 = vmatpush1.xpose.msra.mxu0 0.0
    %1328 = vmatprep.subr.mxu0 0.0
    %1329 = vmatpush1.xpose.msra.mxu0 0.0
    %1330 = vmatprep.subr.mxu0 0.0
    %1331 = vmatpush1.xpose.msra.mxu0 0.0
    %1332 = vmatprep.subr.mxu0 0.0
    %1333 = vmatpush1.xpose.msra.mxu0 0.0
    %1334 = vmatprep.subr.mxu0 0.0
    %1335 = vmatpush1.xpose.msra.mxu0 0.0
    %1336 = vmatprep.subr.mxu0 0.0
    %1337 = vmatpush1.xpose.msra.mxu0 0.0
    %1338 = vmatprep.subr.mxu0 0.0
    %1339 = vmatpush1.xpose.msra.mxu0 0.0
    %1340 = vmatprep.subr.mxu0 0.0
    %1341 = vmatpush1.xpose.msra.mxu0 0.0
    %1342 = vmatprep.subr.mxu0 0.0
    %1343 = vmatpush1.xpose.msra.mxu0 0.0
    %1344 = vmatprep.subr.mxu0 0.0
    %1345 = vmatpush1.xpose.msra.mxu0 0.0
    %1346 = vmatprep.mubr.f32.mxu0 0.0
    %1347 = vmatmul.mubr.f32.gmra.mrb[0].mxu0 %v1250
    %v1348 = vpop.f32.mrb[0].mxu0
    %v1349 = vadd.f32 %v172, %v1348
    %v1350 = vpop.f32.mrb[0].mxu0
    %1351 = vmatprep.mubr.f32.mxu0 0.0
    %1352 = vmatmul.mubr.f32.gmra.mrb[0].mxu0 %v1252
    %v1353 = vpop.f32.mrb[0].mxu0
    %v1354 = vadd.f32 %v173, %v1353
    %v1355 = vpop.f32.mrb[0].mxu0
    %1356 = vmatprep.mubr.f32.mxu0 0.0
    %1357 = vmatmul.mubr.f32.gmra.mrb[0].mxu0 %v1254
    %v1358 = vpop.f32.mrb[0].mxu0
    %v1359 = vadd.f32 %v174, %v1358
    %v1360 = vpop.f32.mrb[0].mxu0
    %1361 = vmatprep.mubr.f32.mxu0 0.0
    %1362 = vmatmul.mubr.f32.gmra.mrb[0].mxu0 %v1256
    %v1363 = vpop.f32.mrb[0].mxu0
    %v1364 = vadd.f32 %v175, %v1363
    %v1365 = vpop.f32.mrb[0].mxu0
    %1366 = vmatprep.mubr.f32.mxu0 0.0
    %1367 = vmatmul.mubr.f32.gmra.mrb[0].mxu0 %v1258
    %v1368 = vpop.f32.mrb[0].mxu0
    %v1369 = vadd.f32 %v176, %v1368
    %v1370 = vpop.f32.mrb[0].mxu0
    %1371 = vmatprep.mubr.f32.mxu0 0.0
    %1372 = vmatmul.mubr.f32.gmra.mrb[0].mxu0 %v1260
    %v1373 = vpop.f32.mrb[0].mxu0
    %v1374 = vadd.f32 %v177, %v1373
    %v1375 = vpop.f32.mrb[0].mxu0
    %1376 = vmatprep.mubr.f32.mxu0 0.0
    %1377 = vmatmul.mubr.f32.gmra.mrb[0].mxu0 %v1262
    %v1378 = vpop.f32.mrb[0].mxu0
    %v1379 = vadd.f32 %v178, %v1378
    %v1380 = vpop.f32.mrb[0].mxu0
    %1381 = vmatprep.mubr.f32.mxu0 0.0
    %1382 = vmatmul.mubr.f32.gmra.mrb[0].mxu0 %v1264
    %v1383 = vpop.f32.mrb[0].mxu0
    %v1384 = vadd.f32 %v179, %v1383
    %v1385 = vpop.f32.mrb[0].mxu0
    %1386 = vdwg.mxu0
    %v1387 = vsel %vm56, %v1349, -inf
    %1388 = vmax.xlane.f32.xlu0 %v1387
    %v1389 = vpop.xlane.xlu0 %1388
    %v1390 = vsel %vm56, %v1354, -inf
    %1391 = vmax.xlane.f32.xlu0 %v1390
    %v1392 = vpop.xlane.xlu0 %1391
    %v1393 = vsel %vm56, %v1359, -inf
    %1394 = vmax.xlane.f32.xlu0 %v1393
    %v1395 = vpop.xlane.xlu0 %1394
    %v1396 = vsel %vm56, %v1364, -inf
    %1397 = vmax.xlane.f32.xlu0 %v1396
    %v1398 = vpop.xlane.xlu0 %1397
    %v1399 = vsel %vm56, %v1369, -inf
    %1400 = vmax.xlane.f32.xlu0 %v1399
    %v1401 = vpop.xlane.xlu0 %1400
    %v1402 = vsel %vm56, %v1374, -inf
    %1403 = vmax.xlane.f32.xlu0 %v1402
    %v1404 = vpop.xlane.xlu0 %1403
    %v1405 = vsel %vm56, %v1379, -inf
    %1406 = vmax.xlane.f32.xlu0 %v1405
    %v1407 = vpop.xlane.xlu0 %1406
    %v1408 = vsel %vm56, %v1384, -inf
    %1409 = vmax.xlane.f32.xlu0 %v1408
    %v1410 = vpop.xlane.xlu0 %1409
    %v1411 = vsub.f32 %v1349, %v1389
    %v1412 = vsub.f32 %v1354, %v1392
    %v1413 = vsub.f32 %v1359, %v1395
    %v1414 = vsub.f32 %v1364, %v1398
    %v1415 = vsub.f32 %v1369, %v1401
    %v1416 = vsub.f32 %v1374, %v1404
    %v1417 = vsub.f32 %v1379, %v1407
    %v1418 = vsub.f32 %v1384, %v1410
    %v1419 = vmul.f32 %v1411, 1.442695
    %v1420 = vpow.pop %v1419
    %v1421 = vmul.f32 %v1412, 1.442695
    %v1422 = vpow.pop %v1421
    %v1423 = vmul.f32 %v1413, 1.442695
    %v1424 = vpow.pop %v1423
    %v1425 = vmul.f32 %v1414, 1.442695
    %v1426 = vpow.pop %v1425
    %v1427 = vmul.f32 %v1415, 1.442695
    %v1428 = vpow.pop %v1427
    %v1429 = vmul.f32 %v1416, 1.442695
    %v1430 = vpow.pop %v1429
    %v1431 = vmul.f32 %v1417, 1.442695
    %v1432 = vpow.pop %v1431
    %v1433 = vmul.f32 %v1418, 1.442695
    %v1434 = vpow.pop %v1433
    %v1435 = vsel %vm56, %v1420, 0.0
    %1436 = vadd.xlane.f32.xlu0 %v1435
    %v1437 = vpop.xlane.xlu0 %1436
    %v1438 = vsel %vm56, %v1422, 0.0
    %1439 = vadd.xlane.f32.xlu0 %v1438
    %v1440 = vpop.xlane.xlu0 %1439
    %v1441 = vsel %vm56, %v1424, 0.0
    %1442 = vadd.xlane.f32.xlu0 %v1441
    %v1443 = vpop.xlane.xlu0 %1442
    %v1444 = vsel %vm56, %v1426, 0.0
    %1445 = vadd.xlane.f32.xlu0 %v1444
    %v1446 = vpop.xlane.xlu0 %1445
    %v1447 = vsel %vm56, %v1428, 0.0
    %1448 = vadd.xlane.f32.xlu0 %v1447
    %v1449 = vpop.xlane.xlu0 %1448
    %v1450 = vsel %vm56, %v1430, 0.0
    %1451 = vadd.xlane.f32.xlu0 %v1450
    %v1452 = vpop.xlane.xlu0 %1451
    %v1453 = vsel %vm56, %v1432, 0.0
    %1454 = vadd.xlane.f32.xlu0 %v1453
    %v1455 = vpop.xlane.xlu0 %1454
    %v1456 = vsel %vm56, %v1434, 0.0
    %1457 = vadd.xlane.f32.xlu0 %v1456
    %v1458 = vpop.xlane.xlu0 %1457
    %v1459 = vrcp.pop %v1437
    %v1460 = vrcp.pop %v1440
    %v1461 = vrcp.pop %v1443
    %v1462 = vrcp.pop %v1446
    %v1463 = vrcp.pop %v1449
    %v1464 = vrcp.pop %v1452
    %v1465 = vrcp.pop %v1455
    %v1466 = vrcp.pop %v1458
    %v1467 = vmul.f32 %v1420, %v1459
    %v1468 = vmul.f32 %v1422, %v1460
    %v1469 = vmul.f32 %v1424, %v1461
    %v1470 = vmul.f32 %v1426, %v1462
    %v1471 = vmul.f32 %v1428, %v1463
    %v1472 = vmul.f32 %v1430, %v1464
    %v1473 = vmul.f32 %v1432, %v1465
    %v1474 = vmul.f32 %v1434, %v1466
    %1475 = vrot.lane.b32.xlu0 %v1218, 112
    %v1476 = vpop.permute.xlu0 %1475
    %1477 = vrot.lane.b32.xlu0 %v1219, 112
    %v1478 = vpop.permute.xlu0 %1477
    %1479 = vrot.lane.b32.xlu0 %v1220, 112
    %v1480 = vpop.permute.xlu0 %1479
    %1481 = vrot.lane.b32.xlu0 %v1221, 112
    %v1482 = vpop.permute.xlu0 %1481
    %1483 = vrot.lane.b32.xlu0 %v1222, 112
    %v1484 = vpop.permute.xlu0 %1483
    %1485 = vrot.lane.b32.xlu0 %v1223, 112
    %v1486 = vpop.permute.xlu0 %1485
    %1487 = vrot.lane.b32.xlu0 %v1224, 112
    %v1488 = vpop.permute.xlu0 %1487
    %1489 = vrot.lane.b32.xlu0 %v1225, 112
    %v1490 = vpop.permute.xlu0 %1489
    %v1500 = vsel %vm56, %v1467, 0
    %v1503 = vsel %vm56, %v1468, 0
    %v1506 = vsel %vm56, %v1469, 0
    %v1509 = vsel %vm56, %v1470, 0
    %v1512 = vsel %vm56, %v1471, 0
    %v1515 = vsel %vm56, %v1472, 0
    %v1518 = vsel %vm56, %v1473, 0
    %v1521 = vsel %vm56, %v1474, 0
    %1523 = vmatprep.subr.mxu0 0.0
    %1524 = vmatpush1.msra.mxu0 %v1476
    %1525 = vmatprep.subr.mxu0 0.0
    %1526 = vmatpush1.msra.mxu0 %v1478
    %1527 = vmatprep.subr.mxu0 0.0
    %1528 = vmatpush1.msra.mxu0 %v1480
    %1529 = vmatprep.subr.mxu0 0.0
    %1530 = vmatpush1.msra.mxu0 %v1482
    %1531 = vmatprep.subr.mxu0 0.0
    %1532 = vmatpush1.msra.mxu0 %v1484
    %1533 = vmatprep.subr.mxu0 0.0
    %1534 = vmatpush1.msra.mxu0 %v1486
    %1535 = vmatprep.subr.mxu0 0.0
    %1536 = vmatpush1.msra.mxu0 %v1488
    %1537 = vmatprep.subr.mxu0 0.0
    %1538 = vmatpush1.msra.mxu0 %v1490
    %1539 = vmatprep.subr.mxu0 0.0
    %1540 = vmatpush1.msra.mxu0 0.0
    %1541 = vmatprep.subr.mxu0 0.0
    %1542 = vmatpush1.msra.mxu0 0.0
    %1543 = vmatprep.subr.mxu0 0.0
    %1544 = vmatpush1.msra.mxu0 0.0
    %1545 = vmatprep.subr.mxu0 0.0
    %1546 = vmatpush1.msra.mxu0 0.0
    %1547 = vmatprep.subr.mxu0 0.0
    %1548 = vmatpush1.msra.mxu0 0.0
    %1549 = vmatprep.subr.mxu0 0.0
    %1550 = vmatpush1.msra.mxu0 0.0
    %1551 = vmatprep.subr.mxu0 0.0
    %1552 = vmatpush1.msra.mxu0 0.0
    %1553 = vmatprep.subr.mxu0 0.0
    %1554 = vmatpush1.msra.mxu0 0.0
    %1555 = vmatprep.subr.mxu0 0.0
    %1556 = vmatpush1.msra.mxu0 0.0
    %1557 = vmatprep.subr.mxu0 0.0
    %1558 = vmatpush1.msra.mxu0 0.0
    %1559 = vmatprep.subr.mxu0 0.0
    %1560 = vmatpush1.msra.mxu0 0.0
    %1561 = vmatprep.subr.mxu0 0.0
    %1562 = vmatpush1.msra.mxu0 0.0
    %1563 = vmatprep.subr.mxu0 0.0
    %1564 = vmatpush1.msra.mxu0 0.0
    %1565 = vmatprep.subr.mxu0 0.0
    %1566 = vmatpush1.msra.mxu0 0.0
    %1567 = vmatprep.subr.mxu0 0.0
    %1568 = vmatpush1.msra.mxu0 0.0
    %1569 = vmatprep.subr.mxu0 0.0
    %1570 = vmatpush1.msra.mxu0 0.0
    %1571 = vmatprep.subr.mxu0 0.0
    %1572 = vmatpush1.msra.mxu0 0.0
    %1573 = vmatprep.subr.mxu0 0.0
    %1574 = vmatpush1.msra.mxu0 0.0
    %1575 = vmatprep.subr.mxu0 0.0
    %1576 = vmatpush1.msra.mxu0 0.0
    %1577 = vmatprep.subr.mxu0 0.0
    %1578 = vmatpush1.msra.mxu0 0.0
    %1579 = vmatprep.subr.mxu0 0.0
    %1580 = vmatpush1.msra.mxu0 0.0
    %1581 = vmatprep.subr.mxu0 0.0
    %1582 = vmatpush1.msra.mxu0 0.0
    %1583 = vmatprep.subr.mxu0 0.0
    %1584 = vmatpush1.msra.mxu0 0.0
    %1585 = vmatprep.subr.mxu0 0.0
    %1586 = vmatpush1.msra.mxu0 0.0
    %1587 = vmatprep.mubr.f32.mxu0 0.0
    %1588 = vmatmul.mubr.f32.gmra.mrb[0].mxu0 %v1500
    %v1589 = vpop.f32.mrb[0].mxu0
    %v1590 = vadd.f32 0.0, %v1589
    %v1591 = vpop.f32.mrb[0].mxu0
    %1592 = vmatprep.mubr.f32.mxu0 0.0
    %1593 = vmatmul.mubr.f32.gmra.mrb[0].mxu0 %v1503
    %v1594 = vpop.f32.mrb[0].mxu0
    %v1595 = vadd.f32 0.0, %v1594
    %v1596 = vpop.f32.mrb[0].mxu0
    %1597 = vmatprep.mubr.f32.mxu0 0.0
    %1598 = vmatmul.mubr.f32.gmra.mrb[0].mxu0 %v1506
    %v1599 = vpop.f32.mrb[0].mxu0
    %v1600 = vadd.f32 0.0, %v1599
    %v1601 = vpop.f32.mrb[0].mxu0
    %1602 = vmatprep.mubr.f32.mxu0 0.0
    %1603 = vmatmul.mubr.f32.gmra.mrb[0].mxu0 %v1509
    %v1604 = vpop.f32.mrb[0].mxu0
    %v1605 = vadd.f32 0.0, %v1604
    %v1606 = vpop.f32.mrb[0].mxu0
    %1607 = vmatprep.mubr.f32.mxu0 0.0
    %1608 = vmatmul.mubr.f32.gmra.mrb[0].mxu0 %v1512
    %v1609 = vpop.f32.mrb[0].mxu0
    %v1610 = vadd.f32 0.0, %v1609
    %v1611 = vpop.f32.mrb[0].mxu0
    %1612 = vmatprep.mubr.f32.mxu0 0.0
    %1613 = vmatmul.mubr.f32.gmra.mrb[0].mxu0 %v1515
    %v1614 = vpop.f32.mrb[0].mxu0
    %v1615 = vadd.f32 0.0, %v1614
    %v1616 = vpop.f32.mrb[0].mxu0
    %1617 = vmatprep.mubr.f32.mxu0 0.0
    %1618 = vmatmul.mubr.f32.gmra.mrb[0].mxu0 %v1518
    %v1619 = vpop.f32.mrb[0].mxu0
    %v1620 = vadd.f32 0.0, %v1619
    %v1621 = vpop.f32.mrb[0].mxu0
    %1622 = vmatprep.mubr.f32.mxu0 0.0
    %1623 = vmatmul.mubr.f32.gmra.mrb[0].mxu0 %v1521
    %v1624 = vpop.f32.mrb[0].mxu0
    %v1625 = vadd.f32 0.0, %v1624
    %v1626 = vpop.f32.mrb[0].mxu0
    %1627 = vdwg.mxu0
    %1628 = vst.msk [vmem:[#allocation3] sm:$0xff] %vm327, %v1590
    %1630 = vrot.lane.b32.xlu0 %v1595, 8
    %v1631 = vpop.permute.xlu0 %1630
    %1633 = vst.msk [vmem:[#allocation3] sm:$0xff] %vm711, %v1631
    %1635 = vrot.lane.b32.xlu0 %v1600, 16
    %v1636 = vpop.permute.xlu0 %1635
    %1638 = vst.msk [vmem:[#allocation3] sm:$0xff] %vm717, %v1636
    %1640 = vrot.lane.b32.xlu0 %v1605, 24
    %v1641 = vpop.permute.xlu0 %1640
    %1643 = vst.msk [vmem:[#allocation3] sm:$0xff] %vm723, %v1641
    %1644 = vst.msk [vmem:[#allocation3 + $0x8] sm:$0xff] %vm327, %v1610
    %1646 = vrot.lane.b32.xlu0 %v1615, 8
    %v1647 = vpop.permute.xlu0 %1646
    %1649 = vst.msk [vmem:[#allocation3 + $0x8] sm:$0xff] %vm711, %v1647
    %1651 = vrot.lane.b32.xlu0 %v1620, 16
    %v1652 = vpop.permute.xlu0 %1651
    %1654 = vst.msk [vmem:[#allocation3 + $0x8] sm:$0xff] %vm717, %v1652
    %1656 = vrot.lane.b32.xlu0 %v1625, 24
    %v1657 = vpop.permute.xlu0 %1656
    %1659 = vst.msk [vmem:[#allocation3 + $0x8] sm:$0xff] %vm723, %v1657
    %v1660 = vld [vmem:[#allocation3] sm:$0xff]
    %v1661 = vld [vmem:[#allocation3 + $0x8] sm:$0xff]
    %v1662 = vld [vmem:[%s1103 + $0x8] sm:$0xff]
    %v1663 = vld [vmem:[%s1103 + $0x18] sm:$0xff]
    %v1664 = vld [vmem:[%s1103 + $0x28] sm:$0xff]
    %v1665 = vld [vmem:[%s1103 + $0x38] sm:$0xff]
    %v1666 = vld [vmem:[%s5 + $0x21] ss:$0 sm:$0xff]
    %v1668 = vsel %vm140, %v1660, 0
    %v1671 = vsel %vm140, %v1661, 0
    %1673 = vmatprep.subr.mxu0 0.0
    %1674 = vmatpush1.msra.mxu0 %v1662
    %1675 = vmatprep.subr.mxu0 0.0
    %1676 = vmatpush1.msra.mxu0 %v1663
    %1677 = vmatprep.subr.mxu0 0.0
    %1678 = vmatpush1.msra.mxu0 %v1664
    %1679 = vmatprep.subr.mxu0 0.0
    %1680 = vmatpush1.msra.mxu0 %v1665
    %1681 = vmatprep.subr.mxu0 0.0
    %1682 = vmatpush1.msra.mxu0 0.0
    %1683 = vmatprep.subr.mxu0 0.0
    %1684 = vmatpush1.msra.mxu0 0.0
    %1685 = vmatprep.subr.mxu0 0.0
    %1686 = vmatpush1.msra.mxu0 0.0
    %1687 = vmatprep.subr.mxu0 0.0
    %1688 = vmatpush1.msra.mxu0 0.0
    %1689 = vmatprep.subr.mxu0 0.0
    %1690 = vmatpush1.msra.mxu0 0.0
    %1691 = vmatprep.subr.mxu0 0.0
    %1692 = vmatpush1.msra.mxu0 0.0
    %1693 = vmatprep.subr.mxu0 0.0
    %1694 = vmatpush1.msra.mxu0 0.0
    %1695 = vmatprep.subr.mxu0 0.0
    %1696 = vmatpush1.msra.mxu0 0.0
    %1697 = vmatprep.subr.mxu0 0.0
    %1698 = vmatpush1.msra.mxu0 0.0
    %1699 = vmatprep.subr.mxu0 0.0
    %1700 = vmatpush1.msra.mxu0 0.0
    %1701 = vmatprep.subr.mxu0 0.0
    %1702 = vmatpush1.msra.mxu0 0.0
    %1703 = vmatprep.subr.mxu0 0.0
    %1704 = vmatpush1.msra.mxu0 0.0
    %1705 = vmatprep.subr.mxu0 0.0
    %1706 = vmatpush1.msra.mxu0 0.0
    %1707 = vmatprep.subr.mxu0 0.0
    %1708 = vmatpush1.msra.mxu0 0.0
    %1709 = vmatprep.subr.mxu0 0.0
    %1710 = vmatpush1.msra.mxu0 0.0
    %1711 = vmatprep.subr.mxu0 0.0
    %1712 = vmatpush1.msra.mxu0 0.0
    %1713 = vmatprep.subr.mxu0 0.0
    %1714 = vmatpush1.msra.mxu0 0.0
    %1715 = vmatprep.subr.mxu0 0.0
    %1716 = vmatpush1.msra.mxu0 0.0
    %1717 = vmatprep.subr.mxu0 0.0
    %1718 = vmatpush1.msra.mxu0 0.0
    %1719 = vmatprep.subr.mxu0 0.0
    %1720 = vmatpush1.msra.mxu0 0.0
    %1721 = vmatprep.subr.mxu0 0.0
    %1722 = vmatpush1.msra.mxu0 0.0
    %1723 = vmatprep.subr.mxu0 0.0
    %1724 = vmatpush1.msra.mxu0 0.0
    %1725 = vmatprep.subr.mxu0 0.0
    %1726 = vmatpush1.msra.mxu0 0.0
    %1727 = vmatprep.subr.mxu0 0.0
    %1728 = vmatpush1.msra.mxu0 0.0
    %1729 = vmatprep.subr.mxu0 0.0
    %1730 = vmatpush1.msra.mxu0 0.0
    %1731 = vmatprep.subr.mxu0 0.0
    %1732 = vmatpush1.msra.mxu0 0.0
    %1733 = vmatprep.subr.mxu0 0.0
    %1734 = vmatpush1.msra.mxu0 0.0
    %1735 = vmatprep.subr.mxu0 0.0
    %1736 = vmatpush1.msra.mxu0 0.0
    %1737 = vmatprep.mubr.f32.mxu0 0.0
    %1738 = vmatmul.mubr.f32.gmra.mrb[0].mxu0 %v1668
    %v1739 = vpop.f32.mrb[0].mxu0
    %v1740 = vadd.f32 %v1666, %v1739
    %v1741 = vpop.f32.mrb[0].mxu0
    %1742 = vmatprep.mubr.f32.mxu0 0.0
    %1743 = vmatmul.mubr.f32.gmra.mrb[0].mxu0 %v1671
    %v1744 = vpop.f32.mrb[0].mxu0
    %v1745 = vadd.f32 %v1666, %v1744
    %v1746 = vpop.f32.mrb[0].mxu0
    %1747 = vdwg.mxu0
    %v1748 = vadd.f32 %v1101, %v1740
    %v1749 = vadd.f32 %v1102, %v1745
    %v1750 = vld [vmem:[%s5 + $0x22] ss:$0 sm:$0xff]
    %v1751 = vld [vmem:[%s5 + $0x23] ss:$0 sm:$0xff]
    %v1752 = vsel %vm140, %v1748, 0.0
    %1753 = vadd.xlane.f32.xlu0 %v1752
    %v1754 = vpop.xlane.xlu0 %1753
    %v1755 = vsel %vm140, %v1749, 0.0
    %1756 = vadd.xlane.f32.xlu0 %v1755
    %v1757 = vpop.xlane.xlu0 %1756
    %v1758 = vmul.f32 %v1754, %v147
    %v1759 = vmul.f32 %v1757, %v147
    %v1760 = vsub.f32 %v1748, %v1758
    %v1761 = vsub.f32 %v1749, %v1759
    %v1762 = vmul.f32 %v1760, %v1760
    %v1763 = vmul.f32 %v1761, %v1761
    %v1764 = vsel %vm140, %v1762, 0.0
    %1765 = vadd.xlane.f32.xlu0 %v1764
    %v1766 = vpop.xlane.xlu0 %1765
    %v1767 = vsel %vm140, %v1763, 0.0
    %1768 = vadd.xlane.f32.xlu0 %v1767
    %v1769 = vpop.xlane.xlu0 %1768
    %v1770 = vmul.f32 %v1766, %v147
    %v1771 = vmul.f32 %v1769, %v147
    %v1772 = vadd.f32 %v1770, 1e-12
    %v1773 = vadd.f32 %v1771, 1e-12
    %v1774 = vrsqrt.pop %v1772
    %v1775 = vrsqrt.pop %v1773
    %v1776 = vmul.f32 %v1760, %v1774
    %v1777 = vmul.f32 %v1761, %v1775
    %v1778 = vmul.f32 %v1776, %v1750
    %v1779 = vmul.f32 %v1777, %v1750
    %v1780 = vadd.f32 %v1778, %v1751
    %v1781 = vadd.f32 %v1779, %v1751
    %s1782 = scalar_lea.vmem %s4, 64
    %v1783 = vld [vmem:[%s1782] sm:$0xff]
    %v1784 = vld [vmem:[%s1782 + $0x8] sm:$0xff]
    %v1785 = vld [vmem:[%s1782 + $0x10] sm:$0xff]
    %v1786 = vld [vmem:[%s1782 + $0x18] sm:$0xff]
    %v1787 = vld [vmem:[%s1782 + $0x20] sm:$0xff]
    %v1788 = vld [vmem:[%s1782 + $0x28] sm:$0xff]
    %v1789 = vld [vmem:[%s1782 + $0x30] sm:$0xff]
    %v1790 = vld [vmem:[%s1782 + $0x38] sm:$0xff]
    %v1791 = vld [vmem:[%s5 + $0x24] ss:$0 sm:$0xff]
    %1796 = vrot.lane.b32.xlu0 %v1662, 96
    %v1797 = vpop.permute.xlu0 %1796
    %1798 = vrot.lane.b32.xlu0 %v1663, 96
    %v1799 = vpop.permute.xlu0 %1798
    %1800 = vrot.lane.b32.xlu0 %v1664, 96
    %v1801 = vpop.permute.xlu0 %1800
    %1802 = vrot.lane.b32.xlu0 %v1665, 96
    %v1803 = vpop.permute.xlu0 %1802
    %v1809 = vsel %vm140, %v1780, 0
    %v1812 = vsel %vm140, %v1781, 0
    %1814 = vmatprep.subr.mxu0 0.0
    %1815 = vmatpush1.msra.mxu0 %v1797
    %1816 = vmatprep.subr.mxu0 0.0
    %1817 = vmatpush1.msra.mxu0 %v1799
    %1818 = vmatprep.subr.mxu0 0.0
    %1819 = vmatpush1.msra.mxu0 %v1801
    %1820 = vmatprep.subr.mxu0 0.0
    %1821 = vmatpush1.msra.mxu0 %v1803
    %1822 = vmatprep.subr.mxu0 0.0
    %1823 = vmatpush1.msra.mxu0 0.0
    %1824 = vmatprep.subr.mxu0 0.0
    %1825 = vmatpush1.msra.mxu0 0.0
    %1826 = vmatprep.subr.mxu0 0.0
    %1827 = vmatpush1.msra.mxu0 0.0
    %1828 = vmatprep.subr.mxu0 0.0
    %1829 = vmatpush1.msra.mxu0 0.0
    %1830 = vmatprep.subr.mxu0 0.0
    %1831 = vmatpush1.msra.mxu0 0.0
    %1832 = vmatprep.subr.mxu0 0.0
    %1833 = vmatpush1.msra.mxu0 0.0
    %1834 = vmatprep.subr.mxu0 0.0
    %1835 = vmatpush1.msra.mxu0 0.0
    %1836 = vmatprep.subr.mxu0 0.0
    %1837 = vmatpush1.msra.mxu0 0.0
    %1838 = vmatprep.subr.mxu0 0.0
    %1839 = vmatpush1.msra.mxu0 0.0
    %1840 = vmatprep.subr.mxu0 0.0
    %1841 = vmatpush1.msra.mxu0 0.0
    %1842 = vmatprep.subr.mxu0 0.0
    %1843 = vmatpush1.msra.mxu0 0.0
    %1844 = vmatprep.subr.mxu0 0.0
    %1845 = vmatpush1.msra.mxu0 0.0
    %1846 = vmatprep.subr.mxu0 0.0
    %1847 = vmatpush1.msra.mxu0 0.0
    %1848 = vmatprep.subr.mxu0 0.0
    %1849 = vmatpush1.msra.mxu0 0.0
    %1850 = vmatprep.subr.mxu0 0.0
    %1851 = vmatpush1.msra.mxu0 0.0
    %1852 = vmatprep.subr.mxu0 0.0
    %1853 = vmatpush1.msra.mxu0 0.0
    %1854 = vmatprep.subr.mxu0 0.0
    %1855 = vmatpush1.msra.mxu0 0.0
    %1856 = vmatprep.subr.mxu0 0.0
    %1857 = vmatpush1.msra.mxu0 0.0
    %1858 = vmatprep.subr.mxu0 0.0
    %1859 = vmatpush1.msra.mxu0 0.0
    %1860 = vmatprep.subr.mxu0 0.0
    %1861 = vmatpush1.msra.mxu0 0.0
    %1862 = vmatprep.subr.mxu0 0.0
    %1863 = vmatpush1.msra.mxu0 0.0
    %1864 = vmatprep.subr.mxu0 0.0
    %1865 = vmatpush1.msra.mxu0 0.0
    %1866 = vmatprep.subr.mxu0 0.0
    %1867 = vmatpush1.msra.mxu0 0.0
    %1868 = vmatprep.subr.mxu0 0.0
    %1869 = vmatpush1.msra.mxu0 0.0
    %1870 = vmatprep.subr.mxu0 0.0
    %1871 = vmatpush1.msra.mxu0 0.0
    %1872 = vmatprep.subr.mxu0 0.0
    %1873 = vmatpush1.msra.mxu0 0.0
    %1874 = vmatprep.subr.mxu0 0.0
    %1875 = vmatpush1.msra.mxu0 0.0
    %1876 = vmatprep.subr.mxu0 0.0
    %1877 = vmatpush1.msra.mxu0 0.0
    %1878 = vmatprep.mubr.f32.mxu0 0.0
    %1879 = vmatmul.mubr.f32.gmra.mrb[0].mxu0 %v1809
    %v1880 = vpop.f32.mrb[0].mxu0
    %v1881 = vadd.f32 %v1791, %v1880
    %v1882 = vpop.f32.mrb[0].mxu0
    %1883 = vmatprep.mubr.f32.mxu0 0.0
    %1884 = vmatmul.mubr.f32.gmra.mrb[0].mxu0 %v1812
    %v1885 = vpop.f32.mrb[0].mxu0
    %v1886 = vadd.f32 %v1791, %v1885
    %v1887 = vpop.f32.mrb[0].mxu0
    %1888 = vdwg.mxu0
    %v1889 = vmul.f32 %v1881, 0.5
    %v1890 = vmul.f32 %v1886, 0.5
    %v1891 = vmul.f32 %v1881, 0.044715
    %v1892 = vmul.f32 %v1886, 0.044715
    %v1893 = vmul.f32 %v1891, %v1881
    %v1894 = vmul.f32 %v1892, %v1886
    %v1895 = vmul.f32 %v1893, %v1881
    %v1896 = vmul.f32 %v1894, %v1886
    %v1897 = vadd.f32 %v1881, %v1895
    %v1898 = vadd.f32 %v1886, %v1896
    %v1899 = vmul.f32 %v1897, 0.7978846
    %v1900 = vmul.f32 %v1898, 0.7978846
    %v1901 = vtanh.pop %v1899
    %v1902 = vtanh.pop %v1900
    %v1903 = vadd.f32 %v1901, 1.0
    %v1904 = vadd.f32 %v1902, 1.0
    %v1905 = vmul.f32 %v1889, %v1903
    %v1906 = vmul.f32 %v1890, %v1904
    %v1907 = vld [vmem:[%s5 + $0x25] ss:$0 sm:$0xff]
    %v1909 = vsel %vm56, %v1905, 0
    %v1912 = vsel %vm56, %v1906, 0
    %1914 = vmatprep.subr.mxu0 0.0
    %1915 = vmatpush1.msra.mxu0 %v1783
    %1916 = vmatprep.subr.mxu0 0.0
    %1917 = vmatpush1.msra.mxu0 %v1784
    %1918 = vmatprep.subr.mxu0 0.0
    %1919 = vmatpush1.msra.mxu0 %v1785
    %1920 = vmatprep.subr.mxu0 0.0
    %1921 = vmatpush1.msra.mxu0 %v1786
    %1922 = vmatprep.subr.mxu0 0.0
    %1923 = vmatpush1.msra.mxu0 %v1787
    %1924 = vmatprep.subr.mxu0 0.0
    %1925 = vmatpush1.msra.mxu0 %v1788
    %1926 = vmatprep.subr.mxu0 0.0
    %1927 = vmatpush1.msra.mxu0 %v1789
    %1928 = vmatprep.subr.mxu0 0.0
    %1929 = vmatpush1.msra.mxu0 %v1790
    %1930 = vmatprep.subr.mxu0 0.0
    %1931 = vmatpush1.msra.mxu0 0.0
    %1932 = vmatprep.subr.mxu0 0.0
    %1933 = vmatpush1.msra.mxu0 0.0
    %1934 = vmatprep.subr.mxu0 0.0
    %1935 = vmatpush1.msra.mxu0 0.0
    %1936 = vmatprep.subr.mxu0 0.0
    %1937 = vmatpush1.msra.mxu0 0.0
    %1938 = vmatprep.subr.mxu0 0.0
    %1939 = vmatpush1.msra.mxu0 0.0
    %1940 = vmatprep.subr.mxu0 0.0
    %1941 = vmatpush1.msra.mxu0 0.0
    %1942 = vmatprep.subr.mxu0 0.0
    %1943 = vmatpush1.msra.mxu0 0.0
    %1944 = vmatprep.subr.mxu0 0.0
    %1945 = vmatpush1.msra.mxu0 0.0
    %1946 = vmatprep.subr.mxu0 0.0
    %1947 = vmatpush1.msra.mxu0 0.0
    %1948 = vmatprep.subr.mxu0 0.0
    %1949 = vmatpush1.msra.mxu0 0.0
    %1950 = vmatprep.subr.mxu0 0.0
    %1951 = vmatpush1.msra.mxu0 0.0
    %1952 = vmatprep.subr.mxu0 0.0
    %1953 = vmatpush1.msra.mxu0 0.0
    %1954 = vmatprep.subr.mxu0 0.0
    %1955 = vmatpush1.msra.mxu0 0.0
    %1956 = vmatprep.subr.mxu0 0.0
    %1957 = vmatpush1.msra.mxu0 0.0
    %1958 = vmatprep.subr.mxu0 0.0
    %1959 = vmatpush1.msra.mxu0 0.0
    %1960 = vmatprep.subr.mxu0 0.0
    %1961 = vmatpush1.msra.mxu0 0.0
    %1962 = vmatprep.subr.mxu0 0.0
    %1963 = vmatpush1.msra.mxu0 0.0
    %1964 = vmatprep.subr.mxu0 0.0
    %1965 = vmatpush1.msra.mxu0 0.0
    %1966 = vmatprep.subr.mxu0 0.0
    %1967 = vmatpush1.msra.mxu0 0.0
    %1968 = vmatprep.subr.mxu0 0.0
    %1969 = vmatpush1.msra.mxu0 0.0
    %1970 = vmatprep.subr.mxu0 0.0
    %1971 = vmatpush1.msra.mxu0 0.0
    %1972 = vmatprep.subr.mxu0 0.0
    %1973 = vmatpush1.msra.mxu0 0.0
    %1974 = vmatprep.subr.mxu0 0.0
    %1975 = vmatpush1.msra.mxu0 0.0
    %1976 = vmatprep.subr.mxu0 0.0
    %1977 = vmatpush1.msra.mxu0 0.0
    %1978 = vmatprep.mubr.f32.mxu0 0.0
    %1979 = vmatmul.mubr.f32.gmra.mrb[0].mxu0 %v1909
    %v1980 = vpop.f32.mrb[0].mxu0
    %v1981 = vadd.f32 %v1907, %v1980
    %v1982 = vpop.f32.mrb[0].mxu0
    %1983 = vmatprep.mubr.f32.mxu0 0.0
    %1984 = vmatmul.mubr.f32.gmra.mrb[0].mxu0 %v1912
    %v1985 = vpop.f32.mrb[0].mxu0
    %v1986 = vadd.f32 %v1907, %v1985
    %v1987 = vpop.f32.mrb[0].mxu0
    %1988 = vdwg.mxu0
    %v1989 = vadd.f32 %v1780, %v1981
    %v1990 = vadd.f32 %v1781, %v1986
    %v1991 = vld [vmem:[%s5 + $0x26] ss:$0 sm:$0xff]
    %v1992 = vld [vmem:[%s5 + $0x27] ss:$0 sm:$0xff]
    %v1993 = vsel %vm140, %v1989, 0.0
    %1994 = vadd.xlane.f32.xlu0 %v1993
    %v1995 = vpop.xlane.xlu0 %1994
    %v1996 = vsel %vm140, %v1990, 0.0
    %1997 = vadd.xlane.f32.xlu0 %v1996
    %v1998 = vpop.xlane.xlu0 %1997
    %v1999 = vmul.f32 %v1995, %v147
    %v2000 = vmul.f32 %v1998, %v147
    %v2001 = vsub.f32 %v1989, %v1999
    %v2002 = vsub.f32 %v1990, %v2000
    %v2003 = vmul.f32 %v2001, %v2001
    %v2004 = vmul.f32 %v2002, %v2002
    %v2005 = vsel %vm140, %v2003, 0.0
    %2006 = vadd.xlane.f32.xlu0 %v2005
    %v2007 = vpop.xlane.xlu0 %2006
    %v2008 = vsel %vm140, %v2004, 0.0
    %2009 = vadd.xlane.f32.xlu0 %v2008
    %v2010 = vpop.xlane.xlu0 %2009
    %v2011 = vmul.f32 %v2007, %v147
    %v2012 = vmul.f32 %v2010, %v147
    %v2013 = vadd.f32 %v2011, 1e-12
    %v2014 = vadd.f32 %v2012, 1e-12
    %v2015 = vrsqrt.pop %v2013
    %v2016 = vrsqrt.pop %v2014
    %v2017 = vmul.f32 %v2001, %v2015
    %v2018 = vmul.f32 %v2002, %v2016
    %v2019 = vmul.f32 %v2017, %v1991
    %v2020 = vmul.f32 %v2018, %v1991
    %v2021 = vadd.f32 %v2019, %v1992
    %v2022 = vadd.f32 %v2020, %v1992
    %v2024 = vrot.slane %v2022, 7
    %vm2026 = vcmask 1040384
    %v2027 = vsel %vm2026, %v2021, %v2024
    %v2028 = vld [vmem:[%s6] sm:$0xff]
    %v2029 = vld [vmem:[%s6 + $0x18] sm:$0xff]
    %v2030 = vld [vmem:[%s6 + $0x30] sm:$0xff]
    %v2031 = vld [vmem:[%s6 + $0x48] sm:$0xff]
    %v2032 = vld [vmem:[%s5 + $0x2] ss:$0 sm:$0xff]
    %v2034 = vsel %vm140, %v2027, 0
    %2036 = vmatprep.subr.mxu0 0.0
    %2037 = vmatpush1.msra.mxu0 %v2028
    %2038 = vmatprep.subr.mxu0 0.0
    %2039 = vmatpush1.msra.mxu0 %v2029
    %2040 = vmatprep.subr.mxu0 0.0
    %2041 = vmatpush1.msra.mxu0 %v2030
    %2042 = vmatprep.subr.mxu0 0.0
    %2043 = vmatpush1.msra.mxu0 %v2031
    %2044 = vmatprep.subr.mxu0 0.0
    %2045 = vmatpush1.msra.mxu0 0.0
    %2046 = vmatprep.subr.mxu0 0.0
    %2047 = vmatpush1.msra.mxu0 0.0
    %2048 = vmatprep.subr.mxu0 0.0
    %2049 = vmatpush1.msra.mxu0 0.0
    %2050 = vmatprep.subr.mxu0 0.0
    %2051 = vmatpush1.msra.mxu0 0.0
    %2052 = vmatprep.subr.mxu0 0.0
    %2053 = vmatpush1.msra.mxu0 0.0
    %2054 = vmatprep.subr.mxu0 0.0
    %2055 = vmatpush1.msra.mxu0 0.0
    %2056 = vmatprep.subr.mxu0 0.0
    %2057 = vmatpush1.msra.mxu0 0.0
    %2058 = vmatprep.subr.mxu0 0.0
    %2059 = vmatpush1.msra.mxu0 0.0
    %2060 = vmatprep.subr.mxu0 0.0
    %2061 = vmatpush1.msra.mxu0 0.0
    %2062 = vmatprep.subr.mxu0 0.0
    %2063 = vmatpush1.msra.mxu0 0.0
    %2064 = vmatprep.subr.mxu0 0.0
    %2065 = vmatpush1.msra.mxu0 0.0
    %2066 = vmatprep.subr.mxu0 0.0
    %2067 = vmatpush1.msra.mxu0 0.0
    %2068 = vmatprep.subr.mxu0 0.0
    %2069 = vmatpush1.msra.mxu0 0.0
    %2070 = vmatprep.subr.mxu0 0.0
    %2071 = vmatpush1.msra.mxu0 0.0
    %2072 = vmatprep.subr.mxu0 0.0
    %2073 = vmatpush1.msra.mxu0 0.0
    %2074 = vmatprep.subr.mxu0 0.0
    %2075 = vmatpush1.msra.mxu0 0.0
    %2076 = vmatprep.subr.mxu0 0.0
    %2077 = vmatpush1.msra.mxu0 0.0
    %2078 = vmatprep.subr.mxu0 0.0
    %2079 = vmatpush1.msra.mxu0 0.0
    %2080 = vmatprep.subr.mxu0 0.0
    %2081 = vmatpush1.msra.mxu0 0.0
    %2082 = vmatprep.subr.mxu0 0.0
    %2083 = vmatpush1.msra.mxu0 0.0
    %2084 = vmatprep.subr.mxu0 0.0
    %2085 = vmatpush1.msra.mxu0 0.0
    %2086 = vmatprep.subr.mxu0 0.0
    %2087 = vmatpush1.msra.mxu0 0.0
    %2088 = vmatprep.subr.mxu0 0.0
    %2089 = vmatpush1.msra.mxu0 0.0
    %2090 = vmatprep.subr.mxu0 0.0
    %2091 = vmatpush1.msra.mxu0 0.0
    %2092 = vmatprep.subr.mxu0 0.0
    %2093 = vmatpush1.msra.mxu0 0.0
    %2094 = vmatprep.subr.mxu0 0.0
    %2095 = vmatpush1.msra.mxu0 0.0
    %2096 = vmatprep.subr.mxu0 0.0
    %2097 = vmatpush1.msra.mxu0 0.0
    %2098 = vmatprep.subr.mxu0 0.0
    %2099 = vmatpush1.msra.mxu0 0.0
    %2100 = vmatprep.mubr.f32.mxu0 0.0
    %2101 = vmatmul.mubr.f32.gmra.mrb[0].mxu0 %v2034
    %v2102 = vpop.f32.mrb[0].mxu0
    %v2103 = vadd.f32 %v2032, %v2102
    %v2104 = vpop.f32.mrb[0].mxu0
    %2105 = vdwg.mxu0
    %v2106 = vtanh.pop %v2103
    %v2107 = vld [vmem:[%s5 + $0x3] ss:$0 sm:$0xff]
    %v2108 = vld [vmem:[%s5 + $0x4] ss:$0 sm:$0xff]
    %vm2109 = vcmask 254976
    %v2110 = vsel %vm2109, %v2106, 0.0
    %2111 = vadd.xlane.f32.xlu0 %v2110
    %v2112 = vpop.xlane.xlu0 %2111
    %v2113 = vmul.f32 %v2112, %v147
    %v2114 = vsub.f32 %v2106, %v2113
    %v2115 = vmul.f32 %v2114, %v2114
    %v2116 = vsel %vm2109, %v2115, 0.0
    %2117 = vadd.xlane.f32.xlu0 %v2116
    %v2118 = vpop.xlane.xlu0 %2117
    %v2119 = vmul.f32 %v2118, %v147
    %v2120 = vadd.f32 %v2119, 1e-05
    %v2121 = vrsqrt.pop %v2120
    %v2122 = vmul.f32 %v2114, %v2121
    %v2123 = vmul.f32 %v2122, %v2107
    %v2124 = vadd.f32 %v2123, %v2108
    %v2125 = vld [vmem:[%s6 + $0x8] sm:$0xff]
    %v2126 = vld [vmem:[%s6 + $0x10] sm:$0xff]
    %v2127 = vld [vmem:[%s6 + $0x20] sm:$0xff]
    %v2128 = vld [vmem:[%s6 + $0x28] sm:$0xff]
    %v2129 = vld [vmem:[%s6 + $0x38] sm:$0xff]
    %v2130 = vld [vmem:[%s6 + $0x40] sm:$0xff]
    %v2131 = vld [vmem:[%s6 + $0x50] sm:$0xff]
    %v2132 = vld [vmem:[%s6 + $0x58] sm:$0xff]
    %s2133 = scalar_lea.vmem %s5, 5
    %v2134 = vld [vmem:[%s2133] ss:$8 sm:$0x3]
    %v2136 = vlaneseq
    %v2137 = vshrl.u32 %v2136, 7
    %v2138 = vsub.s32 0, %v2137
    %v2139 = vrot.slane %v2134, %v2138
    %v2140 = vlaneseq
    %v2141 = vshrl.u32 %v2140, 7
    %v2142 = vsub.s32 1, %v2141
    %v2143 = vrot.slane %v2134, %v2142
    %v2147 = vsel %vm140, %v2124, 0
    %2149 = vmatprep.subr.mxu0 %v2126
    %2150 = vmatpush1.msra.mxu0 %v2125
    %2151 = vmatprep.subr.mxu0 %v2128
    %2152 = vmatpush1.msra.mxu0 %v2127
    %2153 = vmatprep.subr.mxu0 %v2130
    %2154 = vmatpush1.msra.mxu0 %v2129
    %2155 = vmatprep.subr.mxu0 %v2132
    %2156 = vmatpush1.msra.mxu0 %v2131
    %2157 = vmatprep.subr.mxu0 0.0
    %2158 = vmatpush1.msra.mxu0 0.0
    %2159 = vmatprep.subr.mxu0 0.0
    %2160 = vmatpush1.msra.mxu0 0.0
    %2161 = vmatprep.subr.mxu0 0.0
    %2162 = vmatpush1.msra.mxu0 0.0
    %2163 = vmatprep.subr.mxu0 0.0
    %2164 = vmatpush1.msra.mxu0 0.0
    %2165 = vmatprep.subr.mxu0 0.0
    %2166 = vmatpush1.msra.mxu0 0.0
    %2167 = vmatprep.subr.mxu0 0.0
    %2168 = vmatpush1.msra.mxu0 0.0
    %2169 = vmatprep.subr.mxu0 0.0
    %2170 = vmatpush1.msra.mxu0 0.0
    %2171 = vmatprep.subr.mxu0 0.0
    %2172 = vmatpush1.msra.mxu0 0.0
    %2173 = vmatprep.subr.mxu0 0.0
    %2174 = vmatpush1.msra.mxu0 0.0
    %2175 = vmatprep.subr.mxu0 0.0
    %2176 = vmatpush1.msra.mxu0 0.0
    %2177 = vmatprep.subr.mxu0 0.0
    %2178 = vmatpush1.msra.mxu0 0.0
    %2179 = vmatprep.subr.mxu0 0.0
    %2180 = vmatpush1.msra.mxu0 0.0
    %2181 = vmatprep.subr.mxu0 0.0
    %2182 = vmatpush1.msra.mxu0 0.0
    %2183 = vmatprep.subr.mxu0 0.0
    %2184 = vmatpush1.msra.mxu0 0.0
    %2185 = vmatprep.subr.mxu0 0.0
    %2186 = vmatpush1.msra.mxu0 0.0
    %2187 = vmatprep.subr.mxu0 0.0
    %2188 = vmatpush1.msra.mxu0 0.0
    %2189 = vmatprep.subr.mxu0 0.0
    %2190 = vmatpush1.msra.mxu0 0.0
    %2191 = vmatprep.subr.mxu0 0.0
    %2192 = vmatpush1.msra.mxu0 0.0
    %2193 = vmatprep.subr.mxu0 0.0
    %2194 = vmatpush1.msra.mxu0 0.0
    %2195 = vmatprep.subr.mxu0 0.0
    %2196 = vmatpush1.msra.mxu0 0.0
    %2197 = vmatprep.subr.mxu0 0.0
    %2198 = vmatpush1.msra.mxu0 0.0
    %2199 = vmatprep.subr.mxu0 0.0
    %2200 = vmatpush1.msra.mxu0 0.0
    %2201 = vmatprep.subr.mxu0 0.0
    %2202 = vmatpush1.msra.mxu0 0.0
    %2203 = vmatprep.subr.mxu0 0.0
    %2204 = vmatpush1.msra.mxu0 0.0
    %2205 = vmatprep.subr.mxu0 0.0
    %2206 = vmatpush1.msra.mxu0 0.0
    %2207 = vmatprep.subr.mxu0 0.0
    %2208 = vmatpush1.msra.mxu0 0.0
    %2209 = vmatprep.subr.mxu0 0.0
    %2210 = vmatpush1.msra.mxu0 0.0
    %2211 = vmatprep.subr.mxu0 0.0
    %2212 = vmatpush1.msra.mxu0 0.0
    %2213 = vmatprep.mubr.f32.mxu0 0.0
    %2214 = vmatmul.mubr.f32.gmra.mrb[0].mxu0 %v2147
    %v2215 = vpop.f32.mrb[0].mxu0
    %v2216 = vadd.f32 %v2139, %v2215
    %v2217 = vpop.f32.mrb[0].mxu0
    %v2218 = vadd.f32 %v2143, %v2217
    %2219 = vdwg.mxu0
    %v2220 = vmax.f32 %v2216, 0.0
    %v2221 = vmax.f32 %v2218, 0.0
    %v2222 = vld [vmem:[%s7] sm:$0xff]
    %v2223 = vld [vmem:[%s7 + $0x8] sm:$0xff]
    %v2224 = vld [vmem:[%s7 + $0x10] sm:$0xff]
    %v2225 = vld [vmem:[%s7 + $0x18] sm:$0xff]
    %v2226 = vld [vmem:[%s7 + $0x20] sm:$0xff]
    %v2227 = vld [vmem:[%s7 + $0x28] sm:$0xff]
    %v2228 = vld [vmem:[%s7 + $0x30] sm:$0xff]
    %v2229 = vld [vmem:[%s7 + $0x38] sm:$0xff]
    %v2230 = vld [vmem:[%s7 + $0x40] sm:$0xff]
    %v2231 = vld [vmem:[%s7 + $0x48] sm:$0xff]
    %v2232 = vld [vmem:[%s7 + $0x50] sm:$0xff]
    %v2233 = vld [vmem:[%s7 + $0x58] sm:$0xff]
    %v2234 = vld [vmem:[%s7 + $0x60] sm:$0xff]
    %v2235 = vld [vmem:[%s7 + $0x68] sm:$0xff]
    %v2236 = vld [vmem:[%s7 + $0x70] sm:$0xff]
    %v2237 = vld [vmem:[%s7 + $0x78] sm:$0xff]
    %v2238 = vld [vmem:[%s7 + $0x80] sm:$0xff]
    %v2239 = vld [vmem:[%s7 + $0x88] sm:$0xff]
    %v2240 = vld [vmem:[%s7 + $0x90] sm:$0xff]
    %v2241 = vld [vmem:[%s7 + $0x98] sm:$0xff]
    %v2242 = vld [vmem:[%s7 + $0xa0] sm:$0xff]
    %v2243 = vld [vmem:[%s7 + $0xa8] sm:$0xff]
    %v2244 = vld [vmem:[%s7 + $0xb0] sm:$0xff]
    %v2245 = vld [vmem:[%s7 + $0xb8] sm:$0xff]
    %v2246 = vld [vmem:[%s7 + $0xc0] sm:$0xff]
    %v2247 = vld [vmem:[%s7 + $0xc8] sm:$0xff]
    %v2248 = vld [vmem:[%s7 + $0xd0] sm:$0xff]
    %v2249 = vld [vmem:[%s7 + $0xd8] sm:$0xff]
    %v2250 = vld [vmem:[%s7 + $0xe0] sm:$0xff]
    %v2251 = vld [vmem:[%s7 + $0xe8] sm:$0xff]
    %v2252 = vld [vmem:[%s7 + $0xf0] sm:$0xff]
    %v2253 = vld [vmem:[%s7 + $0xf8] sm:$0xff]
    %v2254 = vld [vmem:[%s5 + $0x6] ss:$0 sm:$0xff]
    %2255 = vmatprep.subr.mxu0 0.0
    %2256 = vmatpush1.msra.mxu0 %v2222
    %2257 = vmatprep.subr.mxu0 0.0
    %2258 = vmatpush1.msra.mxu0 %v2223
    %2259 = vmatprep.subr.mxu0 0.0
    %2260 = vmatpush1.msra.mxu0 %v2224
    %2261 = vmatprep.subr.mxu0 0.0
    %2262 = vmatpush1.msra.mxu0 %v2225
    %2263 = vmatprep.subr.mxu0 0.0
    %2264 = vmatpush1.msra.mxu0 %v2226
    %2265 = vmatprep.subr.mxu0 0.0
    %2266 = vmatpush1.msra.mxu0 %v2227
    %2267 = vmatprep.subr.mxu0 0.0
    %2268 = vmatpush1.msra.mxu0 %v2228
    %2269 = vmatprep.subr.mxu0 0.0
    %2270 = vmatpush1.msra.mxu0 %v2229
    %2271 = vmatprep.subr.mxu0 0.0
    %2272 = vmatpush1.msra.mxu0 %v2230
    %2273 = vmatprep.subr.mxu0 0.0
    %2274 = vmatpush1.msra.mxu0 %v2231
    %2275 = vmatprep.subr.mxu0 0.0
    %2276 = vmatpush1.msra.mxu0 %v2232
    %2277 = vmatprep.subr.mxu0 0.0
    %2278 = vmatpush1.msra.mxu0 %v2233
    %2279 = vmatprep.subr.mxu0 0.0
    %2280 = vmatpush1.msra.mxu0 %v2234
    %2281 = vmatprep.subr.mxu0 0.0
    %2282 = vmatpush1.msra.mxu0 %v2235
    %2283 = vmatprep.subr.mxu0 0.0
    %2284 = vmatpush1.msra.mxu0 %v2236
    %2285 = vmatprep.subr.mxu0 0.0
    %2286 = vmatpush1.msra.mxu0 %v2237
    %2287 = vmatprep.subr.mxu0 0.0
    %2288 = vmatpush1.msra.mxu0 %v2238
    %2289 = vmatprep.subr.mxu0 0.0
    %2290 = vmatpush1.msra.mxu0 %v2239
    %2291 = vmatprep.subr.mxu0 0.0
    %2292 = vmatpush1.msra.mxu0 %v2240
    %2293 = vmatprep.subr.mxu0 0.0
    %2294 = vmatpush1.msra.mxu0 %v2241
    %2295 = vmatprep.subr.mxu0 0.0
    %2296 = vmatpush1.msra.mxu0 %v2242
    %2297 = vmatprep.subr.mxu0 0.0
    %2298 = vmatpush1.msra.mxu0 %v2243
    %2299 = vmatprep.subr.mxu0 0.0
    %2300 = vmatpush1.msra.mxu0 %v2244
    %2301 = vmatprep.subr.mxu0 0.0
    %2302 = vmatpush1.msra.mxu0 %v2245
    %2303 = vmatprep.subr.mxu0 0.0
    %2304 = vmatpush1.msra.mxu0 %v2246
    %2305 = vmatprep.subr.mxu0 0.0
    %2306 = vmatpush1.msra.mxu0 %v2247
    %2307 = vmatprep.subr.mxu0 0.0
    %2308 = vmatpush1.msra.mxu0 %v2248
    %2309 = vmatprep.subr.mxu0 0.0
    %2310 = vmatpush1.msra.mxu0 %v2249
    %2311 = vmatprep.subr.mxu0 0.0
    %2312 = vmatpush1.msra.mxu0 %v2250
    %2313 = vmatprep.subr.mxu0 0.0
    %2314 = vmatpush1.msra.mxu0 %v2251
    %2315 = vmatprep.subr.mxu0 0.0
    %2316 = vmatpush1.msra.mxu0 %v2252
    %2317 = vmatprep.subr.mxu0 0.0
    %2318 = vmatpush1.msra.mxu0 %v2253
    %2319 = vmatprep.mubr.f32.mxu0 %v2221
    %2320 = vmatmul.mubr.f32.gmra.mrb[0].mxu0 %v2220
    %v2321 = vpop.f32.mrb[0].mxu0
    %v2322 = vadd.f32 %v2254, %v2321
    %v2323 = vpop.f32.mrb[0].mxu0
    %2324 = vdwg.mxu0
    %v2325 = vmax.f32 %v2322, 0.0
    %v2326 = vld [vmem:[%s7 + $0x100] sm:$0xff]
    %v2327 = vld [vmem:[%s7 + $0x108] sm:$0xff]
    %v2328 = vld [vmem:[%s7 + $0x110] sm:$0xff]
    %v2329 = vld [vmem:[%s7 + $0x118] sm:$0xff]
    %v2330 = vld [vmem:[%s7 + $0x120] sm:$0xff]
    %v2331 = vld [vmem:[%s7 + $0x128] sm:$0xff]
    %v2332 = vld [vmem:[%s7 + $0x130] sm:$0xff]
    %v2333 = vld [vmem:[%s7 + $0x138] sm:$0xff]
    %v2334 = vld [vmem:[%s7 + $0x140] sm:$0xff]
    %v2335 = vld [vmem:[%s7 + $0x148] sm:$0xff]
    %v2336 = vld [vmem:[%s7 + $0x150] sm:$0xff]
    %v2337 = vld [vmem:[%s7 + $0x158] sm:$0xff]
    %v2338 = vld [vmem:[%s7 + $0x160] sm:$0xff]
    %v2339 = vld [vmem:[%s7 + $0x168] sm:$0xff]
    %v2340 = vld [vmem:[%s7 + $0x170] sm:$0xff]
    %v2341 = vld [vmem:[%s7 + $0x178] sm:$0xff]
    %v2342 = vld [vmem:[%s5 + $0x7] ss:$0 sm:$0xff]
    %2343 = vmatprep.subr.mxu0 0.0
    %2344 = vmatpush1.msra.mxu0 %v2326
    %2345 = vmatprep.subr.mxu0 0.0
    %2346 = vmatpush1.msra.mxu0 %v2327
    %2347 = vmatprep.subr.mxu0 0.0
    %2348 = vmatpush1.msra.mxu0 %v2328
    %2349 = vmatprep.subr.mxu0 0.0
    %2350 = vmatpush1.msra.mxu0 %v2329
    %2351 = vmatprep.subr.mxu0 0.0
    %2352 = vmatpush1.msra.mxu0 %v2330
    %2353 = vmatprep.subr.mxu0 0.0
    %2354 = vmatpush1.msra.mxu0 %v2331
    %2355 = vmatprep.subr.mxu0 0.0
    %2356 = vmatpush1.msra.mxu0 %v2332
    %2357 = vmatprep.subr.mxu0 0.0
    %2358 = vmatpush1.msra.mxu0 %v2333
    %2359 = vmatprep.subr.mxu0 0.0
    %2360 = vmatpush1.msra.mxu0 %v2334
    %2361 = vmatprep.subr.mxu0 0.0
    %2362 = vmatpush1.msra.mxu0 %v2335
    %2363 = vmatprep.subr.mxu0 0.0
    %2364 = vmatpush1.msra.mxu0 %v2336
    %2365 = vmatprep.subr.mxu0 0.0
    %2366 = vmatpush1.msra.mxu0 %v2337
    %2367 = vmatprep.subr.mxu0 0.0
    %2368 = vmatpush1.msra.mxu0 %v2338
    %2369 = vmatprep.subr.mxu0 0.0
    %2370 = vmatpush1.msra.mxu0 %v2339
    %2371 = vmatprep.subr.mxu0 0.0
    %2372 = vmatpush1.msra.mxu0 %v2340
    %2373 = vmatprep.subr.mxu0 0.0
    %2374 = vmatpush1.msra.mxu0 %v2341
    %2375 = vmatprep.subr.mxu0 0.0
    %2376 = vmatpush1.msra.mxu0 0.0
    %2377 = vmatprep.subr.mxu0 0.0
    %2378 = vmatpush1.msra.mxu0 0.0
    %2379 = vmatprep.subr.mxu0 0.0
    %2380 = vmatpush1.msra.mxu0 0.0
    %2381 = vmatprep.subr.mxu0 0.0
    %2382 = vmatpush1.msra.mxu0 0.0
    %2383 = vmatprep.subr.mxu0 0.0
    %2384 = vmatpush1.msra.mxu0 0.0
    %2385 = vmatprep.subr.mxu0 0.0
    %2386 = vmatpush1.msra.mxu0 0.0
    %2387 = vmatprep.subr.mxu0 0.0
    %2388 = vmatpush1.msra.mxu0 0.0
    %2389 = vmatprep.subr.mxu0 0.0
    %2390 = vmatpush1.msra.mxu0 0.0
    %2391 = vmatprep.subr.mxu0 0.0
    %2392 = vmatpush1.msra.mxu0 0.0
    %2393 = vmatprep.subr.mxu0 0.0
    %2394 = vmatpush1.msra.mxu0 0.0
    %2395 = vmatprep.subr.mxu0 0.0
    %2396 = vmatpush1.msra.mxu0 0.0
    %2397 = vmatprep.subr.mxu0 0.0
    %2398 = vmatpush1.msra.mxu0 0.0
    %2399 = vmatprep.subr.mxu0 0.0
    %2400 = vmatpush1.msra.mxu0 0.0
    %2401 = vmatprep.subr.mxu0 0.0
    %2402 = vmatpush1.msra.mxu0 0.0
    %2403 = vmatprep.subr.mxu0 0.0
    %2404 = vmatpush1.msra.mxu0 0.0
    %2405 = vmatprep.subr.mxu0 0.0
    %2406 = vmatpush1.msra.mxu0 0.0
    %2407 = vmatprep.mubr.f32.mxu0 0.0
    %2408 = vmatmul.mubr.f32.gmra.mrb[0].mxu0 %v2325
    %v2409 = vpop.f32.mrb[0].mxu0
    %v2410 = vadd.f32 %v2342, %v2409
    %v2411 = vpop.f32.mrb[0].mxu0
    %2412 = vdwg.mxu0
    %2413 = vst [vmem:[#allocation4] sm:$0x3] %v2410
    // Predicated region
    $region34: #{text_only_classifier.1} parent=1 // pred_check
      _
    $region35: #{text_only_classifier.1} parent=1 // pred_check_branch
      %2415 = sbr.rel (0) target = $region37
    $region36: #{text_only_classifier.1} parent=1 // pred_region
      %s2417 = ssub.s32 32, 32
      %2418 = vsyncadd [#allocation5], %s2417
      %s2420 = sshll.u32 [#allocation4], 4
      %s2421 = int_to_ptr.vmem [resolvable:$true] %s2420
      %2423 = dma.vmem_to_hbm [thread:$0]  %s2421, 32, %s8, [#allocation5]
    $region37: #{text_only_classifier.1} parent=1 // pred_fallthru
      _
    // Predicated region
    $region38: #{text_only_classifier.1} parent=1 // pred_check
      _
    $region39: #{text_only_classifier.1} parent=1 // pred_check_branch
      %2425 = sbr.rel (0) target = $region41
    $region40: #{text_only_classifier.1} parent=1 // pred_region
      %2426 = dma.done [#allocation5], 32
    $region41: #{text_only_classifier.1} parent=1 // pred_fallthru
      _
    %2427 = vsyncpa [#allocation5], 1

</llo_original>
